<compile_context>
chip_gen: v7x
topology: tpu7x:2x2x1
jax: 0.10.0
libtpu: 0.0.40
codegen_flags: <defaults>
</compile_context>

<pallas_src>
import functools
import math

import jax
import jax.numpy as jnp
import numpy as np
from jax.experimental import pallas as pl
from jax.experimental.pallas import tpu as pltpu


LANE = 128      # channel/K tile (TPU lanes)
SUBLANE = 16    # spatial-row tile (bf16 packs 16 rows per sublane group)


def _round_up(x, m):
    return (x + m - 1) // m * m


@functools.lru_cache(maxsize=None)
def _vmem_limit_bytes():
    cap = 64 * 1024 * 1024           # conservative fallback = v7x physical VMEM
    try:
        cap = int(getattr(pltpu.get_tpu_info(), "vmem_capacity_bytes", cap))
    except Exception:
        pass
    return max(32 * 1024 * 1024, min(cap * 3 // 4, 100 * 1024 * 1024))


# -----------------------------------------------------------------------------
# Glue: cheap XLA-side gathers.  Only the 3 W-axis taps are pre-gathered and
# folded into the channel (K) axis at the RAW channel count; padding to the
# 128-lane tile happens after the fold (pad-after-fold).
# -----------------------------------------------------------------------------
def _gather_w_taps_concat(xp, stride, wo):
    """xp: (N, Dp, Hp, Wp, C) -> (N, Dp, Hp, wo, 3*C); K index = kw*C + c."""
    N, Dp, Hp, Wp, C = xp.shape
    taps = []
    for kw in range(3):
        t = jax.lax.slice(
            xp,
            (0, 0, 0, kw, 0),
            (N, Dp, Hp, kw + stride * (wo - 1) + 1, C),
            (1, 1, 1, stride, 1))
        taps.append(t)
    return jnp.concatenate(taps, axis=-1)


def _build_gathered_s2(x, wo_pad, k_pad):
    """x: (N,D,H,W,C) -> (N, 2, D+2, (Ho+1)*wo_pad, k_pad) for stride-2, k=3, p=1.

    Layout: [n, h_parity, padded_depth, hh*wo_pad + wo, kw*C + c] so tap
    (kd,kh,kw) of output (do,ho,wo) sits at depth 2*do+kd (BlockSpec index_map),
    parity kh%2 and a 16-aligned row window offset (kh//2)*wo_pad (in-kernel),
    with kw folded into the matmul K dimension.
    """
    N, D, H, W, C = x.shape
    Ho, Wo = H // 2, W // 2
    xp = jnp.pad(x, ((0, 0), (1, 1), (1, 1), (1, 1), (0, 0)))
    g = _gather_w_taps_concat(xp, 2, Wo)                 # (N, D+2, H+2, Wo, 3C)
    g = g.reshape(N, D + 2, Ho + 1, 2, Wo, 3 * C)        # H+2 -> (hh, parity)
    g = jnp.transpose(g, (0, 3, 1, 2, 4, 5))             # (N, 2, D+2, Ho+1, Wo, 3C)
    g = jnp.pad(g, ((0, 0),) * 4 + ((0, wo_pad - Wo), (0, k_pad - 3 * C)))
    return g.reshape(N, 2, D + 2, (Ho + 1) * wo_pad, k_pad)


def _build_gathered_s1(h_sp, wo_pad, k_pad):
    """h_sp: (N,Do,Ho,Wo,C) -> (N, Do+2, (Ho+2)*wo_pad, k_pad) for stride-1, k=3, p=1."""
    N, Do, Ho, Wo, C = h_sp.shape
    hp = jnp.pad(h_sp, ((0, 0), (1, 1), (1, 1), (1, 1), (0, 0)))
    g = _gather_w_taps_concat(hp, 1, Wo)                 # (N, Do+2, Ho+2, Wo, 3C)
    g = jnp.pad(g, ((0, 0),) * 3 + ((0, wo_pad - Wo), (0, k_pad - 3 * C)))
    return g.reshape(N, Do + 2, (Ho + 2) * wo_pad, k_pad)


def _prep_weight_kwfold(w, k_pad, cout_pad):
    """(Cout, Cin, kd, kh, kw) -> (3, 3, k_pad, cout_pad) bf16, K index = kw*Cin + cin."""
    cout, cin = w.shape[0], w.shape[1]
    wm = jnp.transpose(w, (2, 3, 4, 1, 0))               # (kd, kh, kw, cin, cout)
    wm = wm.reshape(3, 3, 3 * cin, cout)                 # fold kw into K (kw slow)
    wm = jnp.pad(wm, ((0, 0), (0, 0), (0, k_pad - 3 * cin), (0, cout_pad - cout)))
    return wm.astype(jnp.bfloat16)


def _prep_bias(b, cout_pad):
    return jnp.pad(b, (0, cout_pad - b.shape[0])).reshape(1, cout_pad).astype(jnp.float32)


# -----------------------------------------------------------------------------
# Kernel 1: fused skip-conv + conv1 (both stride 2, same input window).
# 9 dots of (m, k_pad) x (k_pad, 2*cout_pad); single f32 accumulator.
# -----------------------------------------------------------------------------
def _fused_stride2_kernel(g0_ref, g1_ref, g2_ref, w_ref, b_ref, h_ref, s_ref,
                          *, m, wo_pad, cout_pad):
    acc = jnp.zeros((m, 2 * cout_pad), jnp.float32)
    for kd, g_ref in enumerate((g0_ref, g1_ref, g2_ref)):
        for kh in range(3):
            par, base = kh % 2, (kh // 2) * wo_pad       # base is 16-aligned
            a = g_ref[0, par, 0, base:base + m, :]       # (m, k_pad) bf16
            acc += jnp.dot(a, w_ref[kd, kh], preferred_element_type=jnp.float32)
    acc += b_ref[...]
    h_ref[0, 0] = jnp.maximum(acc[:, :cout_pad], 0.0).astype(h_ref.dtype)
    s_ref[0, 0] = acc[:, cout_pad:].astype(s_ref.dtype)


def _fused_stride2_conv(x_ndhwc, w1, b1, ws, bs):
    """Returns (h, skip), each (N, Do, Ho*wo_pad, cout_pad) in bf16."""
    N, D, H, W, Cin = x_ndhwc.shape
    Do, Ho, Wo = D // 2, H // 2, W // 2
    Cout = w1.shape[0]
    cout_pad = _round_up(Cout, LANE)
    wo_pad = _round_up(Wo, SUBLANE)
    k_pad = _round_up(3 * Cin, LANE)                     # pad AFTER kw fold
    m = Ho * wo_pad
    m2 = (Ho + 1) * wo_pad

    g = _build_gathered_s2(x_ndhwc.astype(jnp.bfloat16), wo_pad, k_pad)

    # conv1 / skip weights concatenated along the output-channel (N) axis.
    wcat = jnp.concatenate([_prep_weight_kwfold(w1, k_pad, cout_pad),
                            _prep_weight_kwfold(ws, k_pad, cout_pad)], axis=-1)
    bcat = jnp.concatenate([_prep_bias(b1, cout_pad),
                            _prep_bias(bs, cout_pad)], axis=-1)

    def g_spec(kd):
        return pl.BlockSpec((1, 2, 1, m2, k_pad),
                            lambda n, d, kd=kd: (n, 0, 2 * d + kd, 0, 0))

    w_spec = pl.BlockSpec((3, 3, k_pad, 2 * cout_pad), lambda n, d: (0, 0, 0, 0))
    b_spec = pl.BlockSpec((1, 2 * cout_pad), lambda n, d: (0, 0))
    o_spec = pl.BlockSpec((1, 1, m, cout_pad), lambda n, d: (n, d, 0, 0))
    out_sds = jax.ShapeDtypeStruct((N, Do, m, cout_pad), jnp.bfloat16)

    flops = 2 * N * Do * 9 * m * k_pad * (2 * cout_pad)
    bytes_accessed = (3 * N * Do * 2 * m2 * k_pad * 2
                      + 9 * k_pad * 2 * cout_pad * 2
                      + 2 * cout_pad * 4
                      + 2 * N * Do * m * cout_pad * 2)

    h, skip = pl.pallas_call(
        functools.partial(_fused_stride2_kernel, m=m, wo_pad=wo_pad, cout_pad=cout_pad),
        grid=(N, Do),
        in_specs=[g_spec(0), g_spec(1), g_spec(2), w_spec, b_spec],
        out_specs=(o_spec, o_spec),
        out_shape=(out_sds, out_sds),
        compiler_params=pltpu.CompilerParams(
            dimension_semantics=("parallel", "parallel"),
            vmem_limit_bytes=_vmem_limit_bytes()),
        cost_estimate=pl.CostEstimate(flops=flops, transcendentals=0,
                                      bytes_accessed=bytes_accessed),
    )(g, g, g, wcat, bcat)
    return h, skip


# -----------------------------------------------------------------------------
# Kernel 2: conv2 (stride 1) + bias + residual add + ReLU; output aliases skip.
# 9 dots of (m, k_pad) x (k_pad, cout_pad); single f32 accumulator.
# -----------------------------------------------------------------------------
def _conv2_residual_kernel(g0_ref, g1_ref, g2_ref, w_ref, b_ref, skip_ref, o_ref,
                           *, m, wo_pad):
    cout = o_ref.shape[-1]
    acc = jnp.zeros((m, cout), jnp.float32)
    for kd, g_ref in enumerate((g0_ref, g1_ref, g2_ref)):
        for kh in range(3):
            base = kh * wo_pad                           # 16-aligned
            a = g_ref[0, 0, base:base + m, :]            # (m, k_pad) bf16
            acc += jnp.dot(a, w_ref[kd, kh], preferred_element_type=jnp.float32)
    acc = acc + b_ref[...] + skip_ref[0, 0].astype(jnp.float32)
    o_ref[0, 0] = jnp.maximum(acc, 0.0).astype(o_ref.dtype)


def _conv2_residual(h, skip, w2, b2, *, n, do, ho, wo, cout):
    """h, skip: (N, Do, ho*wo_pad, cout_pad) bf16 -> same-shaped bf16 output."""
    cout_pad = h.shape[-1]
    wo_pad = _round_up(wo, SUBLANE)
    m = ho * wo_pad
    m1 = (ho + 2) * wo_pad
    k_pad = _round_up(3 * cout, LANE)                    # gather at real Cout, pad after fold

    # back to spatial form; drop padded-W garbage rows and channel padding.
    h_sp = h.reshape(n, do, ho, wo_pad, cout_pad)[:, :, :, :wo, :cout]
    g = _build_gathered_s1(h_sp, wo_pad, k_pad)          # (N, Do+2, m1, k_pad)

    w2m = _prep_weight_kwfold(w2, k_pad, cout_pad)
    b2r = _prep_bias(b2, cout_pad)

    def g_spec(kd):
        return pl.BlockSpec((1, 1, m1, k_pad),
                            lambda b, d, kd=kd: (b, d + kd, 0, 0))

    w_spec = pl.BlockSpec((3, 3, k_pad, cout_pad), lambda b, d: (0, 0, 0, 0))
    b_spec = pl.BlockSpec((1, cout_pad), lambda b, d: (0, 0))
    s_spec = pl.BlockSpec((1, 1, m, cout_pad), lambda b, d: (b, d, 0, 0))
    o_spec = pl.BlockSpec((1, 1, m, cout_pad), lambda b, d: (b, d, 0, 0))

    flops = 2 * n * do * 9 * m * k_pad * cout_pad
    bytes_accessed = (3 * n * do * m1 * k_pad * 2
                      + 9 * k_pad * cout_pad * 2
                      + cout_pad * 4
                      + 2 * n * do * m * cout_pad * 2)

    out = pl.pallas_call(
        functools.partial(_conv2_residual_kernel, m=m, wo_pad=wo_pad),
        grid=(n, do),
        in_specs=[g_spec(0), g_spec(1), g_spec(2), w_spec, b_spec, s_spec],
        out_specs=o_spec,
        out_shape=jax.ShapeDtypeStruct((n, do, m, cout_pad), jnp.bfloat16),
        input_output_aliases={5: 0},          # result overwrites the skip buffer
        compiler_params=pltpu.CompilerParams(
            dimension_semantics=("parallel", "parallel"),
            vmem_limit_bytes=_vmem_limit_bytes()),
        cost_estimate=pl.CostEstimate(flops=flops, transcendentals=0,
                                      bytes_accessed=bytes_accessed),
    )(g, g, g, w2m, b2r, skip)
    return out


# -----------------------------------------------------------------------------
# BasicBlock forward (NCDHW in / NCDHW out, like PyTorch).
# -----------------------------------------------------------------------------
def basic_block_forward(x_ncdhw, params, *, inplane, outplane, downsample=True):
    if not downsample:
        # TODO(synk): downsample=False (stride-1 conv1, identity / 1x1 skip) not wired up.
        raise NotImplementedError("only downsample=True is implemented in Pallas")

    x = jnp.transpose(x_ncdhw, (0, 2, 3, 4, 1))          # NCDHW -> NDHWC
    N, D, H, W, Cin = x.shape
    assert D % 2 == 0 and H % 2 == 0 and W % 2 == 0, "even spatial dims expected"
    Do, Ho, Wo = D // 2, H // 2, W // 2
    Cout = params["w1"].shape[0]
    cout_pad = _round_up(Cout, LANE)
    wo_pad = _round_up(Wo, SUBLANE)

    h, skip = _fused_stride2_conv(x, params["w1"], params["b1"],
                                  params["skip_w"], params["skip_b"])
    out = _conv2_residual(h, skip, params["w2"], params["b2"],
                          n=N, do=Do, ho=Ho, wo=Wo, cout=Cout)

    out = out.reshape(N, Do, Ho, wo_pad, cout_pad)[:, :, :, :Wo, :Cout]
    out = jnp.transpose(out, (0, 4, 1, 2, 3)).astype(x_ncdhw.dtype)  # -> NCDHW
    return out


# -----------------------------------------------------------------------------
# Deterministic parameter init (PyTorch Conv3d default: U(-1/sqrt(fan_in), +))
# -----------------------------------------------------------------------------
def init_params(key, inplane, outplane, downsample=True):
    keys = jax.random.split(key, 6)

    def conv_init(kw_, kb_, cout, cin, k):
        fan_in = cin * k ** 3
        bound = 1.0 / math.sqrt(fan_in)
        w = jax.random.uniform(kw_, (cout, cin, k, k, k), jnp.float32, -bound, bound)
        b = jax.random.uniform(kb_, (cout,), jnp.float32, -bound, bound)
        return w, b

    params = {}
    if downsample:
        params["skip_w"], params["skip_b"] = conv_init(keys[0], keys[1], outplane, inplane, 3)
    elif inplane != outplane:
        params["skip_w"], params["skip_b"] = conv_init(keys[0], keys[1], outplane, inplane, 1)
    params["w1"], params["b1"] = conv_init(keys[2], keys[3], outplane, inplane, 3)
    params["w2"], params["b2"] = conv_init(keys[4], keys[5], outplane, outplane, 3)
    return params


# -----------------------------------------------------------------------------
# Pure-JAX f32 reference for correctness checking.
# -----------------------------------------------------------------------------
def _conv3d_ref(x_ndhwc, w, b, stride, padding):
    w_dhwio = jnp.transpose(w, (2, 3, 4, 1, 0))
    y = jax.lax.conv_general_dilated(
        x_ndhwc, w_dhwio,
        window_strides=(stride,) * 3,
        padding=[(padding, padding)] * 3,
        dimension_numbers=("NDHWC", "DHWIO", "NDHWC"))
    return y + b


def basic_block_ref(x_ncdhw, params, *, inplane, outplane, downsample=True):
    x = jnp.transpose(x_ncdhw, (0, 2, 3, 4, 1))
    stride = 2 if downsample else 1
    if downsample:
        skip = _conv3d_ref(x, params["skip_w"], params["skip_b"], 2, 1)
    elif inplane == outplane:
        skip = x
    else:
        skip = _conv3d_ref(x, params["skip_w"], params["skip_b"], 1, 0)
    h = jax.nn.relu(_conv3d_ref(x, params["w1"], params["b1"], stride, 1))
    out = jax.nn.relu(_conv3d_ref(h, params["w2"], params["b2"], 1, 1) + skip)
    return jnp.transpose(out, (0, 4, 1, 2, 3))


# -----------------------------------------------------------------------------
if __name__ == "__main__":
    N, INPLANE, OUTPLANE = 2, 4, 8
    D = H = W = 8
    DOWNSAMPLE = True

    key = jax.random.PRNGKey(0)
    k_x, k_p = jax.random.split(key)
    x = jax.random.normal(k_x, (N, INPLANE, D, H, W), dtype=jnp.float32)  # NCDHW
    params = init_params(k_p, INPLANE, OUTPLANE, DOWNSAMPLE)

    fwd = jax.jit(functools.partial(basic_block_forward,
                                    inplane=INPLANE, outplane=OUTPLANE,
                                    downsample=DOWNSAMPLE))
    out = jax.block_until_ready(fwd(x, params))

    ref = jax.block_until_ready(
        basic_block_ref(x, params, inplane=INPLANE, outplane=OUTPLANE,
                        downsample=DOWNSAMPLE))

    assert out.shape == (N, OUTPLANE, D // 2, H // 2, W // 2), out.shape
    # bf16 MXU inputs with f32 accumulation -> ~1e-3..1e-2 abs error vs f32 ref.
    np.testing.assert_allclose(np.asarray(out), np.asarray(ref),
                               rtol=2e-2, atol=2e-2)
    print("KERNEL_OK")
</pallas_src>

<mosaic_0001>
module attributes {stable_mosaic.version = 11 : i64} {
  func.func @_fused_stride2_kernel(%arg0: i32, %arg1: i32, %arg2: memref<1x2x1x80x128xbf16, #tpu.memory_space<vmem>>, %arg3: memref<1x2x1x80x128xbf16, #tpu.memory_space<vmem>>, %arg4: memref<1x2x1x80x128xbf16, #tpu.memory_space<vmem>>, %arg5: memref<3x3x128x256xbf16, #tpu.memory_space<vmem>>, %arg6: memref<1x256xf32, #tpu.memory_space<vmem>>, %arg7: memref<1x1x64x128xbf16, #tpu.memory_space<vmem>>, %arg8: memref<1x1x64x128xbf16, #tpu.memory_space<vmem>>) attributes {dimension_semantics = [#tpu.dimension_semantics<parallel>, #tpu.dimension_semantics<parallel>], iteration_bounds = array<i64: 2, 4>, scalar_prefetch = 0 : i64, scratch_operands = 0 : i64, tpu.core_type = #tpu.core_type<tc>, window_params = [{transform_indices = @transform_0, window_bounds = array<i64: 1, 2, 1, 80, 128>}, {transform_indices = @transform_1, window_bounds = array<i64: 1, 2, 1, 80, 128>}, {transform_indices = @transform_2, window_bounds = array<i64: 1, 2, 1, 80, 128>}, {pipeline_mode = #tpu.pipeline_mode<synchronous>, transform_indices = @transform_3, window_bounds = array<i64: 3, 3, 128, 256>}, {pipeline_mode = #tpu.pipeline_mode<synchronous>, transform_indices = @transform_4, window_bounds = array<i64: 1, 256>}, {transform_indices = @transform_5, window_bounds = array<i64: 1, 1, 64, 128>}, {transform_indices = @transform_6, window_bounds = array<i64: 1, 1, 64, 128>}]} {
    %cst = arith.constant 0.000000e+00 : f32
    %0 = vector.broadcast %cst : f32 to vector<64x256xf32>
    %c0 = arith.constant 0 : index
    %c0_0 = arith.constant 0 : index
    %c0_1 = arith.constant 0 : index
    %c0_2 = arith.constant 0 : index
    %c0_3 = arith.constant 0 : index
    %1 = vector.load %arg2[%c0, %c0_0, %c0_1, %c0_2, %c0_3] : memref<1x2x1x80x128xbf16, #tpu.memory_space<vmem>>, vector<1x1x1x64x128xbf16>
    %2 = vector.shape_cast %1 : vector<1x1x1x64x128xbf16> to vector<64x128xbf16>
    %c0_4 = arith.constant 0 : index
    %c0_5 = arith.constant 0 : index
    %c0_6 = arith.constant 0 : index
    %c0_7 = arith.constant 0 : index
    %3 = vector.load %arg5[%c0_4, %c0_5, %c0_6, %c0_7] : memref<3x3x128x256xbf16, #tpu.memory_space<vmem>>, vector<1x1x128x256xbf16>
    %4 = vector.shape_cast %3 : vector<1x1x128x256xbf16> to vector<128x256xbf16>
    %cst_8 = arith.constant dense<0.000000e+00> : vector<64x256xf32>
    %5 = tpu.matmul %2, %4, %cst_8 {dimension_numbers = #tpu.dot_dimension_numbers<[1], [0], [0], [1], [0, 0, 1, 1], [], []>} : vector<64x128xbf16>, vector<128x256xbf16>, vector<64x256xf32> -> vector<64x256xf32>
    %6 = arith.addf %0, %5 : vector<64x256xf32>
    %c0_9 = arith.constant 0 : index
    %c1 = arith.constant 1 : index
    %c0_10 = arith.constant 0 : index
    %c0_11 = arith.constant 0 : index
    %c0_12 = arith.constant 0 : index
    %7 = vector.load %arg2[%c0_9, %c1, %c0_10, %c0_11, %c0_12] : memref<1x2x1x80x128xbf16, #tpu.memory_space<vmem>>, vector<1x1x1x64x128xbf16>
    %8 = vector.shape_cast %7 : vector<1x1x1x64x128xbf16> to vector<64x128xbf16>
    %c0_13 = arith.constant 0 : index
    %c1_14 = arith.constant 1 : index
    %c0_15 = arith.constant 0 : index
    %c0_16 = arith.constant 0 : index
    %9 = vector.load %arg5[%c0_13, %c1_14, %c0_15, %c0_16] : memref<3x3x128x256xbf16, #tpu.memory_space<vmem>>, vector<1x1x128x256xbf16>
    %10 = vector.shape_cast %9 : vector<1x1x128x256xbf16> to vector<128x256xbf16>
    %cst_17 = arith.constant dense<0.000000e+00> : vector<64x256xf32>
    %11 = tpu.matmul %8, %10, %cst_17 {dimension_numbers = #tpu.dot_dimension_numbers<[1], [0], [0], [1], [0, 0, 1, 1], [], []>} : vector<64x128xbf16>, vector<128x256xbf16>, vector<64x256xf32> -> vector<64x256xf32>
    %12 = arith.addf %6, %11 : vector<64x256xf32>
    %c0_18 = arith.constant 0 : index
    %c0_19 = arith.constant 0 : index
    %c0_20 = arith.constant 0 : index
    %c16 = arith.constant 16 : index
    %c0_21 = arith.constant 0 : index
    %13 = vector.load %arg2[%c0_18, %c0_19, %c0_20, %c16, %c0_21] : memref<1x2x1x80x128xbf16, #tpu.memory_space<vmem>>, vector<1x1x1x64x128xbf16>
    %14 = vector.shape_cast %13 : vector<1x1x1x64x128xbf16> to vector<64x128xbf16>
    %c0_22 = arith.constant 0 : index
    %c2 = arith.constant 2 : index
    %c0_23 = arith.constant 0 : index
    %c0_24 = arith.constant 0 : index
    %15 = vector.load %arg5[%c0_22, %c2, %c0_23, %c0_24] : memref<3x3x128x256xbf16, #tpu.memory_space<vmem>>, vector<1x1x128x256xbf16>
    %16 = vector.shape_cast %15 : vector<1x1x128x256xbf16> to vector<128x256xbf16>
    %cst_25 = arith.constant dense<0.000000e+00> : vector<64x256xf32>
    %17 = tpu.matmul %14, %16, %cst_25 {dimension_numbers = #tpu.dot_dimension_numbers<[1], [0], [0], [1], [0, 0, 1, 1], [], []>} : vector<64x128xbf16>, vector<128x256xbf16>, vector<64x256xf32> -> vector<64x256xf32>
    %18 = arith.addf %12, %17 : vector<64x256xf32>
    %c0_26 = arith.constant 0 : index
    %c0_27 = arith.constant 0 : index
    %c0_28 = arith.constant 0 : index
    %c0_29 = arith.constant 0 : index
    %c0_30 = arith.constant 0 : index
    %19 = vector.load %arg3[%c0_26, %c0_27, %c0_28, %c0_29, %c0_30] : memref<1x2x1x80x128xbf16, #tpu.memory_space<vmem>>, vector<1x1x1x64x128xbf16>
    %20 = vector.shape_cast %19 : vector<1x1x1x64x128xbf16> to vector<64x128xbf16>
    %c1_31 = arith.constant 1 : index
    %c0_32 = arith.constant 0 : index
    %c0_33 = arith.constant 0 : index
    %c0_34 = arith.constant 0 : index
    %21 = vector.load %arg5[%c1_31, %c0_32, %c0_33, %c0_34] : memref<3x3x128x256xbf16, #tpu.memory_space<vmem>>, vector<1x1x128x256xbf16>
    %22 = vector.shape_cast %21 : vector<1x1x128x256xbf16> to vector<128x256xbf16>
    %cst_35 = arith.constant dense<0.000000e+00> : vector<64x256xf32>
    %23 = tpu.matmul %20, %22, %cst_35 {dimension_numbers = #tpu.dot_dimension_numbers<[1], [0], [0], [1], [0, 0, 1, 1], [], []>} : vector<64x128xbf16>, vector<128x256xbf16>, vector<64x256xf32> -> vector<64x256xf32>
    %24 = arith.addf %18, %23 : vector<64x256xf32>
    %c0_36 = arith.constant 0 : index
    %c1_37 = arith.constant 1 : index
    %c0_38 = arith.constant 0 : index
    %c0_39 = arith.constant 0 : index
    %c0_40 = arith.constant 0 : index
    %25 = vector.load %arg3[%c0_36, %c1_37, %c0_38, %c0_39, %c0_40] : memref<1x2x1x80x128xbf16, #tpu.memory_space<vmem>>, vector<1x1x1x64x128xbf16>
    %26 = vector.shape_cast %25 : vector<1x1x1x64x128xbf16> to vector<64x128xbf16>
    %c1_41 = arith.constant 1 : index
    %c1_42 = arith.constant 1 : index
    %c0_43 = arith.constant 0 : index
    %c0_44 = arith.constant 0 : index
    %27 = vector.load %arg5[%c1_41, %c1_42, %c0_43, %c0_44] : memref<3x3x128x256xbf16, #tpu.memory_space<vmem>>, vector<1x1x128x256xbf16>
    %28 = vector.shape_cast %27 : vector<1x1x128x256xbf16> to vector<128x256xbf16>
    %cst_45 = arith.constant dense<0.000000e+00> : vector<64x256xf32>
    %29 = tpu.matmul %26, %28, %cst_45 {dimension_numbers = #tpu.dot_dimension_numbers<[1], [0], [0], [1], [0, 0, 1, 1], [], []>} : vector<64x128xbf16>, vector<128x256xbf16>, vector<64x256xf32> -> vector<64x256xf32>
    %30 = arith.addf %24, %29 : vector<64x256xf32>
    %c0_46 = arith.constant 0 : index
    %c0_47 = arith.constant 0 : index
    %c0_48 = arith.constant 0 : index
    %c16_49 = arith.constant 16 : index
    %c0_50 = arith.constant 0 : index
    %31 = vector.load %arg3[%c0_46, %c0_47, %c0_48, %c16_49, %c0_50] : memref<1x2x1x80x128xbf16, #tpu.memory_space<vmem>>, vector<1x1x1x64x128xbf16>
    %32 = vector.shape_cast %31 : vector<1x1x1x64x128xbf16> to vector<64x128xbf16>
    %c1_51 = arith.constant 1 : index
    %c2_52 = arith.constant 2 : index
    %c0_53 = arith.constant 0 : index
    %c0_54 = arith.constant 0 : index
    %33 = vector.load %arg5[%c1_51, %c2_52, %c0_53, %c0_54] : memref<3x3x128x256xbf16, #tpu.memory_space<vmem>>, vector<1x1x128x256xbf16>
    %34 = vector.shape_cast %33 : vector<1x1x128x256xbf16> to vector<128x256xbf16>
    %cst_55 = arith.constant dense<0.000000e+00> : vector<64x256xf32>
    %35 = tpu.matmul %32, %34, %cst_55 {dimension_numbers = #tpu.dot_dimension_numbers<[1], [0], [0], [1], [0, 0, 1, 1], [], []>} : vector<64x128xbf16>, vector<128x256xbf16>, vector<64x256xf32> -> vector<64x256xf32>
    %36 = arith.addf %30, %35 : vector<64x256xf32>
    %c0_56 = arith.constant 0 : index
    %c0_57 = arith.constant 0 : index
    %c0_58 = arith.constant 0 : index
    %c0_59 = arith.constant 0 : index
    %c0_60 = arith.constant 0 : index
    %37 = vector.load %arg4[%c0_56, %c0_57, %c0_58, %c0_59, %c0_60] : memref<1x2x1x80x128xbf16, #tpu.memory_space<vmem>>, vector<1x1x1x64x128xbf16>
    %38 = vector.shape_cast %37 : vector<1x1x1x64x128xbf16> to vector<64x128xbf16>
    %c2_61 = arith.constant 2 : index
    %c0_62 = arith.constant 0 : index
    %c0_63 = arith.constant 0 : index
    %c0_64 = arith.constant 0 : index
    %39 = vector.load %arg5[%c2_61, %c0_62, %c0_63, %c0_64] : memref<3x3x128x256xbf16, #tpu.memory_space<vmem>>, vector<1x1x128x256xbf16>
    %40 = vector.shape_cast %39 : vector<1x1x128x256xbf16> to vector<128x256xbf16>
    %cst_65 = arith.constant dense<0.000000e+00> : vector<64x256xf32>
    %41 = tpu.matmul %38, %40, %cst_65 {dimension_numbers = #tpu.dot_dimension_numbers<[1], [0], [0], [1], [0, 0, 1, 1], [], []>} : vector<64x128xbf16>, vector<128x256xbf16>, vector<64x256xf32> -> vector<64x256xf32>
    %42 = arith.addf %36, %41 : vector<64x256xf32>
    %c0_66 = arith.constant 0 : index
    %c1_67 = arith.constant 1 : index
    %c0_68 = arith.constant 0 : index
    %c0_69 = arith.constant 0 : index
    %c0_70 = arith.constant 0 : index
    %43 = vector.load %arg4[%c0_66, %c1_67, %c0_68, %c0_69, %c0_70] : memref<1x2x1x80x128xbf16, #tpu.memory_space<vmem>>, vector<1x1x1x64x128xbf16>
    %44 = vector.shape_cast %43 : vector<1x1x1x64x128xbf16> to vector<64x128xbf16>
    %c2_71 = arith.constant 2 : index
    %c1_72 = arith.constant 1 : index
    %c0_73 = arith.constant 0 : index
    %c0_74 = arith.constant 0 : index
    %45 = vector.load %arg5[%c2_71, %c1_72, %c0_73, %c0_74] : memref<3x3x128x256xbf16, #tpu.memory_space<vmem>>, vector<1x1x128x256xbf16>
    %46 = vector.shape_cast %45 : vector<1x1x128x256xbf16> to vector<128x256xbf16>
    %cst_75 = arith.constant dense<0.000000e+00> : vector<64x256xf32>
    %47 = tpu.matmul %44, %46, %cst_75 {dimension_numbers = #tpu.dot_dimension_numbers<[1], [0], [0], [1], [0, 0, 1, 1], [], []>} : vector<64x128xbf16>, vector<128x256xbf16>, vector<64x256xf32> -> vector<64x256xf32>
    %48 = arith.addf %42, %47 : vector<64x256xf32>
    %c0_76 = arith.constant 0 : index
    %c0_77 = arith.constant 0 : index
    %c0_78 = arith.constant 0 : index
    %c16_79 = arith.constant 16 : index
    %c0_80 = arith.constant 0 : index
    %49 = vector.load %arg4[%c0_76, %c0_77, %c0_78, %c16_79, %c0_80] : memref<1x2x1x80x128xbf16, #tpu.memory_space<vmem>>, vector<1x1x1x64x128xbf16>
    %50 = vector.shape_cast %49 : vector<1x1x1x64x128xbf16> to vector<64x128xbf16>
    %c2_81 = arith.constant 2 : index
    %c2_82 = arith.constant 2 : index
    %c0_83 = arith.constant 0 : index
    %c0_84 = arith.constant 0 : index
    %51 = vector.load %arg5[%c2_81, %c2_82, %c0_83, %c0_84] : memref<3x3x128x256xbf16, #tpu.memory_space<vmem>>, vector<1x1x128x256xbf16>
    %52 = vector.shape_cast %51 : vector<1x1x128x256xbf16> to vector<128x256xbf16>
    %cst_85 = arith.constant dense<0.000000e+00> : vector<64x256xf32>
    %53 = tpu.matmul %50, %52, %cst_85 {dimension_numbers = #tpu.dot_dimension_numbers<[1], [0], [0], [1], [0, 0, 1, 1], [], []>} : vector<64x128xbf16>, vector<128x256xbf16>, vector<64x256xf32> -> vector<64x256xf32>
    %54 = arith.addf %48, %53 : vector<64x256xf32>
    %c0_86 = arith.constant 0 : index
    %c0_87 = arith.constant 0 : index
    %55 = vector.load %arg6[%c0_86, %c0_87] : memref<1x256xf32, #tpu.memory_space<vmem>>, vector<1x256xf32>
    %56 = vector.broadcast %55 : vector<1x256xf32> to vector<64x256xf32>
    %57 = arith.addf %54, %56 : vector<64x256xf32>
    %58 = vector.extract_strided_slice %57 {offsets = [0, 0], sizes = [64, 128], strides = [1, 1]} : vector<64x256xf32> to vector<64x128xf32>
    %cst_88 = arith.constant 0.000000e+00 : f32
    %59 = vector.broadcast %cst_88 : f32 to vector<64x128xf32>
    %60 = arith.maximumf %58, %59 : vector<64x128xf32>
    %61 = arith.truncf %60 : vector<64x128xf32> to vector<64x128xbf16>
    %c0_89 = arith.constant 0 : index
    %c0_90 = arith.constant 0 : index
    %c0_91 = arith.constant 0 : index
    %c0_92 = arith.constant 0 : index
    %62 = vector.load %arg7[%c0_89, %c0_90, %c0_91, %c0_92] : memref<1x1x64x128xbf16, #tpu.memory_space<vmem>>, vector<1x1x64x128xbf16>
    %63 = vector.shape_cast %62 : vector<1x1x64x128xbf16> to vector<64x128xbf16>
    %64 = vector.shape_cast %61 : vector<64x128xbf16> to vector<1x1x64x128xbf16>
    tpu.vector_store %arg7[%c0_89, %c0_90, %c0_91, %c0_92], %64 {strides = array<i32>} : memref<1x1x64x128xbf16, #tpu.memory_space<vmem>>, vector<1x1x64x128xbf16>,
    %65 = vector.extract_strided_slice %57 {offsets = [0, 128], sizes = [64, 128], strides = [1, 1]} : vector<64x256xf32> to vector<64x128xf32>
    %66 = arith.truncf %65 : vector<64x128xf32> to vector<64x128xbf16>
    %c0_93 = arith.constant 0 : index
    %c0_94 = arith.constant 0 : index
    %c0_95 = arith.constant 0 : index
    %c0_96 = arith.constant 0 : index
    %67 = vector.load %arg8[%c0_93, %c0_94, %c0_95, %c0_96] : memref<1x1x64x128xbf16, #tpu.memory_space<vmem>>, vector<1x1x64x128xbf16>
    %68 = vector.shape_cast %67 : vector<1x1x64x128xbf16> to vector<64x128xbf16>
    %69 = vector.shape_cast %66 : vector<64x128xbf16> to vector<1x1x64x128xbf16>
    tpu.vector_store %arg8[%c0_93, %c0_94, %c0_95, %c0_96], %69 {strides = array<i32>} : memref<1x1x64x128xbf16, #tpu.memory_space<vmem>>, vector<1x1x64x128xbf16>,
    return
  }
  func.func @transform_0(%arg0: i32, %arg1: i32) -> (i32, i32, i32, i32, i32) {
    %c2_i32 = arith.constant 2 : i32
    %0 = arith.muli %c2_i32, %arg1 : i32
    %c0_i32 = arith.constant 0 : i32
    %1 = arith.addi %0, %c0_i32 : i32
    %c0_i32_0 = arith.constant 0 : i32
    %c0_i32_1 = arith.constant 0 : i32
    %c0_i32_2 = arith.constant 0 : i32
    %c0_i32_3 = arith.constant 0 : i32
    return %arg0, %c0_i32_0, %1, %c0_i32_1, %c0_i32_2 : i32, i32, i32, i32, i32
  }
  func.func @transform_1(%arg0: i32, %arg1: i32) -> (i32, i32, i32, i32, i32) {
    %c2_i32 = arith.constant 2 : i32
    %0 = arith.muli %c2_i32, %arg1 : i32
    %c1_i32 = arith.constant 1 : i32
    %1 = arith.addi %0, %c1_i32 : i32
    %c0_i32 = arith.constant 0 : i32
    %c0_i32_0 = arith.constant 0 : i32
    %c0_i32_1 = arith.constant 0 : i32
    %c0_i32_2 = arith.constant 0 : i32
    return %arg0, %c0_i32, %1, %c0_i32_0, %c0_i32_1 : i32, i32, i32, i32, i32
  }
  func.func @transform_2(%arg0: i32, %arg1: i32) -> (i32, i32, i32, i32, i32) {
    %c2_i32 = arith.constant 2 : i32
    %0 = arith.muli %c2_i32, %arg1 : i32
    %c2_i32_0 = arith.constant 2 : i32
    %1 = arith.addi %0, %c2_i32_0 : i32
    %c0_i32 = arith.constant 0 : i32
    %c0_i32_1 = arith.constant 0 : i32
    %c0_i32_2 = arith.constant 0 : i32
    %c0_i32_3 = arith.constant 0 : i32
    return %arg0, %c0_i32, %1, %c0_i32_1, %c0_i32_2 : i32, i32, i32, i32, i32
  }
  func.func @transform_3(%arg0: i32, %arg1: i32) -> (i32, i32, i32, i32) {
    %c0_i32 = arith.constant 0 : i32
    %c0_i32_0 = arith.constant 0 : i32
    %c0_i32_1 = arith.constant 0 : i32
    %c0_i32_2 = arith.constant 0 : i32
    %c0_i32_3 = arith.constant 0 : i32
    return %c0_i32, %c0_i32_0, %c0_i32_1, %c0_i32_2 : i32, i32, i32, i32
  }
  func.func @transform_4(%arg0: i32, %arg1: i32) -> (i32, i32) {
    %c0_i32 = arith.constant 0 : i32
    %c0_i32_0 = arith.constant 0 : i32
    %c0_i32_1 = arith.constant 0 : i32
    return %c0_i32, %c0_i32_0 : i32, i32
  }
  func.func @transform_5(%arg0: i32, %arg1: i32) -> (i32, i32, i32, i32) {
    %c0_i32 = arith.constant 0 : i32
    %c0_i32_0 = arith.constant 0 : i32
    %c0_i32_1 = arith.constant 0 : i32
    return %arg0, %arg1, %c0_i32, %c0_i32_0 : i32, i32, i32, i32
  }
  func.func @transform_6(%arg0: i32, %arg1: i32) -> (i32, i32, i32, i32) {
    %c0_i32 = arith.constant 0 : i32
    %c0_i32_0 = arith.constant 0 : i32
    %c0_i32_1 = arith.constant 0 : i32
    return %arg0, %arg1, %c0_i32, %c0_i32_0 : i32, i32, i32, i32
  }
}

module attributes {stable_mosaic.version = 11 : i64} {
  func.func @_conv2_residual_kernel(%arg0: i32, %arg1: i32, %arg2: memref<1x1x96x128xbf16, #tpu.memory_space<vmem>>, %arg3: memref<1x1x96x128xbf16, #tpu.memory_space<vmem>>, %arg4: memref<1x1x96x128xbf16, #tpu.memory_space<vmem>>, %arg5: memref<3x3x128x128xbf16, #tpu.memory_space<vmem>>, %arg6: memref<1x128xf32, #tpu.memory_space<vmem>>, %arg7: memref<1x1x64x128xbf16, #tpu.memory_space<vmem>>, %arg8: memref<1x1x64x128xbf16, #tpu.memory_space<vmem>>) attributes {dimension_semantics = [#tpu.dimension_semantics<parallel>, #tpu.dimension_semantics<parallel>], iteration_bounds = array<i64: 2, 4>, scalar_prefetch = 0 : i64, scratch_operands = 0 : i64, tpu.core_type = #tpu.core_type<tc>, window_params = [{transform_indices = @transform_0, window_bounds = array<i64: 1, 1, 96, 128>}, {transform_indices = @transform_1, window_bounds = array<i64: 1, 1, 96, 128>}, {transform_indices = @transform_2, window_bounds = array<i64: 1, 1, 96, 128>}, {pipeline_mode = #tpu.pipeline_mode<synchronous>, transform_indices = @transform_3, window_bounds = array<i64: 3, 3, 128, 128>}, {pipeline_mode = #tpu.pipeline_mode<synchronous>, transform_indices = @transform_4, window_bounds = array<i64: 1, 128>}, {transform_indices = @transform_5, window_bounds = array<i64: 1, 1, 64, 128>}, {transform_indices = @transform_6, window_bounds = array<i64: 1, 1, 64, 128>}]} {
    %cst = arith.constant 0.000000e+00 : f32
    %0 = vector.broadcast %cst : f32 to vector<64x128xf32>
    %c0 = arith.constant 0 : index
    %c0_0 = arith.constant 0 : index
    %c0_1 = arith.constant 0 : index
    %c0_2 = arith.constant 0 : index
    %1 = vector.load %arg2[%c0, %c0_0, %c0_1, %c0_2] : memref<1x1x96x128xbf16, #tpu.memory_space<vmem>>, vector<1x1x64x128xbf16>
    %2 = vector.shape_cast %1 : vector<1x1x64x128xbf16> to vector<64x128xbf16>
    %c0_3 = arith.constant 0 : index
    %c0_4 = arith.constant 0 : index
    %c0_5 = arith.constant 0 : index
    %c0_6 = arith.constant 0 : index
    %3 = vector.load %arg5[%c0_3, %c0_4, %c0_5, %c0_6] : memref<3x3x128x128xbf16, #tpu.memory_space<vmem>>, vector<1x1x128x128xbf16>
    %4 = vector.shape_cast %3 : vector<1x1x128x128xbf16> to vector<128x128xbf16>
    %cst_7 = arith.constant dense<0.000000e+00> : vector<64x128xf32>
    %5 = tpu.matmul %2, %4, %cst_7 {dimension_numbers = #tpu.dot_dimension_numbers<[1], [0], [0], [1], [0, 0, 1, 1], [], []>} : vector<64x128xbf16>, vector<128x128xbf16>, vector<64x128xf32> -> vector<64x128xf32>
    %6 = arith.addf %0, %5 : vector<64x128xf32>
    %c0_8 = arith.constant 0 : index
    %c0_9 = arith.constant 0 : index
    %c16 = arith.constant 16 : index
    %c0_10 = arith.constant 0 : index
    %7 = vector.load %arg2[%c0_8, %c0_9, %c16, %c0_10] : memref<1x1x96x128xbf16, #tpu.memory_space<vmem>>, vector<1x1x64x128xbf16>
    %8 = vector.shape_cast %7 : vector<1x1x64x128xbf16> to vector<64x128xbf16>
    %c0_11 = arith.constant 0 : index
    %c1 = arith.constant 1 : index
    %c0_12 = arith.constant 0 : index
    %c0_13 = arith.constant 0 : index
    %9 = vector.load %arg5[%c0_11, %c1, %c0_12, %c0_13] : memref<3x3x128x128xbf16, #tpu.memory_space<vmem>>, vector<1x1x128x128xbf16>
    %10 = vector.shape_cast %9 : vector<1x1x128x128xbf16> to vector<128x128xbf16>
    %cst_14 = arith.constant dense<0.000000e+00> : vector<64x128xf32>
    %11 = tpu.matmul %8, %10, %cst_14 {dimension_numbers = #tpu.dot_dimension_numbers<[1], [0], [0], [1], [0, 0, 1, 1], [], []>} : vector<64x128xbf16>, vector<128x128xbf16>, vector<64x128xf32> -> vector<64x128xf32>
    %12 = arith.addf %6, %11 : vector<64x128xf32>
    %c0_15 = arith.constant 0 : index
    %c0_16 = arith.constant 0 : index
    %c32 = arith.constant 32 : index
    %c0_17 = arith.constant 0 : index
    %13 = vector.load %arg2[%c0_15, %c0_16, %c32, %c0_17] : memref<1x1x96x128xbf16, #tpu.memory_space<vmem>>, vector<1x1x64x128xbf16>
    %14 = vector.shape_cast %13 : vector<1x1x64x128xbf16> to vector<64x128xbf16>
    %c0_18 = arith.constant 0 : index
    %c2 = arith.constant 2 : index
    %c0_19 = arith.constant 0 : index
    %c0_20 = arith.constant 0 : index
    %15 = vector.load %arg5[%c0_18, %c2, %c0_19, %c0_20] : memref<3x3x128x128xbf16, #tpu.memory_space<vmem>>, vector<1x1x128x128xbf16>
    %16 = vector.shape_cast %15 : vector<1x1x128x128xbf16> to vector<128x128xbf16>
    %cst_21 = arith.constant dense<0.000000e+00> : vector<64x128xf32>
    %17 = tpu.matmul %14, %16, %cst_21 {dimension_numbers = #tpu.dot_dimension_numbers<[1], [0], [0], [1], [0, 0, 1, 1], [], []>} : vector<64x128xbf16>, vector<128x128xbf16>, vector<64x128xf32> -> vector<64x128xf32>
    %18 = arith.addf %12, %17 : vector<64x128xf32>
    %c0_22 = arith.constant 0 : index
    %c0_23 = arith.constant 0 : index
    %c0_24 = arith.constant 0 : index
    %c0_25 = arith.constant 0 : index
    %19 = vector.load %arg3[%c0_22, %c0_23, %c0_24, %c0_25] : memref<1x1x96x128xbf16, #tpu.memory_space<vmem>>, vector<1x1x64x128xbf16>
    %20 = vector.shape_cast %19 : vector<1x1x64x128xbf16> to vector<64x128xbf16>
    %c1_26 = arith.constant 1 : index
    %c0_27 = arith.constant 0 : index
    %c0_28 = arith.constant 0 : index
    %c0_29 = arith.constant 0 : index
    %21 = vector.load %arg5[%c1_26, %c0_27, %c0_28, %c0_29] : memref<3x3x128x128xbf16, #tpu.memory_space<vmem>>, vector<1x1x128x128xbf16>
    %22 = vector.shape_cast %21 : vector<1x1x128x128xbf16> to vector<128x128xbf16>
    %cst_30 = arith.constant dense<0.000000e+00> : vector<64x128xf32>
    %23 = tpu.matmul %20, %22, %cst_30 {dimension_numbers = #tpu.dot_dimension_numbers<[1], [0], [0], [1], [0, 0, 1, 1], [], []>} : vector<64x128xbf16>, vector<128x128xbf16>, vector<64x128xf32> -> vector<64x128xf32>
    %24 = arith.addf %18, %23 : vector<64x128xf32>
    %c0_31 = arith.constant 0 : index
    %c0_32 = arith.constant 0 : index
    %c16_33 = arith.constant 16 : index
    %c0_34 = arith.constant 0 : index
    %25 = vector.load %arg3[%c0_31, %c0_32, %c16_33, %c0_34] : memref<1x1x96x128xbf16, #tpu.memory_space<vmem>>, vector<1x1x64x128xbf16>
    %26 = vector.shape_cast %25 : vector<1x1x64x128xbf16> to vector<64x128xbf16>
    %c1_35 = arith.constant 1 : index
    %c1_36 = arith.constant 1 : index
    %c0_37 = arith.constant 0 : index
    %c0_38 = arith.constant 0 : index
    %27 = vector.load %arg5[%c1_35, %c1_36, %c0_37, %c0_38] : memref<3x3x128x128xbf16, #tpu.memory_space<vmem>>, vector<1x1x128x128xbf16>
    %28 = vector.shape_cast %27 : vector<1x1x128x128xbf16> to vector<128x128xbf16>
    %cst_39 = arith.constant dense<0.000000e+00> : vector<64x128xf32>
    %29 = tpu.matmul %26, %28, %cst_39 {dimension_numbers = #tpu.dot_dimension_numbers<[1], [0], [0], [1], [0, 0, 1, 1], [], []>} : vector<64x128xbf16>, vector<128x128xbf16>, vector<64x128xf32> -> vector<64x128xf32>
    %30 = arith.addf %24, %29 : vector<64x128xf32>
    %c0_40 = arith.constant 0 : index
    %c0_41 = arith.constant 0 : index
    %c32_42 = arith.constant 32 : index
    %c0_43 = arith.constant 0 : index
    %31 = vector.load %arg3[%c0_40, %c0_41, %c32_42, %c0_43] : memref<1x1x96x128xbf16, #tpu.memory_space<vmem>>, vector<1x1x64x128xbf16>
    %32 = vector.shape_cast %31 : vector<1x1x64x128xbf16> to vector<64x128xbf16>
    %c1_44 = arith.constant 1 : index
    %c2_45 = arith.constant 2 : index
    %c0_46 = arith.constant 0 : index
    %c0_47 = arith.constant 0 : index
    %33 = vector.load %arg5[%c1_44, %c2_45, %c0_46, %c0_47] : memref<3x3x128x128xbf16, #tpu.memory_space<vmem>>, vector<1x1x128x128xbf16>
    %34 = vector.shape_cast %33 : vector<1x1x128x128xbf16> to vector<128x128xbf16>
    %cst_48 = arith.constant dense<0.000000e+00> : vector<64x128xf32>
    %35 = tpu.matmul %32, %34, %cst_48 {dimension_numbers = #tpu.dot_dimension_numbers<[1], [0], [0], [1], [0, 0, 1, 1], [], []>} : vector<64x128xbf16>, vector<128x128xbf16>, vector<64x128xf32> -> vector<64x128xf32>
    %36 = arith.addf %30, %35 : vector<64x128xf32>
    %c0_49 = arith.constant 0 : index
    %c0_50 = arith.constant 0 : index
    %c0_51 = arith.constant 0 : index
    %c0_52 = arith.constant 0 : index
    %37 = vector.load %arg4[%c0_49, %c0_50, %c0_51, %c0_52] : memref<1x1x96x128xbf16, #tpu.memory_space<vmem>>, vector<1x1x64x128xbf16>
    %38 = vector.shape_cast %37 : vector<1x1x64x128xbf16> to vector<64x128xbf16>
    %c2_53 = arith.constant 2 : index
    %c0_54 = arith.constant 0 : index
    %c0_55 = arith.constant 0 : index
    %c0_56 = arith.constant 0 : index
    %39 = vector.load %arg5[%c2_53, %c0_54, %c0_55, %c0_56] : memref<3x3x128x128xbf16, #tpu.memory_space<vmem>>, vector<1x1x128x128xbf16>
    %40 = vector.shape_cast %39 : vector<1x1x128x128xbf16> to vector<128x128xbf16>
    %cst_57 = arith.constant dense<0.000000e+00> : vector<64x128xf32>
    %41 = tpu.matmul %38, %40, %cst_57 {dimension_numbers = #tpu.dot_dimension_numbers<[1], [0], [0], [1], [0, 0, 1, 1], [], []>} : vector<64x128xbf16>, vector<128x128xbf16>, vector<64x128xf32> -> vector<64x128xf32>
    %42 = arith.addf %36, %41 : vector<64x128xf32>
    %c0_58 = arith.constant 0 : index
    %c0_59 = arith.constant 0 : index
    %c16_60 = arith.constant 16 : index
    %c0_61 = arith.constant 0 : index
    %43 = vector.load %arg4[%c0_58, %c0_59, %c16_60, %c0_61] : memref<1x1x96x128xbf16, #tpu.memory_space<vmem>>, vector<1x1x64x128xbf16>
    %44 = vector.shape_cast %43 : vector<1x1x64x128xbf16> to vector<64x128xbf16>
    %c2_62 = arith.constant 2 : index
    %c1_63 = arith.constant 1 : index
    %c0_64 = arith.constant 0 : index
    %c0_65 = arith.constant 0 : index
    %45 = vector.load %arg5[%c2_62, %c1_63, %c0_64, %c0_65] : memref<3x3x128x128xbf16, #tpu.memory_space<vmem>>, vector<1x1x128x128xbf16>
    %46 = vector.shape_cast %45 : vector<1x1x128x128xbf16> to vector<128x128xbf16>
    %cst_66 = arith.constant dense<0.000000e+00> : vector<64x128xf32>
    %47 = tpu.matmul %44, %46, %cst_66 {dimension_numbers = #tpu.dot_dimension_numbers<[1], [0], [0], [1], [0, 0, 1, 1], [], []>} : vector<64x128xbf16>, vector<128x128xbf16>, vector<64x128xf32> -> vector<64x128xf32>
    %48 = arith.addf %42, %47 : vector<64x128xf32>
    %c0_67 = arith.constant 0 : index
    %c0_68 = arith.constant 0 : index
    %c32_69 = arith.constant 32 : index
    %c0_70 = arith.constant 0 : index
    %49 = vector.load %arg4[%c0_67, %c0_68, %c32_69, %c0_70] : memref<1x1x96x128xbf16, #tpu.memory_space<vmem>>, vector<1x1x64x128xbf16>
    %50 = vector.shape_cast %49 : vector<1x1x64x128xbf16> to vector<64x128xbf16>
    %c2_71 = arith.constant 2 : index
    %c2_72 = arith.constant 2 : index
    %c0_73 = arith.constant 0 : index
    %c0_74 = arith.constant 0 : index
    %51 = vector.load %arg5[%c2_71, %c2_72, %c0_73, %c0_74] : memref<3x3x128x128xbf16, #tpu.memory_space<vmem>>, vector<1x1x128x128xbf16>
    %52 = vector.shape_cast %51 : vector<1x1x128x128xbf16> to vector<128x128xbf16>
    %cst_75 = arith.constant dense<0.000000e+00> : vector<64x128xf32>
    %53 = tpu.matmul %50, %52, %cst_75 {dimension_numbers = #tpu.dot_dimension_numbers<[1], [0], [0], [1], [0, 0, 1, 1], [], []>} : vector<64x128xbf16>, vector<128x128xbf16>, vector<64x128xf32> -> vector<64x128xf32>
    %54 = arith.addf %48, %53 : vector<64x128xf32>
    %c0_76 = arith.constant 0 : index
    %c0_77 = arith.constant 0 : index
    %55 = vector.load %arg6[%c0_76, %c0_77] : memref<1x128xf32, #tpu.memory_space<vmem>>, vector<1x128xf32>
    %56 = vector.broadcast %55 : vector<1x128xf32> to vector<64x128xf32>
    %57 = arith.addf %54, %56 : vector<64x128xf32>
    %c0_78 = arith.constant 0 : index
    %c0_79 = arith.constant 0 : index
    %c0_80 = arith.constant 0 : index
    %c0_81 = arith.constant 0 : index
    %58 = vector.load %arg7[%c0_78, %c0_79, %c0_80, %c0_81] : memref<1x1x64x128xbf16, #tpu.memory_space<vmem>>, vector<1x1x64x128xbf16>
    %59 = vector.shape_cast %58 : vector<1x1x64x128xbf16> to vector<64x128xbf16>
    %60 = arith.extf %59 : vector<64x128xbf16> to vector<64x128xf32>
    %61 = arith.addf %57, %60 : vector<64x128xf32>
    %cst_82 = arith.constant 0.000000e+00 : f32
    %62 = vector.broadcast %cst_82 : f32 to vector<64x128xf32>
    %63 = arith.maximumf %61, %62 : vector<64x128xf32>
    %64 = arith.truncf %63 : vector<64x128xf32> to vector<64x128xbf16>
    %c0_83 = arith.constant 0 : index
    %c0_84 = arith.constant 0 : index
    %c0_85 = arith.constant 0 : index
    %c0_86 = arith.constant 0 : index
    %65 = vector.load %arg8[%c0_83, %c0_84, %c0_85, %c0_86] : memref<1x1x64x128xbf16, #tpu.memory_space<vmem>>, vector<1x1x64x128xbf16>
    %66 = vector.shape_cast %65 : vector<1x1x64x128xbf16> to vector<64x128xbf16>
    %67 = vector.shape_cast %64 : vector<64x128xbf16> to vector<1x1x64x128xbf16>
    tpu.vector_store %arg8[%c0_83, %c0_84, %c0_85, %c0_86], %67 {strides = array<i32>} : memref<1x1x64x128xbf16, #tpu.memory_space<vmem>>, vector<1x1x64x128xbf16>,
    return
  }
  func.func @transform_0(%arg0: i32, %arg1: i32) -> (i32, i32, i32, i32) {
    %c0_i32 = arith.constant 0 : i32
    %0 = arith.addi %arg1, %c0_i32 : i32
    %c0_i32_0 = arith.constant 0 : i32
    %c0_i32_1 = arith.constant 0 : i32
    %c0_i32_2 = arith.constant 0 : i32
    return %arg0, %0, %c0_i32_0, %c0_i32_1 : i32, i32, i32, i32
  }
  func.func @transform_1(%arg0: i32, %arg1: i32) -> (i32, i32, i32, i32) {
    %c1_i32 = arith.constant 1 : i32
    %0 = arith.addi %arg1, %c1_i32 : i32
    %c0_i32 = arith.constant 0 : i32
    %c0_i32_0 = arith.constant 0 : i32
    %c0_i32_1 = arith.constant 0 : i32
    return %arg0, %0, %c0_i32, %c0_i32_0 : i32, i32, i32, i32
  }
  func.func @transform_2(%arg0: i32, %arg1: i32) -> (i32, i32, i32, i32) {
    %c2_i32 = arith.constant 2 : i32
    %0 = arith.addi %arg1, %c2_i32 : i32
    %c0_i32 = arith.constant 0 : i32
    %c0_i32_0 = arith.constant 0 : i32
    %c0_i32_1 = arith.constant 0 : i32
    return %arg0, %0, %c0_i32, %c0_i32_0 : i32, i32, i32, i32
  }
  func.func @transform_3(%arg0: i32, %arg1: i32) -> (i32, i32, i32, i32) {
    %c0_i32 = arith.constant 0 : i32
    %c0_i32_0 = arith.constant 0 : i32
    %c0_i32_1 = arith.constant 0 : i32
    %c0_i32_2 = arith.constant 0 : i32
    %c0_i32_3 = arith.constant 0 : i32
    return %c0_i32, %c0_i32_0, %c0_i32_1, %c0_i32_2 : i32, i32, i32, i32
  }
  func.func @transform_4(%arg0: i32, %arg1: i32) -> (i32, i32) {
    %c0_i32 = arith.constant 0 : i32
    %c0_i32_0 = arith.constant 0 : i32
    %c0_i32_1 = arith.constant 0 : i32
    return %c0_i32, %c0_i32_0 : i32, i32
  }
  func.func @transform_5(%arg0: i32, %arg1: i32) -> (i32, i32, i32, i32) {
    %c0_i32 = arith.constant 0 : i32
    %c0_i32_0 = arith.constant 0 : i32
    %c0_i32_1 = arith.constant 0 : i32
    return %arg0, %arg1, %c0_i32, %c0_i32_0 : i32, i32, i32, i32
  }
  func.func @transform_6(%arg0: i32, %arg1: i32) -> (i32, i32, i32, i32) {
    %c0_i32 = arith.constant 0 : i32
    %c0_i32_0 = arith.constant 0 : i32
    %c0_i32_1 = arith.constant 0 : i32
    return %arg0, %arg1, %c0_i32, %c0_i32_0 : i32, i32, i32, i32
  }
}

</mosaic_0001>

<llo_original>
// kernel: basic_block_forward.2
$region0: #{basic_block_forward.2}
  #allocation0 [shape = 'u32[]', space=smem, size = 0x4, offset = 0x4, fixed_abs, tag = 'smem constant byte address 0x4 - core index']
  #allocation1 [shape = 'u32[144,128]{1,0:T(1,128)}', space=vmem, size = 0x12000, scoped, tag = 'internal scratch']
  %s0 = inlined_call_operand.vmem [shape: bf16[2,2,10,80,128], index: 0, kind: input, shape index: {}, may-alias: {0,1,2}]
  %s1 = inlined_call_operand.vmem [shape: bf16[2,2,10,80,128], index: 1, kind: input, shape index: {}, may-alias: {0,1,2}]
  %s2 = inlined_call_operand.vmem [shape: bf16[2,2,10,80,128], index: 2, kind: input, shape index: {}, may-alias: {0,1,2}]
  %s3 = inlined_call_operand.vmem [shape: bf16[3,3,128,256], index: 3, kind: input, shape index: {}]
  %s4 = inlined_call_operand.vmem [shape: f32[1,256], index: 4, kind: input, shape index: {}]
  %s5 = inlined_call_operand.vmem [shape: bf16[2,4,64,128], index: 5, kind: output, shape index: {0}]
  %s6 = inlined_call_operand.vmem [shape: bf16[2,4,64,128], index: 6, kind: output, shape index: {1}]
  %7 = xla_tuple %s5, %s6
  %s8 = sld [smem:[#allocation0]]
  $region184: #{basic_block_forward.2} parent=0
    _
  %s10 = ssub.s32 1, %s8
  %s11 = scalar_select 0, %s10, %s8
  $region1: #{basic_block_forward.2} parent=0
    #allocation2 [shape = 'u8[81920]{0}', space=vmem, size = 0x14000, scoped, tag = 'input window, operand 0']
    #allocation3 [shape = 'u8[81920]{0}', space=vmem, size = 0x14000, scoped, tag = 'input window, operand 1']
    #allocation4 [shape = 'u8[81920]{0}', space=vmem, size = 0x14000, scoped, tag = 'input window, operand 2']
    loop: start=0, step=1, limit=10
    $region2: #{basic_block_forward.2} parent=1 // loop_pre_header
      _
    $region3: #{basic_block_forward.2} parent=1 // loop_header
      %s13 = sphi 0, %s17
      %p14 = scmp.ge.s32.totalorder %s13, 10
      %s20 = sphi 0, %s32
      %s21 = sphi 0, %s28
      %s22 = sphi 0, %s20
      %s23 = sphi 0, %s21
      %s24 = sphi 0, %s22
      %s25 = sphi 0, %s23
      %s39 = sphi 0, %s41
      %s42 = sphi 0, %s39
      %s43 = sphi 0, %s42
      %s59 = sphi 0, %s43
      %s71 = sphi 0, %s73
      %s74 = sphi 0, %s71
      %s75 = sphi 0, %s74
      %s91 = sphi 0, %s75
      %s103 = sphi 0, %s105
      %s106 = sphi 0, %s103
      %s107 = sphi 0, %s106
      %s123 = sphi 0, %s107
      %s127 = sphi 0, %s127
      %s129 = sphi 0, %s127
      %s130 = sphi 0, %s129
      %s144 = sphi 0, %s130
      %s148 = sphi 0, %s148
      %s150 = sphi 0, %s148
      %s151 = sphi 0, %s150
      %s165 = sphi 0, %s151
      %s173 = sphi 0, %s175
      %s176 = sphi 0, %s173
      %s177 = sphi 0, %s176
      %s193 = sphi 0, %s177
      %s201 = sphi 0, %s203
      %s204 = sphi 0, %s201
      %s205 = sphi 0, %s204
      %s221 = sphi 0, %s205
    $region4: #{basic_block_forward.2} parent=1 // loop_header_branch
      %16 = sbr.rel (%p14) target = $region8
    $region5: #{basic_block_forward.2} parent=1 // loop_body
      %s18 = ssub.s32 %s13, 1
      %s19 = ssub.s32 %s13, 2
      %s26 = sadd.s32 1, %s21
      %p27 = scmp.ge.s32.totalorder %s26, 4
      %s28 = scalar_select %p27, 0, %s26
      %s29 = sadd.s32 1, %s20
      %s30 = scalar_select %p27, %s29, %s20
      %p31 = scmp.ge.s32.totalorder %s30, 2
      %s32 = scalar_select %p31, 0, %s30
      %s33 = smul.u32 %s21, 2
      %s34 = smul.u32 %s28, 2
      %s35 = ssub.s32 %s20, %s32
      %s36 = ssub.s32 %s33, %s34
      %s37 = sor.u32 %s35, %s36
      %p38 = scmp.eq.s32.totalorder %s37, 0
      %s40 = sadd.s32 %s39, 1
      %s41 = scalar_select %p38, %s39, %s40
      %p44 = pneg %p38
      %p45 = scmp.eq.s32.totalorder %s13, 7
      %p46 = por %p44, %p45
      %p47 = scmp.ne.s32.totalorder %s39, %s42
      %p48 = scmp.eq.s32.totalorder %s13, 0
      %p49 = por %p47, %p48
      %p50 = scmp.ne.s32.totalorder %s39, %s42
      %p51 = scmp.eq.s32.totalorder %s18, 7
      %p52 = por %p50, %p51
      %p53 = scmp.ne.s32.totalorder %s42, %s43
      %p54 = scmp.eq.s32.totalorder %s18, 0
      %p55 = por %p53, %p54
      %p56 = scmp.ne.s32.totalorder %s42, %s43
      %p57 = scmp.eq.s32.totalorder %s19, 7
      %p58 = por %p56, %p57
      %p60 = scmp.ne.s32.totalorder %s43, %s59
      %p61 = scmp.eq.s32.totalorder %s19, 0
      %p62 = por %p60, %p61
      %s63 = smul.u32 %s21, 2
      %s64 = sadd.s32 %s63, 1
      %s65 = smul.u32 %s28, 2
      %s66 = sadd.s32 %s65, 1
      %s67 = ssub.s32 %s20, %s32
      %s68 = ssub.s32 %s64, %s66
      %s69 = sor.u32 %s67, %s68
      %p70 = scmp.eq.s32.totalorder %s69, 0
      %s72 = sadd.s32 %s71, 1
      %s73 = scalar_select %p70, %s71, %s72
      %p76 = pneg %p70
      %p77 = scmp.eq.s32.totalorder %s13, 7
      %p78 = por %p76, %p77
      %p79 = scmp.ne.s32.totalorder %s71, %s74
      %p80 = scmp.eq.s32.totalorder %s13, 0
      %p81 = por %p79, %p80
      %p82 = scmp.ne.s32.totalorder %s71, %s74
      %p83 = scmp.eq.s32.totalorder %s18, 7
      %p84 = por %p82, %p83
      %p85 = scmp.ne.s32.totalorder %s74, %s75
      %p86 = scmp.eq.s32.totalorder %s18, 0
      %p87 = por %p85, %p86
      %p88 = scmp.ne.s32.totalorder %s74, %s75
      %p89 = scmp.eq.s32.totalorder %s19, 7
      %p90 = por %p88, %p89
      %p92 = scmp.ne.s32.totalorder %s75, %s91
      %p93 = scmp.eq.s32.totalorder %s19, 0
      %p94 = por %p92, %p93
      %s95 = smul.u32 %s21, 2
      %s96 = sadd.s32 %s95, 2
      %s97 = smul.u32 %s28, 2
      %s98 = sadd.s32 %s97, 2
      %s99 = ssub.s32 %s20, %s32
      %s100 = ssub.s32 %s96, %s98
      %s101 = sor.u32 %s99, %s100
      %p102 = scmp.eq.s32.totalorder %s101, 0
      %s104 = sadd.s32 %s103, 1
      %s105 = scalar_select %p102, %s103, %s104
      %p108 = pneg %p102
      %p109 = scmp.eq.s32.totalorder %s13, 7
      %p110 = por %p108, %p109
      %p111 = scmp.ne.s32.totalorder %s103, %s106
      %p112 = scmp.eq.s32.totalorder %s13, 0
      %p113 = por %p111, %p112
      %p114 = scmp.ne.s32.totalorder %s103, %s106
      %p115 = scmp.eq.s32.totalorder %s18, 7
      %p116 = por %p114, %p115
      %p117 = scmp.ne.s32.totalorder %s106, %s107
      %p118 = scmp.eq.s32.totalorder %s18, 0
      %p119 = por %p117, %p118
      %p120 = scmp.ne.s32.totalorder %s106, %s107
      %p121 = scmp.eq.s32.totalorder %s19, 7
      %p122 = por %p120, %p121
      %p124 = scmp.ne.s32.totalorder %s107, %s123
      %p125 = scmp.eq.s32.totalorder %s19, 0
      %p126 = por %p124, %p125
      %s128 = sadd.s32 %s127, 1
      %p131 = scmp.eq.s32.totalorder %s13, 7
      %p132 = scmp.ne.s32.totalorder %s127, %s129
      %p133 = scmp.eq.s32.totalorder %s13, 0
      %p134 = por %p132, %p133
      %p135 = scmp.ne.s32.totalorder %s127, %s129
      %p136 = scmp.eq.s32.totalorder %s18, 7
      %p137 = por %p135, %p136
      %p138 = scmp.ne.s32.totalorder %s129, %s130
      %p139 = scmp.eq.s32.totalorder %s18, 0
      %p140 = por %p138, %p139
      %p141 = scmp.ne.s32.totalorder %s129, %s130
      %p142 = scmp.eq.s32.totalorder %s19, 7
      %p143 = por %p141, %p142
      %p145 = scmp.ne.s32.totalorder %s130, %s144
      %p146 = scmp.eq.s32.totalorder %s19, 0
      %p147 = por %p145, %p146
      %s149 = sadd.s32 %s148, 1
      %p152 = scmp.eq.s32.totalorder %s13, 7
      %p153 = scmp.ne.s32.totalorder %s148, %s150
      %p154 = scmp.eq.s32.totalorder %s13, 0
      %p155 = por %p153, %p154
      %p156 = scmp.ne.s32.totalorder %s148, %s150
      %p157 = scmp.eq.s32.totalorder %s18, 7
      %p158 = por %p156, %p157
      %p159 = scmp.ne.s32.totalorder %s150, %s151
      %p160 = scmp.eq.s32.totalorder %s18, 0
      %p161 = por %p159, %p160
      %p162 = scmp.ne.s32.totalorder %s150, %s151
      %p163 = scmp.eq.s32.totalorder %s19, 7
      %p164 = por %p162, %p163
      %p166 = scmp.ne.s32.totalorder %s151, %s165
      %p167 = scmp.eq.s32.totalorder %s19, 0
      %p168 = por %p166, %p167
      %s169 = ssub.s32 %s20, %s32
      %s170 = ssub.s32 %s21, %s28
      %s171 = sor.u32 %s169, %s170
      %p172 = scmp.eq.s32.totalorder %s171, 0
      %s174 = sadd.s32 %s173, 1
      %s175 = scalar_select %p172, %s173, %s174
      %p178 = pneg %p172
      %p179 = scmp.eq.s32.totalorder %s13, 7
      %p180 = por %p178, %p179
      %p181 = scmp.ne.s32.totalorder %s173, %s176
      %p182 = scmp.eq.s32.totalorder %s13, 0
      %p183 = por %p181, %p182
      %p184 = scmp.ne.s32.totalorder %s173, %s176
      %p185 = scmp.eq.s32.totalorder %s18, 7
      %p186 = por %p184, %p185
      %p187 = scmp.ne.s32.totalorder %s176, %s177
      %p188 = scmp.eq.s32.totalorder %s18, 0
      %p189 = por %p187, %p188
      %p190 = scmp.ne.s32.totalorder %s176, %s177
      %p191 = scmp.eq.s32.totalorder %s19, 7
      %p192 = por %p190, %p191
      %p194 = scmp.ne.s32.totalorder %s177, %s193
      %p195 = scmp.eq.s32.totalorder %s19, 0
      %p196 = por %p194, %p195
      %s197 = ssub.s32 %s20, %s32
      %s198 = ssub.s32 %s21, %s28
      %s199 = sor.u32 %s197, %s198
      %p200 = scmp.eq.s32.totalorder %s199, 0
      %s202 = sadd.s32 %s201, 1
      %s203 = scalar_select %p200, %s201, %s202
      %p206 = pneg %p200
      %p207 = scmp.eq.s32.totalorder %s13, 7
      %p208 = por %p206, %p207
      %p209 = scmp.ne.s32.totalorder %s201, %s204
      %p210 = scmp.eq.s32.totalorder %s13, 0
      %p211 = por %p209, %p210
      %p212 = scmp.ne.s32.totalorder %s201, %s204
      %p213 = scmp.eq.s32.totalorder %s18, 7
      %p214 = por %p212, %p213
      %p215 = scmp.ne.s32.totalorder %s204, %s205
      %p216 = scmp.eq.s32.totalorder %s18, 0
      %p217 = por %p215, %p216
      %p218 = scmp.ne.s32.totalorder %s204, %s205
      %p219 = scmp.eq.s32.totalorder %s19, 7
      %p220 = por %p218, %p219
      %p222 = scmp.ne.s32.totalorder %s205, %s221
      %p223 = scmp.eq.s32.totalorder %s19, 0
      %p224 = por %p222, %p223
      %p225 = scmp.le.s32.totalorder 1, %s13
      %p226 = scmp.lt.s32.totalorder %s13, 9
      %p227 = pnand %p225, %p226
      %p228 = pneg %p227
      // Predicated region
      $region9: #{basic_block_forward.2} parent=5 // pred_check
        _
      $region10: #{basic_block_forward.2} parent=5 // pred_check_branch
        %230 = sbr.rel (%p227) target = $region12
      $region11: #{basic_block_forward.2} parent=5 // pred_region
        %s231 = ssub.s32 %s13, 1
        // Predicated region
        $region13: #{basic_block_forward.2} parent=11 // pred_check
          %p232 = pneg %p140
        $region14: #{basic_block_forward.2} parent=11 // pred_check_branch
          %234 = sbr.rel (%p232) target = $region16
        $region15: #{basic_block_forward.2} parent=11 // pred_region
          _
        $region16: #{basic_block_forward.2} parent=11 // pred_fallthru
          _
        // Predicated region
        $region17: #{basic_block_forward.2} parent=11 // pred_check
          %p235 = pneg %p161
        $region18: #{basic_block_forward.2} parent=11 // pred_check_branch
          %237 = sbr.rel (%p235) target = $region20
        $region19: #{basic_block_forward.2} parent=11 // pred_region
          _
        $region20: #{basic_block_forward.2} parent=11 // pred_fallthru
          _
      $region12: #{basic_block_forward.2} parent=5 // pred_fallthru
        _
      %p238 = scmp.lt.s32.totalorder %s13, 8
      // Predicated region
      $region21: #{basic_block_forward.2} parent=5 // pred_check
        %p239 = pneg %p238
      $region22: #{basic_block_forward.2} parent=5 // pred_check_branch
        %241 = sbr.rel (%p239) target = $region24
      $region23: #{basic_block_forward.2} parent=5 // pred_region
        // Predicated region
        $region25: #{basic_block_forward.2} parent=23 // pred_check
          %p242 = pneg %p49
        $region26: #{basic_block_forward.2} parent=23 // pred_check_branch
          %244 = sbr.rel (%p242) target = $region28
        $region27: #{basic_block_forward.2} parent=23 // pred_region
          %s245 = sand.u32 %s39, 1
          %s246 = sand.u32 %s39, 1
          %s247 = smul.addr %s246, 80
          %s248 = scalar_lea.vmem [#allocation2], %s247
          %s249 = smul.u32 %s21, 2
          %s250 = smul.addr %s249, 10
          %s251 = smul.addr %s20, 200
          %s252 = sadd.s32 %s250, %s251
          %s253 = smul.addr %s252, 4
          %s254 = scalar_lea.vmem %s0, %s253
          // Predicated region
          $region29: #{basic_block_forward.2} parent=27 // pred_check
            _
          $region30: #{basic_block_forward.2} parent=27 // pred_check_branch
            %256 = sbr.rel (0) target = $region32
          $region31: #{basic_block_forward.2} parent=27 // pred_region
            // Predicated region
            $region33: #{basic_block_forward.2} parent=31 // pred_check
              _
            $region34: #{basic_block_forward.2} parent=31 // pred_check_branch
              %258 = sbr.rel target = $region36
            $region35: #{basic_block_forward.2} parent=31 // pred_region
              // Predicated region
              $region48: #{basic_block_forward.2} parent=35 // pred_check
                _
              $region49: #{basic_block_forward.2} parent=35 // pred_check_branch
                %311 = sbr.rel (0) target = $region51
              $region50: #{basic_block_forward.2} parent=35 // pred_region
                loop: start=0, step=1, limit=1
                $region52: #{basic_block_forward.2} parent=50 // loop_pre_header
                  _
                $region53: #{basic_block_forward.2} parent=50 // loop_header
                  %s313 = sphi 0, %s317
                  %p314 = scmp.ge.s32.totalorder %s313, 1
                  %s318 = sphi %s254, %s254
                  %s319 = sphi %s248, %s248
                $region54: #{basic_block_forward.2} parent=50 // loop_header_branch
                  %316 = sbr.rel (%p314) target = $region58
                $region55: #{basic_block_forward.2} parent=50 // loop_body
                  _
                $region56: #{basic_block_forward.2} parent=50 // loop_footer
                  %s317 = sadd.s32 1, %s313
                $region57: #{basic_block_forward.2} parent=50 // loop_footer_branch
                  %312 = sbr.rel target = $region53
                $region58: #{basic_block_forward.2} parent=50 // loop_exit
                  _
                loop: start=0, step=1, limit=1
                $region59: #{basic_block_forward.2} parent=50 // loop_pre_header
                  _
                $region60: #{basic_block_forward.2} parent=50 // loop_header
                  %s322 = sphi 0, %s326
                  %p323 = scmp.ge.s32.totalorder %s322, 1
                  %s327 = sphi %s254, %s254
                  %s328 = sphi %s248, %s248
                $region61: #{basic_block_forward.2} parent=50 // loop_header_branch
                  %325 = sbr.rel (%p323) target = $region65
                $region62: #{basic_block_forward.2} parent=50 // loop_body
                  %v329 = vld [vmem:[%s327] sm:$0xf]
                  %330 = vst [vmem:[%s328] sm:$0xf] %v329
                  %v331 = vld [vmem:[%s327 + $0x4] sm:$0xf]
                  %332 = vst [vmem:[%s328 + $0x4] sm:$0xf] %v331
                  %v333 = vld [vmem:[%s327 + $0x8] sm:$0xf]
                  %334 = vst [vmem:[%s328 + $0x8] sm:$0xf] %v333
                  %v335 = vld [vmem:[%s327 + $0xc] sm:$0xf]
                  %336 = vst [vmem:[%s328 + $0xc] sm:$0xf] %v335
                  %v337 = vld [vmem:[%s327 + $0x10] sm:$0xf]
                  %338 = vst [vmem:[%s328 + $0x10] sm:$0xf] %v337
                  %v339 = vld [vmem:[%s327 + $0x14] sm:$0xf]
                  %340 = vst [vmem:[%s328 + $0x14] sm:$0xf] %v339
                  %v341 = vld [vmem:[%s327 + $0x18] sm:$0xf]
                  %342 = vst [vmem:[%s328 + $0x18] sm:$0xf] %v341
                  %v343 = vld [vmem:[%s327 + $0x1c] sm:$0xf]
                  %344 = vst [vmem:[%s328 + $0x1c] sm:$0xf] %v343
                  %v345 = vld [vmem:[%s327 + $0x20] sm:$0xf]
                  %346 = vst [vmem:[%s328 + $0x20] sm:$0xf] %v345
                  %v347 = vld [vmem:[%s327 + $0x24] sm:$0xf]
                  %348 = vst [vmem:[%s328 + $0x24] sm:$0xf] %v347
                  %v349 = vld [vmem:[%s327 + $0x190] sm:$0xf]
                  %350 = vst [vmem:[%s328 + $0x28] sm:$0xf] %v349
                  %v351 = vld [vmem:[%s327 + $0x194] sm:$0xf]
                  %352 = vst [vmem:[%s328 + $0x2c] sm:$0xf] %v351
                  %v353 = vld [vmem:[%s327 + $0x198] sm:$0xf]
                  %354 = vst [vmem:[%s328 + $0x30] sm:$0xf] %v353
                  %v355 = vld [vmem:[%s327 + $0x19c] sm:$0xf]
                  %356 = vst [vmem:[%s328 + $0x34] sm:$0xf] %v355
                  %v357 = vld [vmem:[%s327 + $0x1a0] sm:$0xf]
                  %358 = vst [vmem:[%s328 + $0x38] sm:$0xf] %v357
                  %v359 = vld [vmem:[%s327 + $0x1a4] sm:$0xf]
                  %360 = vst [vmem:[%s328 + $0x3c] sm:$0xf] %v359
                  %v361 = vld [vmem:[%s327 + $0x1a8] sm:$0xf]
                  %362 = vst [vmem:[%s328 + $0x40] sm:$0xf] %v361
                  %v363 = vld [vmem:[%s327 + $0x1ac] sm:$0xf]
                  %364 = vst [vmem:[%s328 + $0x44] sm:$0xf] %v363
                  %v365 = vld [vmem:[%s327 + $0x1b0] sm:$0xf]
                  %366 = vst [vmem:[%s328 + $0x48] sm:$0xf] %v365
                  %v367 = vld [vmem:[%s327 + $0x1b4] sm:$0xf]
                  %368 = vst [vmem:[%s328 + $0x4c] sm:$0xf] %v367
                $region63: #{basic_block_forward.2} parent=50 // loop_footer
                  %s326 = sadd.s32 1, %s322
                $region64: #{basic_block_forward.2} parent=50 // loop_footer_branch
                  %321 = sbr.rel target = $region60
                $region65: #{basic_block_forward.2} parent=50 // loop_exit
                  _
              $region51: #{basic_block_forward.2} parent=35 // pred_fallthru
                _
            $region36: #{basic_block_forward.2} parent=31 // pred_fallthru
              _
            // Predicated region
            $region37: #{basic_block_forward.2} parent=31 // pred_check
              _
            $region38: #{basic_block_forward.2} parent=31 // pred_check_branch
              %260 = sbr.rel (0) target = $region40
            $region39: #{basic_block_forward.2} parent=31 // pred_region
              loop: start=0, step=1, limit=1
              $region41: #{basic_block_forward.2} parent=39 // loop_pre_header
                _
              $region42: #{basic_block_forward.2} parent=39 // loop_header
                %s263 = sphi 0, %s267
                %p264 = scmp.ge.s32.totalorder %s263, 1
                %s268 = sphi %s254, %s254
                %s269 = sphi %s248, %s248
              $region43: #{basic_block_forward.2} parent=39 // loop_header_branch
                %266 = sbr.rel (%p264) target = $region47
              $region44: #{basic_block_forward.2} parent=39 // loop_body
                %v270 = vld [vmem:[%s268] sm:$0xf]
                %271 = vst [vmem:[%s269] sm:$0xf] %v270
                %v272 = vld [vmem:[%s268 + $0x4] sm:$0xf]
                %273 = vst [vmem:[%s269 + $0x4] sm:$0xf] %v272
                %v274 = vld [vmem:[%s268 + $0x8] sm:$0xf]
                %275 = vst [vmem:[%s269 + $0x8] sm:$0xf] %v274
                %v276 = vld [vmem:[%s268 + $0xc] sm:$0xf]
                %277 = vst [vmem:[%s269 + $0xc] sm:$0xf] %v276
                %v278 = vld [vmem:[%s268 + $0x10] sm:$0xf]
                %279 = vst [vmem:[%s269 + $0x10] sm:$0xf] %v278
                %v280 = vld [vmem:[%s268 + $0x14] sm:$0xf]
                %281 = vst [vmem:[%s269 + $0x14] sm:$0xf] %v280
                %v282 = vld [vmem:[%s268 + $0x18] sm:$0xf]
                %283 = vst [vmem:[%s269 + $0x18] sm:$0xf] %v282
                %v284 = vld [vmem:[%s268 + $0x1c] sm:$0xf]
                %285 = vst [vmem:[%s269 + $0x1c] sm:$0xf] %v284
                %v286 = vld [vmem:[%s268 + $0x20] sm:$0xf]
                %287 = vst [vmem:[%s269 + $0x20] sm:$0xf] %v286
                %v288 = vld [vmem:[%s268 + $0x24] sm:$0xf]
                %289 = vst [vmem:[%s269 + $0x24] sm:$0xf] %v288
                %v290 = vld [vmem:[%s268 + $0x190] sm:$0xf]
                %291 = vst [vmem:[%s269 + $0x28] sm:$0xf] %v290
                %v292 = vld [vmem:[%s268 + $0x194] sm:$0xf]
                %293 = vst [vmem:[%s269 + $0x2c] sm:$0xf] %v292
                %v294 = vld [vmem:[%s268 + $0x198] sm:$0xf]
                %295 = vst [vmem:[%s269 + $0x30] sm:$0xf] %v294
                %v296 = vld [vmem:[%s268 + $0x19c] sm:$0xf]
                %297 = vst [vmem:[%s269 + $0x34] sm:$0xf] %v296
                %v298 = vld [vmem:[%s268 + $0x1a0] sm:$0xf]
                %299 = vst [vmem:[%s269 + $0x38] sm:$0xf] %v298
                %v300 = vld [vmem:[%s268 + $0x1a4] sm:$0xf]
                %301 = vst [vmem:[%s269 + $0x3c] sm:$0xf] %v300
                %v302 = vld [vmem:[%s268 + $0x1a8] sm:$0xf]
                %303 = vst [vmem:[%s269 + $0x40] sm:$0xf] %v302
                %v304 = vld [vmem:[%s268 + $0x1ac] sm:$0xf]
                %305 = vst [vmem:[%s269 + $0x44] sm:$0xf] %v304
                %v306 = vld [vmem:[%s268 + $0x1b0] sm:$0xf]
                %307 = vst [vmem:[%s269 + $0x48] sm:$0xf] %v306
                %v308 = vld [vmem:[%s268 + $0x1b4] sm:$0xf]
                %309 = vst [vmem:[%s269 + $0x4c] sm:$0xf] %v308
              $region45: #{basic_block_forward.2} parent=39 // loop_footer
                %s267 = sadd.s32 1, %s263
              $region46: #{basic_block_forward.2} parent=39 // loop_footer_branch
                %262 = sbr.rel target = $region42
              $region47: #{basic_block_forward.2} parent=39 // loop_exit
                _
            $region40: #{basic_block_forward.2} parent=31 // pred_fallthru
              _
          $region32: #{basic_block_forward.2} parent=27 // pred_fallthru
            _
          %369 = vnop
        $region28: #{basic_block_forward.2} parent=23 // pred_fallthru
          _
        // Predicated region
        $region66: #{basic_block_forward.2} parent=23 // pred_check
          %p370 = pneg %p81
        $region67: #{basic_block_forward.2} parent=23 // pred_check_branch
          %372 = sbr.rel (%p370) target = $region69
        $region68: #{basic_block_forward.2} parent=23 // pred_region
          %s373 = sand.u32 %s71, 1
          %s374 = sand.u32 %s71, 1
          %s375 = smul.addr %s374, 80
          %s376 = scalar_lea.vmem [#allocation3], %s375
          %s377 = smul.u32 %s21, 2
          %s378 = sadd.s32 %s377, 1
          %s379 = smul.addr %s378, 10
          %s380 = smul.addr %s20, 200
          %s381 = sadd.s32 %s379, %s380
          %s382 = smul.addr %s381, 4
          %s383 = scalar_lea.vmem %s1, %s382
          // Predicated region
          $region70: #{basic_block_forward.2} parent=68 // pred_check
            _
          $region71: #{basic_block_forward.2} parent=68 // pred_check_branch
            %385 = sbr.rel (0) target = $region73
          $region72: #{basic_block_forward.2} parent=68 // pred_region
            // Predicated region
            $region74: #{basic_block_forward.2} parent=72 // pred_check
              _
            $region75: #{basic_block_forward.2} parent=72 // pred_check_branch
              %387 = sbr.rel target = $region77
            $region76: #{basic_block_forward.2} parent=72 // pred_region
              // Predicated region
              $region89: #{basic_block_forward.2} parent=76 // pred_check
                _
              $region90: #{basic_block_forward.2} parent=76 // pred_check_branch
                %440 = sbr.rel (0) target = $region92
              $region91: #{basic_block_forward.2} parent=76 // pred_region
                loop: start=0, step=1, limit=1
                $region93: #{basic_block_forward.2} parent=91 // loop_pre_header
                  _
                $region94: #{basic_block_forward.2} parent=91 // loop_header
                  %s442 = sphi 0, %s446
                  %p443 = scmp.ge.s32.totalorder %s442, 1
                  %s447 = sphi %s383, %s383
                  %s448 = sphi %s376, %s376
                $region95: #{basic_block_forward.2} parent=91 // loop_header_branch
                  %445 = sbr.rel (%p443) target = $region99
                $region96: #{basic_block_forward.2} parent=91 // loop_body
                  _
                $region97: #{basic_block_forward.2} parent=91 // loop_footer
                  %s446 = sadd.s32 1, %s442
                $region98: #{basic_block_forward.2} parent=91 // loop_footer_branch
                  %441 = sbr.rel target = $region94
                $region99: #{basic_block_forward.2} parent=91 // loop_exit
                  _
                loop: start=0, step=1, limit=1
                $region100: #{basic_block_forward.2} parent=91 // loop_pre_header
                  _
                $region101: #{basic_block_forward.2} parent=91 // loop_header
                  %s451 = sphi 0, %s455
                  %p452 = scmp.ge.s32.totalorder %s451, 1
                  %s456 = sphi %s383, %s383
                  %s457 = sphi %s376, %s376
                $region102: #{basic_block_forward.2} parent=91 // loop_header_branch
                  %454 = sbr.rel (%p452) target = $region106
                $region103: #{basic_block_forward.2} parent=91 // loop_body
                  %v458 = vld [vmem:[%s456] sm:$0xf]
                  %459 = vst [vmem:[%s457] sm:$0xf] %v458
                  %v460 = vld [vmem:[%s456 + $0x4] sm:$0xf]
                  %461 = vst [vmem:[%s457 + $0x4] sm:$0xf] %v460
                  %v462 = vld [vmem:[%s456 + $0x8] sm:$0xf]
                  %463 = vst [vmem:[%s457 + $0x8] sm:$0xf] %v462
                  %v464 = vld [vmem:[%s456 + $0xc] sm:$0xf]
                  %465 = vst [vmem:[%s457 + $0xc] sm:$0xf] %v464
                  %v466 = vld [vmem:[%s456 + $0x10] sm:$0xf]
                  %467 = vst [vmem:[%s457 + $0x10] sm:$0xf] %v466
                  %v468 = vld [vmem:[%s456 + $0x14] sm:$0xf]
                  %469 = vst [vmem:[%s457 + $0x14] sm:$0xf] %v468
                  %v470 = vld [vmem:[%s456 + $0x18] sm:$0xf]
                  %471 = vst [vmem:[%s457 + $0x18] sm:$0xf] %v470
                  %v472 = vld [vmem:[%s456 + $0x1c] sm:$0xf]
                  %473 = vst [vmem:[%s457 + $0x1c] sm:$0xf] %v472
                  %v474 = vld [vmem:[%s456 + $0x20] sm:$0xf]
                  %475 = vst [vmem:[%s457 + $0x20] sm:$0xf] %v474
                  %v476 = vld [vmem:[%s456 + $0x24] sm:$0xf]
                  %477 = vst [vmem:[%s457 + $0x24] sm:$0xf] %v476
                  %v478 = vld [vmem:[%s456 + $0x190] sm:$0xf]
                  %479 = vst [vmem:[%s457 + $0x28] sm:$0xf] %v478
                  %v480 = vld [vmem:[%s456 + $0x194] sm:$0xf]
                  %481 = vst [vmem:[%s457 + $0x2c] sm:$0xf] %v480
                  %v482 = vld [vmem:[%s456 + $0x198] sm:$0xf]
                  %483 = vst [vmem:[%s457 + $0x30] sm:$0xf] %v482
                  %v484 = vld [vmem:[%s456 + $0x19c] sm:$0xf]
                  %485 = vst [vmem:[%s457 + $0x34] sm:$0xf] %v484
                  %v486 = vld [vmem:[%s456 + $0x1a0] sm:$0xf]
                  %487 = vst [vmem:[%s457 + $0x38] sm:$0xf] %v486
                  %v488 = vld [vmem:[%s456 + $0x1a4] sm:$0xf]
                  %489 = vst [vmem:[%s457 + $0x3c] sm:$0xf] %v488
                  %v490 = vld [vmem:[%s456 + $0x1a8] sm:$0xf]
                  %491 = vst [vmem:[%s457 + $0x40] sm:$0xf] %v490
                  %v492 = vld [vmem:[%s456 + $0x1ac] sm:$0xf]
                  %493 = vst [vmem:[%s457 + $0x44] sm:$0xf] %v492
                  %v494 = vld [vmem:[%s456 + $0x1b0] sm:$0xf]
                  %495 = vst [vmem:[%s457 + $0x48] sm:$0xf] %v494
                  %v496 = vld [vmem:[%s456 + $0x1b4] sm:$0xf]
                  %497 = vst [vmem:[%s457 + $0x4c] sm:$0xf] %v496
                $region104: #{basic_block_forward.2} parent=91 // loop_footer
                  %s455 = sadd.s32 1, %s451
                $region105: #{basic_block_forward.2} parent=91 // loop_footer_branch
                  %450 = sbr.rel target = $region101
                $region106: #{basic_block_forward.2} parent=91 // loop_exit
                  _
              $region92: #{basic_block_forward.2} parent=76 // pred_fallthru
                _
            $region77: #{basic_block_forward.2} parent=72 // pred_fallthru
              _
            // Predicated region
            $region78: #{basic_block_forward.2} parent=72 // pred_check
              _
            $region79: #{basic_block_forward.2} parent=72 // pred_check_branch
              %389 = sbr.rel (0) target = $region81
            $region80: #{basic_block_forward.2} parent=72 // pred_region
              loop: start=0, step=1, limit=1
              $region82: #{basic_block_forward.2} parent=80 // loop_pre_header
                _
              $region83: #{basic_block_forward.2} parent=80 // loop_header
                %s392 = sphi 0, %s396
                %p393 = scmp.ge.s32.totalorder %s392, 1
                %s397 = sphi %s383, %s383
                %s398 = sphi %s376, %s376
              $region84: #{basic_block_forward.2} parent=80 // loop_header_branch
                %395 = sbr.rel (%p393) target = $region88
              $region85: #{basic_block_forward.2} parent=80 // loop_body
                %v399 = vld [vmem:[%s397] sm:$0xf]
                %400 = vst [vmem:[%s398] sm:$0xf] %v399
                %v401 = vld [vmem:[%s397 + $0x4] sm:$0xf]
                %402 = vst [vmem:[%s398 + $0x4] sm:$0xf] %v401
                %v403 = vld [vmem:[%s397 + $0x8] sm:$0xf]
                %404 = vst [vmem:[%s398 + $0x8] sm:$0xf] %v403
                %v405 = vld [vmem:[%s397 + $0xc] sm:$0xf]
                %406 = vst [vmem:[%s398 + $0xc] sm:$0xf] %v405
                %v407 = vld [vmem:[%s397 + $0x10] sm:$0xf]
                %408 = vst [vmem:[%s398 + $0x10] sm:$0xf] %v407
                %v409 = vld [vmem:[%s397 + $0x14] sm:$0xf]
                %410 = vst [vmem:[%s398 + $0x14] sm:$0xf] %v409
                %v411 = vld [vmem:[%s397 + $0x18] sm:$0xf]
                %412 = vst [vmem:[%s398 + $0x18] sm:$0xf] %v411
                %v413 = vld [vmem:[%s397 + $0x1c] sm:$0xf]
                %414 = vst [vmem:[%s398 + $0x1c] sm:$0xf] %v413
                %v415 = vld [vmem:[%s397 + $0x20] sm:$0xf]
                %416 = vst [vmem:[%s398 + $0x20] sm:$0xf] %v415
                %v417 = vld [vmem:[%s397 + $0x24] sm:$0xf]
                %418 = vst [vmem:[%s398 + $0x24] sm:$0xf] %v417
                %v419 = vld [vmem:[%s397 + $0x190] sm:$0xf]
                %420 = vst [vmem:[%s398 + $0x28] sm:$0xf] %v419
                %v421 = vld [vmem:[%s397 + $0x194] sm:$0xf]
                %422 = vst [vmem:[%s398 + $0x2c] sm:$0xf] %v421
                %v423 = vld [vmem:[%s397 + $0x198] sm:$0xf]
                %424 = vst [vmem:[%s398 + $0x30] sm:$0xf] %v423
                %v425 = vld [vmem:[%s397 + $0x19c] sm:$0xf]
                %426 = vst [vmem:[%s398 + $0x34] sm:$0xf] %v425
                %v427 = vld [vmem:[%s397 + $0x1a0] sm:$0xf]
                %428 = vst [vmem:[%s398 + $0x38] sm:$0xf] %v427
                %v429 = vld [vmem:[%s397 + $0x1a4] sm:$0xf]
                %430 = vst [vmem:[%s398 + $0x3c] sm:$0xf] %v429
                %v431 = vld [vmem:[%s397 + $0x1a8] sm:$0xf]
                %432 = vst [vmem:[%s398 + $0x40] sm:$0xf] %v431
                %v433 = vld [vmem:[%s397 + $0x1ac] sm:$0xf]
                %434 = vst [vmem:[%s398 + $0x44] sm:$0xf] %v433
                %v435 = vld [vmem:[%s397 + $0x1b0] sm:$0xf]
                %436 = vst [vmem:[%s398 + $0x48] sm:$0xf] %v435
                %v437 = vld [vmem:[%s397 + $0x1b4] sm:$0xf]
                %438 = vst [vmem:[%s398 + $0x4c] sm:$0xf] %v437
              $region86: #{basic_block_forward.2} parent=80 // loop_footer
                %s396 = sadd.s32 1, %s392
              $region87: #{basic_block_forward.2} parent=80 // loop_footer_branch
                %391 = sbr.rel target = $region83
              $region88: #{basic_block_forward.2} parent=80 // loop_exit
                _
            $region81: #{basic_block_forward.2} parent=72 // pred_fallthru
              _
          $region73: #{basic_block_forward.2} parent=68 // pred_fallthru
            _
          %498 = vnop
        $region69: #{basic_block_forward.2} parent=23 // pred_fallthru
          _
        // Predicated region
        $region107: #{basic_block_forward.2} parent=23 // pred_check
          %p499 = pneg %p113
        $region108: #{basic_block_forward.2} parent=23 // pred_check_branch
          %501 = sbr.rel (%p499) target = $region110
        $region109: #{basic_block_forward.2} parent=23 // pred_region
          %s502 = sand.u32 %s103, 1
          %s503 = sand.u32 %s103, 1
          %s504 = smul.addr %s503, 80
          %s505 = scalar_lea.vmem [#allocation4], %s504
          %s506 = smul.u32 %s21, 2
          %s507 = sadd.s32 %s506, 2
          %s508 = smul.addr %s507, 10
          %s509 = smul.addr %s20, 200
          %s510 = sadd.s32 %s508, %s509
          %s511 = smul.addr %s510, 4
          %s512 = scalar_lea.vmem %s2, %s511
          // Predicated region
          $region111: #{basic_block_forward.2} parent=109 // pred_check
            _
          $region112: #{basic_block_forward.2} parent=109 // pred_check_branch
            %514 = sbr.rel (0) target = $region114
          $region113: #{basic_block_forward.2} parent=109 // pred_region
            // Predicated region
            $region115: #{basic_block_forward.2} parent=113 // pred_check
              _
            $region116: #{basic_block_forward.2} parent=113 // pred_check_branch
              %516 = sbr.rel target = $region118
            $region117: #{basic_block_forward.2} parent=113 // pred_region
              // Predicated region
              $region130: #{basic_block_forward.2} parent=117 // pred_check
                _
              $region131: #{basic_block_forward.2} parent=117 // pred_check_branch
                %569 = sbr.rel (0) target = $region133
              $region132: #{basic_block_forward.2} parent=117 // pred_region
                loop: start=0, step=1, limit=1
                $region134: #{basic_block_forward.2} parent=132 // loop_pre_header
                  _
                $region135: #{basic_block_forward.2} parent=132 // loop_header
                  %s571 = sphi 0, %s575
                  %p572 = scmp.ge.s32.totalorder %s571, 1
                  %s576 = sphi %s512, %s512
                  %s577 = sphi %s505, %s505
                $region136: #{basic_block_forward.2} parent=132 // loop_header_branch
                  %574 = sbr.rel (%p572) target = $region140
                $region137: #{basic_block_forward.2} parent=132 // loop_body
                  _
                $region138: #{basic_block_forward.2} parent=132 // loop_footer
                  %s575 = sadd.s32 1, %s571
                $region139: #{basic_block_forward.2} parent=132 // loop_footer_branch
                  %570 = sbr.rel target = $region135
                $region140: #{basic_block_forward.2} parent=132 // loop_exit
                  _
                loop: start=0, step=1, limit=1
                $region141: #{basic_block_forward.2} parent=132 // loop_pre_header
                  _
                $region142: #{basic_block_forward.2} parent=132 // loop_header
                  %s580 = sphi 0, %s584
                  %p581 = scmp.ge.s32.totalorder %s580, 1
                  %s585 = sphi %s512, %s512
                  %s586 = sphi %s505, %s505
                $region143: #{basic_block_forward.2} parent=132 // loop_header_branch
                  %583 = sbr.rel (%p581) target = $region147
                $region144: #{basic_block_forward.2} parent=132 // loop_body
                  %v587 = vld [vmem:[%s585] sm:$0xf]
                  %588 = vst [vmem:[%s586] sm:$0xf] %v587
                  %v589 = vld [vmem:[%s585 + $0x4] sm:$0xf]
                  %590 = vst [vmem:[%s586 + $0x4] sm:$0xf] %v589
                  %v591 = vld [vmem:[%s585 + $0x8] sm:$0xf]
                  %592 = vst [vmem:[%s586 + $0x8] sm:$0xf] %v591
                  %v593 = vld [vmem:[%s585 + $0xc] sm:$0xf]
                  %594 = vst [vmem:[%s586 + $0xc] sm:$0xf] %v593
                  %v595 = vld [vmem:[%s585 + $0x10] sm:$0xf]
                  %596 = vst [vmem:[%s586 + $0x10] sm:$0xf] %v595
                  %v597 = vld [vmem:[%s585 + $0x14] sm:$0xf]
                  %598 = vst [vmem:[%s586 + $0x14] sm:$0xf] %v597
                  %v599 = vld [vmem:[%s585 + $0x18] sm:$0xf]
                  %600 = vst [vmem:[%s586 + $0x18] sm:$0xf] %v599
                  %v601 = vld [vmem:[%s585 + $0x1c] sm:$0xf]
                  %602 = vst [vmem:[%s586 + $0x1c] sm:$0xf] %v601
                  %v603 = vld [vmem:[%s585 + $0x20] sm:$0xf]
                  %604 = vst [vmem:[%s586 + $0x20] sm:$0xf] %v603
                  %v605 = vld [vmem:[%s585 + $0x24] sm:$0xf]
                  %606 = vst [vmem:[%s586 + $0x24] sm:$0xf] %v605
                  %v607 = vld [vmem:[%s585 + $0x190] sm:$0xf]
                  %608 = vst [vmem:[%s586 + $0x28] sm:$0xf] %v607
                  %v609 = vld [vmem:[%s585 + $0x194] sm:$0xf]
                  %610 = vst [vmem:[%s586 + $0x2c] sm:$0xf] %v609
                  %v611 = vld [vmem:[%s585 + $0x198] sm:$0xf]
                  %612 = vst [vmem:[%s586 + $0x30] sm:$0xf] %v611
                  %v613 = vld [vmem:[%s585 + $0x19c] sm:$0xf]
                  %614 = vst [vmem:[%s586 + $0x34] sm:$0xf] %v613
                  %v615 = vld [vmem:[%s585 + $0x1a0] sm:$0xf]
                  %616 = vst [vmem:[%s586 + $0x38] sm:$0xf] %v615
                  %v617 = vld [vmem:[%s585 + $0x1a4] sm:$0xf]
                  %618 = vst [vmem:[%s586 + $0x3c] sm:$0xf] %v617
                  %v619 = vld [vmem:[%s585 + $0x1a8] sm:$0xf]
                  %620 = vst [vmem:[%s586 + $0x40] sm:$0xf] %v619
                  %v621 = vld [vmem:[%s585 + $0x1ac] sm:$0xf]
                  %622 = vst [vmem:[%s586 + $0x44] sm:$0xf] %v621
                  %v623 = vld [vmem:[%s585 + $0x1b0] sm:$0xf]
                  %624 = vst [vmem:[%s586 + $0x48] sm:$0xf] %v623
                  %v625 = vld [vmem:[%s585 + $0x1b4] sm:$0xf]
                  %626 = vst [vmem:[%s586 + $0x4c] sm:$0xf] %v625
                $region145: #{basic_block_forward.2} parent=132 // loop_footer
                  %s584 = sadd.s32 1, %s580
                $region146: #{basic_block_forward.2} parent=132 // loop_footer_branch
                  %579 = sbr.rel target = $region142
                $region147: #{basic_block_forward.2} parent=132 // loop_exit
                  _
              $region133: #{basic_block_forward.2} parent=117 // pred_fallthru
                _
            $region118: #{basic_block_forward.2} parent=113 // pred_fallthru
              _
            // Predicated region
            $region119: #{basic_block_forward.2} parent=113 // pred_check
              _
            $region120: #{basic_block_forward.2} parent=113 // pred_check_branch
              %518 = sbr.rel (0) target = $region122
            $region121: #{basic_block_forward.2} parent=113 // pred_region
              loop: start=0, step=1, limit=1
              $region123: #{basic_block_forward.2} parent=121 // loop_pre_header
                _
              $region124: #{basic_block_forward.2} parent=121 // loop_header
                %s521 = sphi 0, %s525
                %p522 = scmp.ge.s32.totalorder %s521, 1
                %s526 = sphi %s512, %s512
                %s527 = sphi %s505, %s505
              $region125: #{basic_block_forward.2} parent=121 // loop_header_branch
                %524 = sbr.rel (%p522) target = $region129
              $region126: #{basic_block_forward.2} parent=121 // loop_body
                %v528 = vld [vmem:[%s526] sm:$0xf]
                %529 = vst [vmem:[%s527] sm:$0xf] %v528
                %v530 = vld [vmem:[%s526 + $0x4] sm:$0xf]
                %531 = vst [vmem:[%s527 + $0x4] sm:$0xf] %v530
                %v532 = vld [vmem:[%s526 + $0x8] sm:$0xf]
                %533 = vst [vmem:[%s527 + $0x8] sm:$0xf] %v532
                %v534 = vld [vmem:[%s526 + $0xc] sm:$0xf]
                %535 = vst [vmem:[%s527 + $0xc] sm:$0xf] %v534
                %v536 = vld [vmem:[%s526 + $0x10] sm:$0xf]
                %537 = vst [vmem:[%s527 + $0x10] sm:$0xf] %v536
                %v538 = vld [vmem:[%s526 + $0x14] sm:$0xf]
                %539 = vst [vmem:[%s527 + $0x14] sm:$0xf] %v538
                %v540 = vld [vmem:[%s526 + $0x18] sm:$0xf]
                %541 = vst [vmem:[%s527 + $0x18] sm:$0xf] %v540
                %v542 = vld [vmem:[%s526 + $0x1c] sm:$0xf]
                %543 = vst [vmem:[%s527 + $0x1c] sm:$0xf] %v542
                %v544 = vld [vmem:[%s526 + $0x20] sm:$0xf]
                %545 = vst [vmem:[%s527 + $0x20] sm:$0xf] %v544
                %v546 = vld [vmem:[%s526 + $0x24] sm:$0xf]
                %547 = vst [vmem:[%s527 + $0x24] sm:$0xf] %v546
                %v548 = vld [vmem:[%s526 + $0x190] sm:$0xf]
                %549 = vst [vmem:[%s527 + $0x28] sm:$0xf] %v548
                %v550 = vld [vmem:[%s526 + $0x194] sm:$0xf]
                %551 = vst [vmem:[%s527 + $0x2c] sm:$0xf] %v550
                %v552 = vld [vmem:[%s526 + $0x198] sm:$0xf]
                %553 = vst [vmem:[%s527 + $0x30] sm:$0xf] %v552
                %v554 = vld [vmem:[%s526 + $0x19c] sm:$0xf]
                %555 = vst [vmem:[%s527 + $0x34] sm:$0xf] %v554
                %v556 = vld [vmem:[%s526 + $0x1a0] sm:$0xf]
                %557 = vst [vmem:[%s527 + $0x38] sm:$0xf] %v556
                %v558 = vld [vmem:[%s526 + $0x1a4] sm:$0xf]
                %559 = vst [vmem:[%s527 + $0x3c] sm:$0xf] %v558
                %v560 = vld [vmem:[%s526 + $0x1a8] sm:$0xf]
                %561 = vst [vmem:[%s527 + $0x40] sm:$0xf] %v560
                %v562 = vld [vmem:[%s526 + $0x1ac] sm:$0xf]
                %563 = vst [vmem:[%s527 + $0x44] sm:$0xf] %v562
                %v564 = vld [vmem:[%s526 + $0x1b0] sm:$0xf]
                %565 = vst [vmem:[%s527 + $0x48] sm:$0xf] %v564
                %v566 = vld [vmem:[%s526 + $0x1b4] sm:$0xf]
                %567 = vst [vmem:[%s527 + $0x4c] sm:$0xf] %v566
              $region127: #{basic_block_forward.2} parent=121 // loop_footer
                %s525 = sadd.s32 1, %s521
              $region128: #{basic_block_forward.2} parent=121 // loop_footer_branch
                %520 = sbr.rel target = $region124
              $region129: #{basic_block_forward.2} parent=121 // loop_exit
                _
            $region122: #{basic_block_forward.2} parent=113 // pred_fallthru
              _
          $region114: #{basic_block_forward.2} parent=109 // pred_fallthru
            _
          %627 = vnop
        $region110: #{basic_block_forward.2} parent=23 // pred_fallthru
          _
      $region24: #{basic_block_forward.2} parent=5 // pred_fallthru
        _
      %p628 = scmp.le.s32.totalorder 1, %s13
      %p629 = scmp.lt.s32.totalorder %s13, 9
      %p630 = pnand %p628, %p629
      %p631 = pneg %p630
      // Predicated region
      $region148: #{basic_block_forward.2} parent=5 // pred_check
        _
      $region149: #{basic_block_forward.2} parent=5 // pred_check_branch
        %633 = sbr.rel (%p630) target = $region151
      $region150: #{basic_block_forward.2} parent=5 // pred_region
        %s634 = ssub.s32 %s13, 1
        %s635 = sand.u32 %s42, 1
        %s636 = sand.u32 %s42, 1
        %s637 = smul.addr %s636, 80
        %s638 = scalar_lea.vmem [#allocation2], %s637
        // Predicated region
        $region152: #{basic_block_forward.2} parent=150 // pred_check
          %p639 = pneg %p55
        $region153: #{basic_block_forward.2} parent=150 // pred_check_branch
          %641 = sbr.rel (%p639) target = $region155
        $region154: #{basic_block_forward.2} parent=150 // pred_region
          _
        $region155: #{basic_block_forward.2} parent=150 // pred_fallthru
          _
        %s642 = sand.u32 %s74, 1
        %s643 = sand.u32 %s74, 1
        %s644 = smul.addr %s643, 80
        %s645 = scalar_lea.vmem [#allocation3], %s644
        // Predicated region
        $region156: #{basic_block_forward.2} parent=150 // pred_check
          %p646 = pneg %p87
        $region157: #{basic_block_forward.2} parent=150 // pred_check_branch
          %648 = sbr.rel (%p646) target = $region159
        $region158: #{basic_block_forward.2} parent=150 // pred_region
          _
        $region159: #{basic_block_forward.2} parent=150 // pred_fallthru
          _
        %s649 = sand.u32 %s106, 1
        %s650 = sand.u32 %s106, 1
        %s651 = smul.addr %s650, 80
        %s652 = scalar_lea.vmem [#allocation4], %s651
        // Predicated region
        $region160: #{basic_block_forward.2} parent=150 // pred_check
          %p653 = pneg %p119
        $region161: #{basic_block_forward.2} parent=150 // pred_check_branch
          %655 = sbr.rel (%p653) target = $region163
        $region162: #{basic_block_forward.2} parent=150 // pred_region
          _
        $region163: #{basic_block_forward.2} parent=150 // pred_fallthru
          _
        %s656 = sand.u32 %s42, 1
        %s657 = sand.u32 %s42, 1
        %s658 = smul.addr %s657, 80
        %s659 = scalar_lea.vmem [#allocation2], %s658
        %p660 = pneg %p55
        %p661 = pneg %p52
        %s662 = sand.u32 %s74, 1
        %s663 = sand.u32 %s74, 1
        %s664 = smul.addr %s663, 80
        %s665 = scalar_lea.vmem [#allocation3], %s664
        %p666 = pneg %p87
        %p667 = pneg %p84
        %s668 = sand.u32 %s106, 1
        %s669 = sand.u32 %s106, 1
        %s670 = smul.addr %s669, 80
        %s671 = scalar_lea.vmem [#allocation4], %s670
        %p672 = pneg %p119
        %p673 = pneg %p116
        %p674 = pneg %p140
        %p675 = pneg %p137
        %p676 = pneg %p161
        %p677 = pneg %p158
        %p678 = pneg %p189
        %p679 = pneg %p186
        %p680 = scmp.lt.s32.totalorder %s22, 1
        %s681 = scalar_select %p680, %s22, 1
        %p682 = scmp.lt.s32.totalorder %s23, 3
        %s683 = scalar_select %p682, %s23, 3
        %s684 = smul.addr %s683, 8
        %s685 = smul.addr %s681, 32
        %s686 = sadd.s32 %s684, %s685
        %s687 = smul.addr %s686, 4
        %s688 = scalar_lea.vmem %s5, %s687
        %p689 = pneg %p217
        %p690 = pneg %p214
        %p691 = scmp.lt.s32.totalorder %s22, 1
        %s692 = scalar_select %p691, %s22, 1
        %p693 = scmp.lt.s32.totalorder %s23, 3
        %s694 = scalar_select %p693, %s23, 3
        %s695 = smul.addr %s694, 8
        %s696 = smul.addr %s692, 32
        %s697 = sadd.s32 %s695, %s696
        %s698 = smul.addr %s697, 4
        %s699 = scalar_lea.vmem %s6, %s698
        %s700 = smul.u32 %s23, 2
        %s701 = smul.u32 %s23, 2
        %s702 = sadd.s32 %s701, 1
        %s703 = smul.u32 %s23, 2
        %s704 = sadd.s32 %s703, 2
        %p705 = scmp.lt.s32.totalorder %s22, 1
        %s706 = scalar_select %p705, %s22, 1
        %p707 = scmp.lt.s32.totalorder %s23, 3
        %s708 = scalar_select %p707, %s23, 3
        %s709 = smul.addr %s708, 8
        %s710 = smul.addr %s706, 32
        %s711 = sadd.s32 %s709, %s710
        %s712 = smul.addr %s711, 4
        %s713 = scalar_lea.vmem %s5, %s712
        %p714 = scmp.lt.s32.totalorder %s22, 1
        %s715 = scalar_select %p714, %s22, 1
        %p716 = scmp.lt.s32.totalorder %s23, 3
        %s717 = scalar_select %p716, %s23, 3
        %s718 = smul.addr %s717, 8
        %s719 = smul.addr %s715, 32
        %s720 = sadd.s32 %s718, %s719
        %s721 = smul.addr %s720, 4
        %s722 = scalar_lea.vmem %s6, %s721
        %v724 = vld [vmem:[%s638] sm:$0xf]
        %v725 = vld [vmem:[%s638 + $0x4] sm:$0xf]
        %v726 = vld [vmem:[%s638 + $0x8] sm:$0xf]
        %v727 = vld [vmem:[%s638 + $0xc] sm:$0xf]
        %v728 = vld [vmem:[%s638 + $0x10] sm:$0xf]
        %v729 = vld [vmem:[%s638 + $0x14] sm:$0xf]
        %v730 = vld [vmem:[%s638 + $0x18] sm:$0xf]
        %v731 = vld [vmem:[%s638 + $0x1c] sm:$0xf]
        %v732 = vld [vmem:[%s3] sm:$0xff]
        %v733 = vld [vmem:[%s3 + $0x8] sm:$0xff]
        %v734 = vld [vmem:[%s3 + $0x10] sm:$0xff]
        %v735 = vld [vmem:[%s3 + $0x18] sm:$0xff]
        %v736 = vld [vmem:[%s3 + $0x20] sm:$0xff]
        %v737 = vld [vmem:[%s3 + $0x28] sm:$0xff]
        %v738 = vld [vmem:[%s3 + $0x30] sm:$0xff]
        %v739 = vld [vmem:[%s3 + $0x38] sm:$0xff]
        %v740 = vld [vmem:[%s3 + $0x40] sm:$0xff]
        %v741 = vld [vmem:[%s3 + $0x48] sm:$0xff]
        %v742 = vld [vmem:[%s3 + $0x50] sm:$0xff]
        %v743 = vld [vmem:[%s3 + $0x58] sm:$0xff]
        %v744 = vld [vmem:[%s3 + $0x60] sm:$0xff]
        %v745 = vld [vmem:[%s3 + $0x68] sm:$0xff]
        %v746 = vld [vmem:[%s3 + $0x70] sm:$0xff]
        %v747 = vld [vmem:[%s3 + $0x78] sm:$0xff]
        %s748 = scalar_lea.vmem %s638, 40 [#allocation2]
        %v749 = vld [vmem:[%s748] sm:$0xf]
        %v750 = vld [vmem:[%s748 + $0x4] sm:$0xf]
        %v751 = vld [vmem:[%s748 + $0x8] sm:$0xf]
        %v752 = vld [vmem:[%s748 + $0xc] sm:$0xf]
        %v753 = vld [vmem:[%s748 + $0x10] sm:$0xf]
        %v754 = vld [vmem:[%s748 + $0x14] sm:$0xf]
        %v755 = vld [vmem:[%s748 + $0x18] sm:$0xf]
        %v756 = vld [vmem:[%s748 + $0x1c] sm:$0xf]
        %s757 = scalar_lea.vmem %s3, 128
        %v758 = vld [vmem:[%s757] sm:$0xff]
        %v759 = vld [vmem:[%s757 + $0x8] sm:$0xff]
        %v760 = vld [vmem:[%s757 + $0x10] sm:$0xff]
        %v761 = vld [vmem:[%s757 + $0x18] sm:$0xff]
        %v762 = vld [vmem:[%s757 + $0x20] sm:$0xff]
        %v763 = vld [vmem:[%s757 + $0x28] sm:$0xff]
        %v764 = vld [vmem:[%s757 + $0x30] sm:$0xff]
        %v765 = vld [vmem:[%s757 + $0x38] sm:$0xff]
        %v766 = vld [vmem:[%s757 + $0x40] sm:$0xff]
        %v767 = vld [vmem:[%s757 + $0x48] sm:$0xff]
        %v768 = vld [vmem:[%s757 + $0x50] sm:$0xff]
        %v769 = vld [vmem:[%s757 + $0x58] sm:$0xff]
        %v770 = vld [vmem:[%s757 + $0x60] sm:$0xff]
        %v771 = vld [vmem:[%s757 + $0x68] sm:$0xff]
        %v772 = vld [vmem:[%s757 + $0x70] sm:$0xff]
        %v773 = vld [vmem:[%s757 + $0x78] sm:$0xff]
        %v782 = vunpack.c.l.b16 %v749
        %v783 = vunpack.c.l.b16 %v750
        %v784 = vunpack.c.l.b16 %v751
        %v785 = vunpack.c.l.b16 %v752
        %v786 = vunpack.c.l.b16 %v753
        %v787 = vunpack.c.l.b16 %v754
        %v788 = vunpack.c.l.b16 %v755
        %v789 = vunpack.c.l.b16 %v756
        %v790 = vpack.c.b16 %v783, %v782
        %v791 = vpack.c.b16 %v785, %v784
        %v792 = vpack.c.b16 %v787, %v786
        %v793 = vpack.c.b16 %v789, %v788
        %v814 = vunpack.c.l.b16 %v758
        %v815 = vunpack.c.h.b16 %v758
        %v816 = vunpack.c.l.b16 %v759
        %v817 = vunpack.c.h.b16 %v759
        %v818 = vunpack.c.l.b16 %v760
        %v819 = vunpack.c.h.b16 %v760
        %v820 = vunpack.c.l.b16 %v761
        %v821 = vunpack.c.h.b16 %v761
        %v822 = vunpack.c.l.b16 %v762
        %v823 = vunpack.c.h.b16 %v762
        %v824 = vunpack.c.l.b16 %v763
        %v825 = vunpack.c.h.b16 %v763
        %v826 = vunpack.c.l.b16 %v764
        %v827 = vunpack.c.h.b16 %v764
        %v828 = vunpack.c.l.b16 %v765
        %v829 = vunpack.c.h.b16 %v765
        %v830 = vunpack.c.l.b16 %v766
        %v831 = vunpack.c.h.b16 %v766
        %v832 = vunpack.c.l.b16 %v767
        %v833 = vunpack.c.h.b16 %v767
        %v834 = vunpack.c.l.b16 %v768
        %v835 = vunpack.c.h.b16 %v768
        %v836 = vunpack.c.l.b16 %v769
        %v837 = vunpack.c.h.b16 %v769
        %v838 = vunpack.c.l.b16 %v770
        %v839 = vunpack.c.h.b16 %v770
        %v840 = vunpack.c.l.b16 %v771
        %v841 = vunpack.c.h.b16 %v771
        %v842 = vunpack.c.l.b16 %v772
        %v843 = vunpack.c.h.b16 %v772
        %v844 = vunpack.c.l.b16 %v773
        %v845 = vunpack.c.h.b16 %v773
        %v846 = vpack.c.b16 %v816, %v814
        %v847 = vpack.c.b16 %v817, %v815
        %v848 = vpack.c.b16 %v820, %v818
        %v849 = vpack.c.b16 %v821, %v819
        %v850 = vpack.c.b16 %v824, %v822
        %v851 = vpack.c.b16 %v825, %v823
        %v852 = vpack.c.b16 %v828, %v826
        %v853 = vpack.c.b16 %v829, %v827
        %v854 = vpack.c.b16 %v832, %v830
        %v855 = vpack.c.b16 %v833, %v831
        %v856 = vpack.c.b16 %v836, %v834
        %v857 = vpack.c.b16 %v837, %v835
        %v858 = vpack.c.b16 %v840, %v838
        %v859 = vpack.c.b16 %v841, %v839
        %v860 = vpack.c.b16 %v844, %v842
        %v861 = vpack.c.b16 %v845, %v843
        %878 = vmatprep.subr.bf16.mxu0 %v847
        %879 = vmatpush1.bf16.msra.mxu0 %v846
        %880 = vmatprep.subr.bf16.mxu0 %v849
        %881 = vmatpush1.bf16.msra.mxu0 %v848
        %882 = vmatprep.subr.bf16.mxu0 %v851
        %883 = vmatpush1.bf16.msra.mxu0 %v850
        %884 = vmatprep.subr.bf16.mxu0 %v853
        %885 = vmatpush1.bf16.msra.mxu0 %v852
        %886 = vmatprep.subr.bf16.mxu0 %v855
        %887 = vmatpush1.bf16.msra.mxu0 %v854
        %888 = vmatprep.subr.bf16.mxu0 %v857
        %889 = vmatpush1.bf16.msra.mxu0 %v856
        %890 = vmatprep.subr.bf16.mxu0 %v859
        %891 = vmatpush1.bf16.msra.mxu0 %v858
        %892 = vmatprep.subr.bf16.mxu0 %v861
        %893 = vmatpush1.bf16.msra.mxu0 %v860
        %894 = vmatprep.subr.bf16.mxu0 0
        %895 = vmatpush1.bf16.msra.mxu0 0
        %896 = vmatprep.subr.bf16.mxu0 0
        %897 = vmatpush1.bf16.msra.mxu0 0
        %898 = vmatprep.subr.bf16.mxu0 0
        %899 = vmatpush1.bf16.msra.mxu0 0
        %900 = vmatprep.subr.bf16.mxu0 0
        %901 = vmatpush1.bf16.msra.mxu0 0
        %902 = vmatprep.subr.bf16.mxu0 0
        %903 = vmatpush1.bf16.msra.mxu0 0
        %904 = vmatprep.subr.bf16.mxu0 0
        %905 = vmatpush1.bf16.msra.mxu0 0
        %906 = vmatprep.subr.bf16.mxu0 0
        %907 = vmatpush1.bf16.msra.mxu0 0
        %908 = vmatprep.subr.bf16.mxu0 0
        %909 = vmatpush1.bf16.msra.mxu0 0
        %910 = vmatprep.mubr.bf16.mxu0 0
        %911 = vmatmul.mubr.bf16.gmra.mrb[0].mxu0 %v790
        %v912 = vpop.f32.mrb[0].mxu0
        %v913 = vadd.f32 0.0, %v912
        %v914 = vpop.f32.mrb[0].mxu0
        %v915 = vadd.f32 0.0, %v914
        %v916 = vpop.f32.mrb[0].mxu0
        %v917 = vadd.f32 0.0, %v916
        %v918 = vpop.f32.mrb[0].mxu0
        %v919 = vadd.f32 0.0, %v918
        %920 = vmatprep.mubr.bf16.mxu0 0
        %921 = vmatmul.mubr.bf16.gmra.mrb[0].mxu0 %v791
        %v922 = vpop.f32.mrb[0].mxu0
        %v923 = vadd.f32 0.0, %v922
        %v924 = vpop.f32.mrb[0].mxu0
        %v925 = vadd.f32 0.0, %v924
        %v926 = vpop.f32.mrb[0].mxu0
        %v927 = vadd.f32 0.0, %v926
        %v928 = vpop.f32.mrb[0].mxu0
        %v929 = vadd.f32 0.0, %v928
        %930 = vmatprep.mubr.bf16.mxu0 0
        %931 = vmatmul.mubr.bf16.gmra.mrb[0].mxu0 %v792
        %v932 = vpop.f32.mrb[0].mxu0
        %v933 = vadd.f32 0.0, %v932
        %v934 = vpop.f32.mrb[0].mxu0
        %v935 = vadd.f32 0.0, %v934
        %v936 = vpop.f32.mrb[0].mxu0
        %v937 = vadd.f32 0.0, %v936
        %v938 = vpop.f32.mrb[0].mxu0
        %v939 = vadd.f32 0.0, %v938
        %940 = vmatprep.mubr.bf16.mxu0 0
        %941 = vmatmul.mubr.bf16.gmra.mrb[0].mxu0 %v793
        %v942 = vpop.f32.mrb[0].mxu0
        %v943 = vadd.f32 0.0, %v942
        %v944 = vpop.f32.mrb[0].mxu0
        %v945 = vadd.f32 0.0, %v944
        %v946 = vpop.f32.mrb[0].mxu0
        %v947 = vadd.f32 0.0, %v946
        %v948 = vpop.f32.mrb[0].mxu0
        %v949 = vadd.f32 0.0, %v948
        %950 = vdwg.mxu0
        %v959 = vunpack.c.l.b16 %v724
        %v960 = vunpack.c.l.b16 %v725
        %v961 = vunpack.c.l.b16 %v726
        %v962 = vunpack.c.l.b16 %v727
        %v963 = vunpack.c.l.b16 %v728
        %v964 = vunpack.c.l.b16 %v729
        %v965 = vunpack.c.l.b16 %v730
        %v966 = vunpack.c.l.b16 %v731
        %v967 = vpack.c.b16 %v960, %v959
        %v968 = vpack.c.b16 %v962, %v961
        %v969 = vpack.c.b16 %v964, %v963
        %v970 = vpack.c.b16 %v966, %v965
        %v991 = vunpack.c.l.b16 %v732
        %v992 = vunpack.c.h.b16 %v732
        %v993 = vunpack.c.l.b16 %v733
        %v994 = vunpack.c.h.b16 %v733
        %v995 = vunpack.c.l.b16 %v734
        %v996 = vunpack.c.h.b16 %v734
        %v997 = vunpack.c.l.b16 %v735
        %v998 = vunpack.c.h.b16 %v735
        %v999 = vunpack.c.l.b16 %v736
        %v1000 = vunpack.c.h.b16 %v736
        %v1001 = vunpack.c.l.b16 %v737
        %v1002 = vunpack.c.h.b16 %v737
        %v1003 = vunpack.c.l.b16 %v738
        %v1004 = vunpack.c.h.b16 %v738
        %v1005 = vunpack.c.l.b16 %v739
        %v1006 = vunpack.c.h.b16 %v739
        %v1007 = vunpack.c.l.b16 %v740
        %v1008 = vunpack.c.h.b16 %v740
        %v1009 = vunpack.c.l.b16 %v741
        %v1010 = vunpack.c.h.b16 %v741
        %v1011 = vunpack.c.l.b16 %v742
        %v1012 = vunpack.c.h.b16 %v742
        %v1013 = vunpack.c.l.b16 %v743
        %v1014 = vunpack.c.h.b16 %v743
        %v1015 = vunpack.c.l.b16 %v744
        %v1016 = vunpack.c.h.b16 %v744
        %v1017 = vunpack.c.l.b16 %v745
        %v1018 = vunpack.c.h.b16 %v745
        %v1019 = vunpack.c.l.b16 %v746
        %v1020 = vunpack.c.h.b16 %v746
        %v1021 = vunpack.c.l.b16 %v747
        %v1022 = vunpack.c.h.b16 %v747
        %v1023 = vpack.c.b16 %v993, %v991
        %v1024 = vpack.c.b16 %v994, %v992
        %v1025 = vpack.c.b16 %v997, %v995
        %v1026 = vpack.c.b16 %v998, %v996
        %v1027 = vpack.c.b16 %v1001, %v999
        %v1028 = vpack.c.b16 %v1002, %v1000
        %v1029 = vpack.c.b16 %v1005, %v1003
        %v1030 = vpack.c.b16 %v1006, %v1004
        %v1031 = vpack.c.b16 %v1009, %v1007
        %v1032 = vpack.c.b16 %v1010, %v1008
        %v1033 = vpack.c.b16 %v1013, %v1011
        %v1034 = vpack.c.b16 %v1014, %v1012
        %v1035 = vpack.c.b16 %v1017, %v1015
        %v1036 = vpack.c.b16 %v1018, %v1016
        %v1037 = vpack.c.b16 %v1021, %v1019
        %v1038 = vpack.c.b16 %v1022, %v1020
        %1055 = vmatprep.subr.bf16.mxu0 %v1024
        %1056 = vmatpush1.bf16.msra.mxu0 %v1023
        %1057 = vmatprep.subr.bf16.mxu0 %v1026
        %1058 = vmatpush1.bf16.msra.mxu0 %v1025
        %1059 = vmatprep.subr.bf16.mxu0 %v1028
        %1060 = vmatpush1.bf16.msra.mxu0 %v1027
        %1061 = vmatprep.subr.bf16.mxu0 %v1030
        %1062 = vmatpush1.bf16.msra.mxu0 %v1029
        %1063 = vmatprep.subr.bf16.mxu0 %v1032
        %1064 = vmatpush1.bf16.msra.mxu0 %v1031
        %1065 = vmatprep.subr.bf16.mxu0 %v1034
        %1066 = vmatpush1.bf16.msra.mxu0 %v1033
        %1067 = vmatprep.subr.bf16.mxu0 %v1036
        %1068 = vmatpush1.bf16.msra.mxu0 %v1035
        %1069 = vmatprep.subr.bf16.mxu0 %v1038
        %1070 = vmatpush1.bf16.msra.mxu0 %v1037
        %1071 = vmatprep.subr.bf16.mxu0 0
        %1072 = vmatpush1.bf16.msra.mxu0 0
        %1073 = vmatprep.subr.bf16.mxu0 0
        %1074 = vmatpush1.bf16.msra.mxu0 0
        %1075 = vmatprep.subr.bf16.mxu0 0
        %1076 = vmatpush1.bf16.msra.mxu0 0
        %1077 = vmatprep.subr.bf16.mxu0 0
        %1078 = vmatpush1.bf16.msra.mxu0 0
        %1079 = vmatprep.subr.bf16.mxu0 0
        %1080 = vmatpush1.bf16.msra.mxu0 0
        %1081 = vmatprep.subr.bf16.mxu0 0
        %1082 = vmatpush1.bf16.msra.mxu0 0
        %1083 = vmatprep.subr.bf16.mxu0 0
        %1084 = vmatpush1.bf16.msra.mxu0 0
        %1085 = vmatprep.subr.bf16.mxu0 0
        %1086 = vmatpush1.bf16.msra.mxu0 0
        %1087 = vmatprep.mubr.bf16.mxu0 0
        %1088 = vmatmul.mubr.bf16.gmra.mrb[0].mxu0 %v967
        %v1089 = vpop.f32.mrb[0].mxu0
        %v1090 = vadd.f32 %v913, %v1089
        %v1091 = vpop.f32.mrb[0].mxu0
        %v1092 = vadd.f32 %v915, %v1091
        %v1093 = vpop.f32.mrb[0].mxu0
        %v1094 = vadd.f32 %v917, %v1093
        %v1095 = vpop.f32.mrb[0].mxu0
        %v1096 = vadd.f32 %v919, %v1095
        %1097 = vmatprep.mubr.bf16.mxu0 0
        %1098 = vmatmul.mubr.bf16.gmra.mrb[0].mxu0 %v968
        %v1099 = vpop.f32.mrb[0].mxu0
        %v1100 = vadd.f32 %v923, %v1099
        %v1101 = vpop.f32.mrb[0].mxu0
        %v1102 = vadd.f32 %v925, %v1101
        %v1103 = vpop.f32.mrb[0].mxu0
        %v1104 = vadd.f32 %v927, %v1103
        %v1105 = vpop.f32.mrb[0].mxu0
        %v1106 = vadd.f32 %v929, %v1105
        %1107 = vmatprep.mubr.bf16.mxu0 0
        %1108 = vmatmul.mubr.bf16.gmra.mrb[0].mxu0 %v969
        %v1109 = vpop.f32.mrb[0].mxu0
        %v1110 = vadd.f32 %v933, %v1109
        %v1111 = vpop.f32.mrb[0].mxu0
        %v1112 = vadd.f32 %v935, %v1111
        %v1113 = vpop.f32.mrb[0].mxu0
        %v1114 = vadd.f32 %v937, %v1113
        %v1115 = vpop.f32.mrb[0].mxu0
        %v1116 = vadd.f32 %v939, %v1115
        %1117 = vmatprep.mubr.bf16.mxu0 0
        %1118 = vmatmul.mubr.bf16.gmra.mrb[0].mxu0 %v970
        %v1119 = vpop.f32.mrb[0].mxu0
        %v1120 = vadd.f32 %v943, %v1119
        %v1121 = vpop.f32.mrb[0].mxu0
        %v1122 = vadd.f32 %v945, %v1121
        %v1123 = vpop.f32.mrb[0].mxu0
        %v1124 = vadd.f32 %v947, %v1123
        %v1125 = vpop.f32.mrb[0].mxu0
        %v1126 = vadd.f32 %v949, %v1125
        %1127 = vdwg.mxu0
        %v1128 = vld [vmem:[%s638 + $0x8] sm:$0xf]
        %v1129 = vld [vmem:[%s638 + $0xc] sm:$0xf]
        %v1130 = vld [vmem:[%s638 + $0x10] sm:$0xf]
        %v1131 = vld [vmem:[%s638 + $0x14] sm:$0xf]
        %v1132 = vld [vmem:[%s638 + $0x18] sm:$0xf]
        %v1133 = vld [vmem:[%s638 + $0x1c] sm:$0xf]
        %v1134 = vld [vmem:[%s638 + $0x20] sm:$0xf]
        %v1135 = vld [vmem:[%s638 + $0x24] sm:$0xf]
        %s1136 = scalar_lea.vmem %s3, 256
        %v1137 = vld [vmem:[%s1136] sm:$0xff]
        %v1138 = vld [vmem:[%s1136 + $0x8] sm:$0xff]
        %v1139 = vld [vmem:[%s1136 + $0x10] sm:$0xff]
        %v1140 = vld [vmem:[%s1136 + $0x18] sm:$0xff]
        %v1141 = vld [vmem:[%s1136 + $0x20] sm:$0xff]
        %v1142 = vld [vmem:[%s1136 + $0x28] sm:$0xff]
        %v1143 = vld [vmem:[%s1136 + $0x30] sm:$0xff]
        %v1144 = vld [vmem:[%s1136 + $0x38] sm:$0xff]
        %v1145 = vld [vmem:[%s1136 + $0x40] sm:$0xff]
        %v1146 = vld [vmem:[%s1136 + $0x48] sm:$0xff]
        %v1147 = vld [vmem:[%s1136 + $0x50] sm:$0xff]
        %v1148 = vld [vmem:[%s1136 + $0x58] sm:$0xff]
        %v1149 = vld [vmem:[%s1136 + $0x60] sm:$0xff]
        %v1150 = vld [vmem:[%s1136 + $0x68] sm:$0xff]
        %v1151 = vld [vmem:[%s1136 + $0x70] sm:$0xff]
        %v1152 = vld [vmem:[%s1136 + $0x78] sm:$0xff]
        %v1161 = vunpack.c.l.b16 %v1128
        %v1162 = vunpack.c.l.b16 %v1129
        %v1163 = vunpack.c.l.b16 %v1130
        %v1164 = vunpack.c.l.b16 %v1131
        %v1165 = vunpack.c.l.b16 %v1132
        %v1166 = vunpack.c.l.b16 %v1133
        %v1167 = vunpack.c.l.b16 %v1134
        %v1168 = vunpack.c.l.b16 %v1135
        %v1169 = vpack.c.b16 %v1162, %v1161
        %v1170 = vpack.c.b16 %v1164, %v1163
        %v1171 = vpack.c.b16 %v1166, %v1165
        %v1172 = vpack.c.b16 %v1168, %v1167
        %v1193 = vunpack.c.l.b16 %v1137
        %v1194 = vunpack.c.h.b16 %v1137
        %v1195 = vunpack.c.l.b16 %v1138
        %v1196 = vunpack.c.h.b16 %v1138
        %v1197 = vunpack.c.l.b16 %v1139
        %v1198 = vunpack.c.h.b16 %v1139
        %v1199 = vunpack.c.l.b16 %v1140
        %v1200 = vunpack.c.h.b16 %v1140
        %v1201 = vunpack.c.l.b16 %v1141
        %v1202 = vunpack.c.h.b16 %v1141
        %v1203 = vunpack.c.l.b16 %v1142
        %v1204 = vunpack.c.h.b16 %v1142
        %v1205 = vunpack.c.l.b16 %v1143
        %v1206 = vunpack.c.h.b16 %v1143
        %v1207 = vunpack.c.l.b16 %v1144
        %v1208 = vunpack.c.h.b16 %v1144
        %v1209 = vunpack.c.l.b16 %v1145
        %v1210 = vunpack.c.h.b16 %v1145
        %v1211 = vunpack.c.l.b16 %v1146
        %v1212 = vunpack.c.h.b16 %v1146
        %v1213 = vunpack.c.l.b16 %v1147
        %v1214 = vunpack.c.h.b16 %v1147
        %v1215 = vunpack.c.l.b16 %v1148
        %v1216 = vunpack.c.h.b16 %v1148
        %v1217 = vunpack.c.l.b16 %v1149
        %v1218 = vunpack.c.h.b16 %v1149
        %v1219 = vunpack.c.l.b16 %v1150
        %v1220 = vunpack.c.h.b16 %v1150
        %v1221 = vunpack.c.l.b16 %v1151
        %v1222 = vunpack.c.h.b16 %v1151
        %v1223 = vunpack.c.l.b16 %v1152
        %v1224 = vunpack.c.h.b16 %v1152
        %v1225 = vpack.c.b16 %v1195, %v1193
        %v1226 = vpack.c.b16 %v1196, %v1194
        %v1227 = vpack.c.b16 %v1199, %v1197
        %v1228 = vpack.c.b16 %v1200, %v1198
        %v1229 = vpack.c.b16 %v1203, %v1201
        %v1230 = vpack.c.b16 %v1204, %v1202
        %v1231 = vpack.c.b16 %v1207, %v1205
        %v1232 = vpack.c.b16 %v1208, %v1206
        %v1233 = vpack.c.b16 %v1211, %v1209
        %v1234 = vpack.c.b16 %v1212, %v1210
        %v1235 = vpack.c.b16 %v1215, %v1213
        %v1236 = vpack.c.b16 %v1216, %v1214
        %v1237 = vpack.c.b16 %v1219, %v1217
        %v1238 = vpack.c.b16 %v1220, %v1218
        %v1239 = vpack.c.b16 %v1223, %v1221
        %v1240 = vpack.c.b16 %v1224, %v1222
        %1257 = vmatprep.subr.bf16.mxu0 %v1226
        %1258 = vmatpush1.bf16.msra.mxu0 %v1225
        %1259 = vmatprep.subr.bf16.mxu0 %v1228
        %1260 = vmatpush1.bf16.msra.mxu0 %v1227
        %1261 = vmatprep.subr.bf16.mxu0 %v1230
        %1262 = vmatpush1.bf16.msra.mxu0 %v1229
        %1263 = vmatprep.subr.bf16.mxu0 %v1232
        %1264 = vmatpush1.bf16.msra.mxu0 %v1231
        %1265 = vmatprep.subr.bf16.mxu0 %v1234
        %1266 = vmatpush1.bf16.msra.mxu0 %v1233
        %1267 = vmatprep.subr.bf16.mxu0 %v1236
        %1268 = vmatpush1.bf16.msra.mxu0 %v1235
        %1269 = vmatprep.subr.bf16.mxu0 %v1238
        %1270 = vmatpush1.bf16.msra.mxu0 %v1237
        %1271 = vmatprep.subr.bf16.mxu0 %v1240
        %1272 = vmatpush1.bf16.msra.mxu0 %v1239
        %1273 = vmatprep.subr.bf16.mxu0 0
        %1274 = vmatpush1.bf16.msra.mxu0 0
        %1275 = vmatprep.subr.bf16.mxu0 0
        %1276 = vmatpush1.bf16.msra.mxu0 0
        %1277 = vmatprep.subr.bf16.mxu0 0
        %1278 = vmatpush1.bf16.msra.mxu0 0
        %1279 = vmatprep.subr.bf16.mxu0 0
        %1280 = vmatpush1.bf16.msra.mxu0 0
        %1281 = vmatprep.subr.bf16.mxu0 0
        %1282 = vmatpush1.bf16.msra.mxu0 0
        %1283 = vmatprep.subr.bf16.mxu0 0
        %1284 = vmatpush1.bf16.msra.mxu0 0
        %1285 = vmatprep.subr.bf16.mxu0 0
        %1286 = vmatpush1.bf16.msra.mxu0 0
        %1287 = vmatprep.subr.bf16.mxu0 0
        %1288 = vmatpush1.bf16.msra.mxu0 0
        %1289 = vmatprep.mubr.bf16.mxu0 0
        %1290 = vmatmul.mubr.bf16.gmra.mrb[0].mxu0 %v1169
        %v1291 = vpop.f32.mrb[0].mxu0
        %v1292 = vadd.f32 0.0, %v1291
        %v1293 = vpop.f32.mrb[0].mxu0
        %v1294 = vadd.f32 0.0, %v1293
        %v1295 = vpop.f32.mrb[0].mxu0
        %v1296 = vadd.f32 0.0, %v1295
        %v1297 = vpop.f32.mrb[0].mxu0
        %v1298 = vadd.f32 0.0, %v1297
        %1299 = vmatprep.mubr.bf16.mxu0 0
        %1300 = vmatmul.mubr.bf16.gmra.mrb[0].mxu0 %v1170
        %v1301 = vpop.f32.mrb[0].mxu0
        %v1302 = vadd.f32 0.0, %v1301
        %v1303 = vpop.f32.mrb[0].mxu0
        %v1304 = vadd.f32 0.0, %v1303
        %v1305 = vpop.f32.mrb[0].mxu0
        %v1306 = vadd.f32 0.0, %v1305
        %v1307 = vpop.f32.mrb[0].mxu0
        %v1308 = vadd.f32 0.0, %v1307
        %1309 = vmatprep.mubr.bf16.mxu0 0
        %1310 = vmatmul.mubr.bf16.gmra.mrb[0].mxu0 %v1171
        %v1311 = vpop.f32.mrb[0].mxu0
        %v1312 = vadd.f32 0.0, %v1311
        %v1313 = vpop.f32.mrb[0].mxu0
        %v1314 = vadd.f32 0.0, %v1313
        %v1315 = vpop.f32.mrb[0].mxu0
        %v1316 = vadd.f32 0.0, %v1315
        %v1317 = vpop.f32.mrb[0].mxu0
        %v1318 = vadd.f32 0.0, %v1317
        %1319 = vmatprep.mubr.bf16.mxu0 0
        %1320 = vmatmul.mubr.bf16.gmra.mrb[0].mxu0 %v1172
        %v1321 = vpop.f32.mrb[0].mxu0
        %v1322 = vadd.f32 0.0, %v1321
        %v1323 = vpop.f32.mrb[0].mxu0
        %v1324 = vadd.f32 0.0, %v1323
        %v1325 = vpop.f32.mrb[0].mxu0
        %v1326 = vadd.f32 0.0, %v1325
        %v1327 = vpop.f32.mrb[0].mxu0
        %v1328 = vadd.f32 0.0, %v1327
        %1329 = vdwg.mxu0
        %v1330 = vadd.f32 %v1090, %v1292
        %v1331 = vadd.f32 %v1092, %v1294
        %v1332 = vadd.f32 %v1094, %v1296
        %v1333 = vadd.f32 %v1096, %v1298
        %v1334 = vadd.f32 %v1100, %v1302
        %v1335 = vadd.f32 %v1102, %v1304
        %v1336 = vadd.f32 %v1104, %v1306
        %v1337 = vadd.f32 %v1106, %v1308
        %v1338 = vadd.f32 %v1110, %v1312
        %v1339 = vadd.f32 %v1112, %v1314
        %v1340 = vadd.f32 %v1114, %v1316
        %v1341 = vadd.f32 %v1116, %v1318
        %v1342 = vadd.f32 %v1120, %v1322
        %v1343 = vadd.f32 %v1122, %v1324
        %v1344 = vadd.f32 %v1124, %v1326
        %v1345 = vadd.f32 %v1126, %v1328
        %v1346 = vld [vmem:[%s645] sm:$0xf]
        %v1347 = vld [vmem:[%s645 + $0x4] sm:$0xf]
        %v1348 = vld [vmem:[%s645 + $0x8] sm:$0xf]
        %v1349 = vld [vmem:[%s645 + $0xc] sm:$0xf]
        %v1350 = vld [vmem:[%s645 + $0x10] sm:$0xf]
        %v1351 = vld [vmem:[%s645 + $0x14] sm:$0xf]
        %v1352 = vld [vmem:[%s645 + $0x18] sm:$0xf]
        %v1353 = vld [vmem:[%s645 + $0x1c] sm:$0xf]
        %s1354 = scalar_lea.vmem %s3, 384
        %v1355 = vld [vmem:[%s1354] sm:$0xff]
        %v1356 = vld [vmem:[%s1354 + $0x8] sm:$0xff]
        %v1357 = vld [vmem:[%s1354 + $0x10] sm:$0xff]
        %v1358 = vld [vmem:[%s1354 + $0x18] sm:$0xff]
        %v1359 = vld [vmem:[%s1354 + $0x20] sm:$0xff]
        %v1360 = vld [vmem:[%s1354 + $0x28] sm:$0xff]
        %v1361 = vld [vmem:[%s1354 + $0x30] sm:$0xff]
        %v1362 = vld [vmem:[%s1354 + $0x38] sm:$0xff]
        %v1363 = vld [vmem:[%s1354 + $0x40] sm:$0xff]
        %v1364 = vld [vmem:[%s1354 + $0x48] sm:$0xff]
        %v1365 = vld [vmem:[%s1354 + $0x50] sm:$0xff]
        %v1366 = vld [vmem:[%s1354 + $0x58] sm:$0xff]
        %v1367 = vld [vmem:[%s1354 + $0x60] sm:$0xff]
        %v1368 = vld [vmem:[%s1354 + $0x68] sm:$0xff]
        %v1369 = vld [vmem:[%s1354 + $0x70] sm:$0xff]
        %v1370 = vld [vmem:[%s1354 + $0x78] sm:$0xff]
        %v1379 = vunpack.c.l.b16 %v1346
        %v1380 = vunpack.c.l.b16 %v1347
        %v1381 = vunpack.c.l.b16 %v1348
        %v1382 = vunpack.c.l.b16 %v1349
        %v1383 = vunpack.c.l.b16 %v1350
        %v1384 = vunpack.c.l.b16 %v1351
        %v1385 = vunpack.c.l.b16 %v1352
        %v1386 = vunpack.c.l.b16 %v1353
        %v1387 = vpack.c.b16 %v1380, %v1379
        %v1388 = vpack.c.b16 %v1382, %v1381
        %v1389 = vpack.c.b16 %v1384, %v1383
        %v1390 = vpack.c.b16 %v1386, %v1385
        %v1411 = vunpack.c.l.b16 %v1355
        %v1412 = vunpack.c.h.b16 %v1355
        %v1413 = vunpack.c.l.b16 %v1356
        %v1414 = vunpack.c.h.b16 %v1356
        %v1415 = vunpack.c.l.b16 %v1357
        %v1416 = vunpack.c.h.b16 %v1357
        %v1417 = vunpack.c.l.b16 %v1358
        %v1418 = vunpack.c.h.b16 %v1358
        %v1419 = vunpack.c.l.b16 %v1359
        %v1420 = vunpack.c.h.b16 %v1359
        %v1421 = vunpack.c.l.b16 %v1360
        %v1422 = vunpack.c.h.b16 %v1360
        %v1423 = vunpack.c.l.b16 %v1361
        %v1424 = vunpack.c.h.b16 %v1361
        %v1425 = vunpack.c.l.b16 %v1362
        %v1426 = vunpack.c.h.b16 %v1362
        %v1427 = vunpack.c.l.b16 %v1363
        %v1428 = vunpack.c.h.b16 %v1363
        %v1429 = vunpack.c.l.b16 %v1364
        %v1430 = vunpack.c.h.b16 %v1364
        %v1431 = vunpack.c.l.b16 %v1365
        %v1432 = vunpack.c.h.b16 %v1365
        %v1433 = vunpack.c.l.b16 %v1366
        %v1434 = vunpack.c.h.b16 %v1366
        %v1435 = vunpack.c.l.b16 %v1367
        %v1436 = vunpack.c.h.b16 %v1367
        %v1437 = vunpack.c.l.b16 %v1368
        %v1438 = vunpack.c.h.b16 %v1368
        %v1439 = vunpack.c.l.b16 %v1369
        %v1440 = vunpack.c.h.b16 %v1369
        %v1441 = vunpack.c.l.b16 %v1370
        %v1442 = vunpack.c.h.b16 %v1370
        %v1443 = vpack.c.b16 %v1413, %v1411
        %v1444 = vpack.c.b16 %v1414, %v1412
        %v1445 = vpack.c.b16 %v1417, %v1415
        %v1446 = vpack.c.b16 %v1418, %v1416
        %v1447 = vpack.c.b16 %v1421, %v1419
        %v1448 = vpack.c.b16 %v1422, %v1420
        %v1449 = vpack.c.b16 %v1425, %v1423
        %v1450 = vpack.c.b16 %v1426, %v1424
        %v1451 = vpack.c.b16 %v1429, %v1427
        %v1452 = vpack.c.b16 %v1430, %v1428
        %v1453 = vpack.c.b16 %v1433, %v1431
        %v1454 = vpack.c.b16 %v1434, %v1432
        %v1455 = vpack.c.b16 %v1437, %v1435
        %v1456 = vpack.c.b16 %v1438, %v1436
        %v1457 = vpack.c.b16 %v1441, %v1439
        %v1458 = vpack.c.b16 %v1442, %v1440
        %1475 = vmatprep.subr.bf16.mxu0 %v1444
        %1476 = vmatpush1.bf16.msra.mxu0 %v1443
        %1477 = vmatprep.subr.bf16.mxu0 %v1446
        %1478 = vmatpush1.bf16.msra.mxu0 %v1445
        %1479 = vmatprep.subr.bf16.mxu0 %v1448
        %1480 = vmatpush1.bf16.msra.mxu0 %v1447
        %1481 = vmatprep.subr.bf16.mxu0 %v1450
        %1482 = vmatpush1.bf16.msra.mxu0 %v1449
        %1483 = vmatprep.subr.bf16.mxu0 %v1452
        %1484 = vmatpush1.bf16.msra.mxu0 %v1451
        %1485 = vmatprep.subr.bf16.mxu0 %v1454
        %1486 = vmatpush1.bf16.msra.mxu0 %v1453
        %1487 = vmatprep.subr.bf16.mxu0 %v1456
        %1488 = vmatpush1.bf16.msra.mxu0 %v1455
        %1489 = vmatprep.subr.bf16.mxu0 %v1458
        %1490 = vmatpush1.bf16.msra.mxu0 %v1457
        %1491 = vmatprep.subr.bf16.mxu0 0
        %1492 = vmatpush1.bf16.msra.mxu0 0
        %1493 = vmatprep.subr.bf16.mxu0 0
        %1494 = vmatpush1.bf16.msra.mxu0 0
        %1495 = vmatprep.subr.bf16.mxu0 0
        %1496 = vmatpush1.bf16.msra.mxu0 0
        %1497 = vmatprep.subr.bf16.mxu0 0
        %1498 = vmatpush1.bf16.msra.mxu0 0
        %1499 = vmatprep.subr.bf16.mxu0 0
        %1500 = vmatpush1.bf16.msra.mxu0 0
        %1501 = vmatprep.subr.bf16.mxu0 0
        %1502 = vmatpush1.bf16.msra.mxu0 0
        %1503 = vmatprep.subr.bf16.mxu0 0
        %1504 = vmatpush1.bf16.msra.mxu0 0
        %1505 = vmatprep.subr.bf16.mxu0 0
        %1506 = vmatpush1.bf16.msra.mxu0 0
        %1507 = vmatprep.mubr.bf16.mxu0 0
        %1508 = vmatmul.mubr.bf16.gmra.mrb[0].mxu0 %v1387
        %v1509 = vpop.f32.mrb[0].mxu0
        %v1510 = vadd.f32 0.0, %v1509
        %v1511 = vpop.f32.mrb[0].mxu0
        %v1512 = vadd.f32 0.0, %v1511
        %v1513 = vpop.f32.mrb[0].mxu0
        %v1514 = vadd.f32 0.0, %v1513
        %v1515 = vpop.f32.mrb[0].mxu0
        %v1516 = vadd.f32 0.0, %v1515
        %1517 = vmatprep.mubr.bf16.mxu0 0
        %1518 = vmatmul.mubr.bf16.gmra.mrb[0].mxu0 %v1388
        %v1519 = vpop.f32.mrb[0].mxu0
        %v1520 = vadd.f32 0.0, %v1519
        %v1521 = vpop.f32.mrb[0].mxu0
        %v1522 = vadd.f32 0.0, %v1521
        %v1523 = vpop.f32.mrb[0].mxu0
        %v1524 = vadd.f32 0.0, %v1523
        %v1525 = vpop.f32.mrb[0].mxu0
        %v1526 = vadd.f32 0.0, %v1525
        %1527 = vmatprep.mubr.bf16.mxu0 0
        %1528 = vmatmul.mubr.bf16.gmra.mrb[0].mxu0 %v1389
        %v1529 = vpop.f32.mrb[0].mxu0
        %v1530 = vadd.f32 0.0, %v1529
        %v1531 = vpop.f32.mrb[0].mxu0
        %v1532 = vadd.f32 0.0, %v1531
        %v1533 = vpop.f32.mrb[0].mxu0
        %v1534 = vadd.f32 0.0, %v1533
        %v1535 = vpop.f32.mrb[0].mxu0
        %v1536 = vadd.f32 0.0, %v1535
        %1537 = vmatprep.mubr.bf16.mxu0 0
        %1538 = vmatmul.mubr.bf16.gmra.mrb[0].mxu0 %v1390
        %v1539 = vpop.f32.mrb[0].mxu0
        %v1540 = vadd.f32 0.0, %v1539
        %v1541 = vpop.f32.mrb[0].mxu0
        %v1542 = vadd.f32 0.0, %v1541
        %v1543 = vpop.f32.mrb[0].mxu0
        %v1544 = vadd.f32 0.0, %v1543
        %v1545 = vpop.f32.mrb[0].mxu0
        %v1546 = vadd.f32 0.0, %v1545
        %1547 = vdwg.mxu0
        %v1548 = vadd.f32 %v1330, %v1510
        %v1549 = vadd.f32 %v1331, %v1512
        %v1550 = vadd.f32 %v1332, %v1514
        %v1551 = vadd.f32 %v1333, %v1516
        %v1552 = vadd.f32 %v1334, %v1520
        %v1553 = vadd.f32 %v1335, %v1522
        %v1554 = vadd.f32 %v1336, %v1524
        %v1555 = vadd.f32 %v1337, %v1526
        %v1556 = vadd.f32 %v1338, %v1530
        %v1557 = vadd.f32 %v1339, %v1532
        %v1558 = vadd.f32 %v1340, %v1534
        %v1559 = vadd.f32 %v1341, %v1536
        %v1560 = vadd.f32 %v1342, %v1540
        %v1561 = vadd.f32 %v1343, %v1542
        %v1562 = vadd.f32 %v1344, %v1544
        %v1563 = vadd.f32 %v1345, %v1546
        %s1564 = scalar_lea.vmem %s645, 40 [#allocation3]
        %v1565 = vld [vmem:[%s1564] sm:$0xf]
        %v1566 = vld [vmem:[%s1564 + $0x4] sm:$0xf]
        %v1567 = vld [vmem:[%s1564 + $0x8] sm:$0xf]
        %v1568 = vld [vmem:[%s1564 + $0xc] sm:$0xf]
        %v1569 = vld [vmem:[%s1564 + $0x10] sm:$0xf]
        %v1570 = vld [vmem:[%s1564 + $0x14] sm:$0xf]
        %v1571 = vld [vmem:[%s1564 + $0x18] sm:$0xf]
        %v1572 = vld [vmem:[%s1564 + $0x1c] sm:$0xf]
        %s1573 = scalar_lea.vmem %s3, 512
        %v1574 = vld [vmem:[%s1573] sm:$0xff]
        %v1575 = vld [vmem:[%s1573 + $0x8] sm:$0xff]
        %v1576 = vld [vmem:[%s1573 + $0x10] sm:$0xff]
        %v1577 = vld [vmem:[%s1573 + $0x18] sm:$0xff]
        %v1578 = vld [vmem:[%s1573 + $0x20] sm:$0xff]
        %v1579 = vld [vmem:[%s1573 + $0x28] sm:$0xff]
        %v1580 = vld [vmem:[%s1573 + $0x30] sm:$0xff]
        %v1581 = vld [vmem:[%s1573 + $0x38] sm:$0xff]
        %v1582 = vld [vmem:[%s1573 + $0x40] sm:$0xff]
        %v1583 = vld [vmem:[%s1573 + $0x48] sm:$0xff]
        %v1584 = vld [vmem:[%s1573 + $0x50] sm:$0xff]
        %v1585 = vld [vmem:[%s1573 + $0x58] sm:$0xff]
        %v1586 = vld [vmem:[%s1573 + $0x60] sm:$0xff]
        %v1587 = vld [vmem:[%s1573 + $0x68] sm:$0xff]
        %v1588 = vld [vmem:[%s1573 + $0x70] sm:$0xff]
        %v1589 = vld [vmem:[%s1573 + $0x78] sm:$0xff]
        %v1598 = vunpack.c.l.b16 %v1565
        %v1599 = vunpack.c.l.b16 %v1566
        %v1600 = vunpack.c.l.b16 %v1567
        %v1601 = vunpack.c.l.b16 %v1568
        %v1602 = vunpack.c.l.b16 %v1569
        %v1603 = vunpack.c.l.b16 %v1570
        %v1604 = vunpack.c.l.b16 %v1571
        %v1605 = vunpack.c.l.b16 %v1572
        %v1606 = vpack.c.b16 %v1599, %v1598
        %v1607 = vpack.c.b16 %v1601, %v1600
        %v1608 = vpack.c.b16 %v1603, %v1602
        %v1609 = vpack.c.b16 %v1605, %v1604
        %v1630 = vunpack.c.l.b16 %v1574
        %v1631 = vunpack.c.h.b16 %v1574
        %v1632 = vunpack.c.l.b16 %v1575
        %v1633 = vunpack.c.h.b16 %v1575
        %v1634 = vunpack.c.l.b16 %v1576
        %v1635 = vunpack.c.h.b16 %v1576
        %v1636 = vunpack.c.l.b16 %v1577
        %v1637 = vunpack.c.h.b16 %v1577
        %v1638 = vunpack.c.l.b16 %v1578
        %v1639 = vunpack.c.h.b16 %v1578
        %v1640 = vunpack.c.l.b16 %v1579
        %v1641 = vunpack.c.h.b16 %v1579
        %v1642 = vunpack.c.l.b16 %v1580
        %v1643 = vunpack.c.h.b16 %v1580
        %v1644 = vunpack.c.l.b16 %v1581
        %v1645 = vunpack.c.h.b16 %v1581
        %v1646 = vunpack.c.l.b16 %v1582
        %v1647 = vunpack.c.h.b16 %v1582
        %v1648 = vunpack.c.l.b16 %v1583
        %v1649 = vunpack.c.h.b16 %v1583
        %v1650 = vunpack.c.l.b16 %v1584
        %v1651 = vunpack.c.h.b16 %v1584
        %v1652 = vunpack.c.l.b16 %v1585
        %v1653 = vunpack.c.h.b16 %v1585
        %v1654 = vunpack.c.l.b16 %v1586
        %v1655 = vunpack.c.h.b16 %v1586
        %v1656 = vunpack.c.l.b16 %v1587
        %v1657 = vunpack.c.h.b16 %v1587
        %v1658 = vunpack.c.l.b16 %v1588
        %v1659 = vunpack.c.h.b16 %v1588
        %v1660 = vunpack.c.l.b16 %v1589
        %v1661 = vunpack.c.h.b16 %v1589
        %v1662 = vpack.c.b16 %v1632, %v1630
        %v1663 = vpack.c.b16 %v1633, %v1631
        %v1664 = vpack.c.b16 %v1636, %v1634
        %v1665 = vpack.c.b16 %v1637, %v1635
        %v1666 = vpack.c.b16 %v1640, %v1638
        %v1667 = vpack.c.b16 %v1641, %v1639
        %v1668 = vpack.c.b16 %v1644, %v1642
        %v1669 = vpack.c.b16 %v1645, %v1643
        %v1670 = vpack.c.b16 %v1648, %v1646
        %v1671 = vpack.c.b16 %v1649, %v1647
        %v1672 = vpack.c.b16 %v1652, %v1650
        %v1673 = vpack.c.b16 %v1653, %v1651
        %v1674 = vpack.c.b16 %v1656, %v1654
        %v1675 = vpack.c.b16 %v1657, %v1655
        %v1676 = vpack.c.b16 %v1660, %v1658
        %v1677 = vpack.c.b16 %v1661, %v1659
        %1694 = vmatprep.subr.bf16.mxu0 %v1663
        %1695 = vmatpush1.bf16.msra.mxu0 %v1662
        %1696 = vmatprep.subr.bf16.mxu0 %v1665
        %1697 = vmatpush1.bf16.msra.mxu0 %v1664
        %1698 = vmatprep.subr.bf16.mxu0 %v1667
        %1699 = vmatpush1.bf16.msra.mxu0 %v1666
        %1700 = vmatprep.subr.bf16.mxu0 %v1669
        %1701 = vmatpush1.bf16.msra.mxu0 %v1668
        %1702 = vmatprep.subr.bf16.mxu0 %v1671
        %1703 = vmatpush1.bf16.msra.mxu0 %v1670
        %1704 = vmatprep.subr.bf16.mxu0 %v1673
        %1705 = vmatpush1.bf16.msra.mxu0 %v1672
        %1706 = vmatprep.subr.bf16.mxu0 %v1675
        %1707 = vmatpush1.bf16.msra.mxu0 %v1674
        %1708 = vmatprep.subr.bf16.mxu0 %v1677
        %1709 = vmatpush1.bf16.msra.mxu0 %v1676
        %1710 = vmatprep.subr.bf16.mxu0 0
        %1711 = vmatpush1.bf16.msra.mxu0 0
        %1712 = vmatprep.subr.bf16.mxu0 0
        %1713 = vmatpush1.bf16.msra.mxu0 0
        %1714 = vmatprep.subr.bf16.mxu0 0
        %1715 = vmatpush1.bf16.msra.mxu0 0
        %1716 = vmatprep.subr.bf16.mxu0 0
        %1717 = vmatpush1.bf16.msra.mxu0 0
        %1718 = vmatprep.subr.bf16.mxu0 0
        %1719 = vmatpush1.bf16.msra.mxu0 0
        %1720 = vmatprep.subr.bf16.mxu0 0
        %1721 = vmatpush1.bf16.msra.mxu0 0
        %1722 = vmatprep.subr.bf16.mxu0 0
        %1723 = vmatpush1.bf16.msra.mxu0 0
        %1724 = vmatprep.subr.bf16.mxu0 0
        %1725 = vmatpush1.bf16.msra.mxu0 0
        %1726 = vmatprep.mubr.bf16.mxu0 0
        %1727 = vmatmul.mubr.bf16.gmra.mrb[0].mxu0 %v1606
        %v1728 = vpop.f32.mrb[0].mxu0
        %v1729 = vadd.f32 0.0, %v1728
        %v1730 = vpop.f32.mrb[0].mxu0
        %v1731 = vadd.f32 0.0, %v1730
        %v1732 = vpop.f32.mrb[0].mxu0
        %v1733 = vadd.f32 0.0, %v1732
        %v1734 = vpop.f32.mrb[0].mxu0
        %v1735 = vadd.f32 0.0, %v1734
        %1736 = vmatprep.mubr.bf16.mxu0 0
        %1737 = vmatmul.mubr.bf16.gmra.mrb[0].mxu0 %v1607
        %v1738 = vpop.f32.mrb[0].mxu0
        %v1739 = vadd.f32 0.0, %v1738
        %v1740 = vpop.f32.mrb[0].mxu0
        %v1741 = vadd.f32 0.0, %v1740
        %v1742 = vpop.f32.mrb[0].mxu0
        %v1743 = vadd.f32 0.0, %v1742
        %v1744 = vpop.f32.mrb[0].mxu0
        %v1745 = vadd.f32 0.0, %v1744
        %1746 = vmatprep.mubr.bf16.mxu0 0
        %1747 = vmatmul.mubr.bf16.gmra.mrb[0].mxu0 %v1608
        %v1748 = vpop.f32.mrb[0].mxu0
        %v1749 = vadd.f32 0.0, %v1748
        %v1750 = vpop.f32.mrb[0].mxu0
        %v1751 = vadd.f32 0.0, %v1750
        %v1752 = vpop.f32.mrb[0].mxu0
        %v1753 = vadd.f32 0.0, %v1752
        %v1754 = vpop.f32.mrb[0].mxu0
        %v1755 = vadd.f32 0.0, %v1754
        %1756 = vmatprep.mubr.bf16.mxu0 0
        %1757 = vmatmul.mubr.bf16.gmra.mrb[0].mxu0 %v1609
        %v1758 = vpop.f32.mrb[0].mxu0
        %v1759 = vadd.f32 0.0, %v1758
        %v1760 = vpop.f32.mrb[0].mxu0
        %v1761 = vadd.f32 0.0, %v1760
        %v1762 = vpop.f32.mrb[0].mxu0
        %v1763 = vadd.f32 0.0, %v1762
        %v1764 = vpop.f32.mrb[0].mxu0
        %v1765 = vadd.f32 0.0, %v1764
        %1766 = vdwg.mxu0
        %v1767 = vadd.f32 %v1548, %v1729
        %v1768 = vadd.f32 %v1549, %v1731
        %v1769 = vadd.f32 %v1550, %v1733
        %v1770 = vadd.f32 %v1551, %v1735
        %v1771 = vadd.f32 %v1552, %v1739
        %v1772 = vadd.f32 %v1553, %v1741
        %v1773 = vadd.f32 %v1554, %v1743
        %v1774 = vadd.f32 %v1555, %v1745
        %v1775 = vadd.f32 %v1556, %v1749
        %v1776 = vadd.f32 %v1557, %v1751
        %v1777 = vadd.f32 %v1558, %v1753
        %v1778 = vadd.f32 %v1559, %v1755
        %v1779 = vadd.f32 %v1560, %v1759
        %v1780 = vadd.f32 %v1561, %v1761
        %v1781 = vadd.f32 %v1562, %v1763
        %v1782 = vadd.f32 %v1563, %v1765
        %v1783 = vld [vmem:[%s645 + $0x8] sm:$0xf]
        %v1784 = vld [vmem:[%s645 + $0xc] sm:$0xf]
        %v1785 = vld [vmem:[%s645 + $0x10] sm:$0xf]
        %v1786 = vld [vmem:[%s645 + $0x14] sm:$0xf]
        %v1787 = vld [vmem:[%s645 + $0x18] sm:$0xf]
        %v1788 = vld [vmem:[%s645 + $0x1c] sm:$0xf]
        %v1789 = vld [vmem:[%s645 + $0x20] sm:$0xf]
        %v1790 = vld [vmem:[%s645 + $0x24] sm:$0xf]
        %s1791 = scalar_lea.vmem %s3, 640
        %v1792 = vld [vmem:[%s1791] sm:$0xff]
        %v1793 = vld [vmem:[%s1791 + $0x8] sm:$0xff]
        %v1794 = vld [vmem:[%s1791 + $0x10] sm:$0xff]
        %v1795 = vld [vmem:[%s1791 + $0x18] sm:$0xff]
        %v1796 = vld [vmem:[%s1791 + $0x20] sm:$0xff]
        %v1797 = vld [vmem:[%s1791 + $0x28] sm:$0xff]
        %v1798 = vld [vmem:[%s1791 + $0x30] sm:$0xff]
        %v1799 = vld [vmem:[%s1791 + $0x38] sm:$0xff]
        %v1800 = vld [vmem:[%s1791 + $0x40] sm:$0xff]
        %v1801 = vld [vmem:[%s1791 + $0x48] sm:$0xff]
        %v1802 = vld [vmem:[%s1791 + $0x50] sm:$0xff]
        %v1803 = vld [vmem:[%s1791 + $0x58] sm:$0xff]
        %v1804 = vld [vmem:[%s1791 + $0x60] sm:$0xff]
        %v1805 = vld [vmem:[%s1791 + $0x68] sm:$0xff]
        %v1806 = vld [vmem:[%s1791 + $0x70] sm:$0xff]
        %v1807 = vld [vmem:[%s1791 + $0x78] sm:$0xff]
        %v1816 = vunpack.c.l.b16 %v1783
        %v1817 = vunpack.c.l.b16 %v1784
        %v1818 = vunpack.c.l.b16 %v1785
        %v1819 = vunpack.c.l.b16 %v1786
        %v1820 = vunpack.c.l.b16 %v1787
        %v1821 = vunpack.c.l.b16 %v1788
        %v1822 = vunpack.c.l.b16 %v1789
        %v1823 = vunpack.c.l.b16 %v1790
        %v1824 = vpack.c.b16 %v1817, %v1816
        %v1825 = vpack.c.b16 %v1819, %v1818
        %v1826 = vpack.c.b16 %v1821, %v1820
        %v1827 = vpack.c.b16 %v1823, %v1822
        %v1848 = vunpack.c.l.b16 %v1792
        %v1849 = vunpack.c.h.b16 %v1792
        %v1850 = vunpack.c.l.b16 %v1793
        %v1851 = vunpack.c.h.b16 %v1793
        %v1852 = vunpack.c.l.b16 %v1794
        %v1853 = vunpack.c.h.b16 %v1794
        %v1854 = vunpack.c.l.b16 %v1795
        %v1855 = vunpack.c.h.b16 %v1795
        %v1856 = vunpack.c.l.b16 %v1796
        %v1857 = vunpack.c.h.b16 %v1796
        %v1858 = vunpack.c.l.b16 %v1797
        %v1859 = vunpack.c.h.b16 %v1797
        %v1860 = vunpack.c.l.b16 %v1798
        %v1861 = vunpack.c.h.b16 %v1798
        %v1862 = vunpack.c.l.b16 %v1799
        %v1863 = vunpack.c.h.b16 %v1799
        %v1864 = vunpack.c.l.b16 %v1800
        %v1865 = vunpack.c.h.b16 %v1800
        %v1866 = vunpack.c.l.b16 %v1801
        %v1867 = vunpack.c.h.b16 %v1801
        %v1868 = vunpack.c.l.b16 %v1802
        %v1869 = vunpack.c.h.b16 %v1802
        %v1870 = vunpack.c.l.b16 %v1803
        %v1871 = vunpack.c.h.b16 %v1803
        %v1872 = vunpack.c.l.b16 %v1804
        %v1873 = vunpack.c.h.b16 %v1804
        %v1874 = vunpack.c.l.b16 %v1805
        %v1875 = vunpack.c.h.b16 %v1805
        %v1876 = vunpack.c.l.b16 %v1806
        %v1877 = vunpack.c.h.b16 %v1806
        %v1878 = vunpack.c.l.b16 %v1807
        %v1879 = vunpack.c.h.b16 %v1807
        %v1880 = vpack.c.b16 %v1850, %v1848
        %v1881 = vpack.c.b16 %v1851, %v1849
        %v1882 = vpack.c.b16 %v1854, %v1852
        %v1883 = vpack.c.b16 %v1855, %v1853
        %v1884 = vpack.c.b16 %v1858, %v1856
        %v1885 = vpack.c.b16 %v1859, %v1857
        %v1886 = vpack.c.b16 %v1862, %v1860
        %v1887 = vpack.c.b16 %v1863, %v1861
        %v1888 = vpack.c.b16 %v1866, %v1864
        %v1889 = vpack.c.b16 %v1867, %v1865
        %v1890 = vpack.c.b16 %v1870, %v1868
        %v1891 = vpack.c.b16 %v1871, %v1869
        %v1892 = vpack.c.b16 %v1874, %v1872
        %v1893 = vpack.c.b16 %v1875, %v1873
        %v1894 = vpack.c.b16 %v1878, %v1876
        %v1895 = vpack.c.b16 %v1879, %v1877
        %1912 = vmatprep.subr.bf16.mxu0 %v1881
        %1913 = vmatpush1.bf16.msra.mxu0 %v1880
        %1914 = vmatprep.subr.bf16.mxu0 %v1883
        %1915 = vmatpush1.bf16.msra.mxu0 %v1882
        %1916 = vmatprep.subr.bf16.mxu0 %v1885
        %1917 = vmatpush1.bf16.msra.mxu0 %v1884
        %1918 = vmatprep.subr.bf16.mxu0 %v1887
        %1919 = vmatpush1.bf16.msra.mxu0 %v1886
        %1920 = vmatprep.subr.bf16.mxu0 %v1889
        %1921 = vmatpush1.bf16.msra.mxu0 %v1888
        %1922 = vmatprep.subr.bf16.mxu0 %v1891
        %1923 = vmatpush1.bf16.msra.mxu0 %v1890
        %1924 = vmatprep.subr.bf16.mxu0 %v1893
        %1925 = vmatpush1.bf16.msra.mxu0 %v1892
        %1926 = vmatprep.subr.bf16.mxu0 %v1895
        %1927 = vmatpush1.bf16.msra.mxu0 %v1894
        %1928 = vmatprep.subr.bf16.mxu0 0
        %1929 = vmatpush1.bf16.msra.mxu0 0
        %1930 = vmatprep.subr.bf16.mxu0 0
        %1931 = vmatpush1.bf16.msra.mxu0 0
        %1932 = vmatprep.subr.bf16.mxu0 0
        %1933 = vmatpush1.bf16.msra.mxu0 0
        %1934 = vmatprep.subr.bf16.mxu0 0
        %1935 = vmatpush1.bf16.msra.mxu0 0
        %1936 = vmatprep.subr.bf16.mxu0 0
        %1937 = vmatpush1.bf16.msra.mxu0 0
        %1938 = vmatprep.subr.bf16.mxu0 0
        %1939 = vmatpush1.bf16.msra.mxu0 0
        %1940 = vmatprep.subr.bf16.mxu0 0
        %1941 = vmatpush1.bf16.msra.mxu0 0
        %1942 = vmatprep.subr.bf16.mxu0 0
        %1943 = vmatpush1.bf16.msra.mxu0 0
        %1944 = vmatprep.mubr.bf16.mxu0 0
        %1945 = vmatmul.mubr.bf16.gmra.mrb[0].mxu0 %v1824
        %v1946 = vpop.f32.mrb[0].mxu0
        %v1947 = vadd.f32 0.0, %v1946
        %v1948 = vpop.f32.mrb[0].mxu0
        %v1949 = vadd.f32 0.0, %v1948
        %v1950 = vpop.f32.mrb[0].mxu0
        %v1951 = vadd.f32 0.0, %v1950
        %v1952 = vpop.f32.mrb[0].mxu0
        %v1953 = vadd.f32 0.0, %v1952
        %1954 = vmatprep.mubr.bf16.mxu0 0
        %1955 = vmatmul.mubr.bf16.gmra.mrb[0].mxu0 %v1825
        %v1956 = vpop.f32.mrb[0].mxu0
        %v1957 = vadd.f32 0.0, %v1956
        %v1958 = vpop.f32.mrb[0].mxu0
        %v1959 = vadd.f32 0.0, %v1958
        %v1960 = vpop.f32.mrb[0].mxu0
        %v1961 = vadd.f32 0.0, %v1960
        %v1962 = vpop.f32.mrb[0].mxu0
        %v1963 = vadd.f32 0.0, %v1962
        %1964 = vmatprep.mubr.bf16.mxu0 0
        %1965 = vmatmul.mubr.bf16.gmra.mrb[0].mxu0 %v1826
        %v1966 = vpop.f32.mrb[0].mxu0
        %v1967 = vadd.f32 0.0, %v1966
        %v1968 = vpop.f32.mrb[0].mxu0
        %v1969 = vadd.f32 0.0, %v1968
        %v1970 = vpop.f32.mrb[0].mxu0
        %v1971 = vadd.f32 0.0, %v1970
        %v1972 = vpop.f32.mrb[0].mxu0
        %v1973 = vadd.f32 0.0, %v1972
        %1974 = vmatprep.mubr.bf16.mxu0 0
        %1975 = vmatmul.mubr.bf16.gmra.mrb[0].mxu0 %v1827
        %v1976 = vpop.f32.mrb[0].mxu0
        %v1977 = vadd.f32 0.0, %v1976
        %v1978 = vpop.f32.mrb[0].mxu0
        %v1979 = vadd.f32 0.0, %v1978
        %v1980 = vpop.f32.mrb[0].mxu0
        %v1981 = vadd.f32 0.0, %v1980
        %v1982 = vpop.f32.mrb[0].mxu0
        %v1983 = vadd.f32 0.0, %v1982
        %1984 = vdwg.mxu0
        %v1985 = vadd.f32 %v1767, %v1947
        %v1986 = vadd.f32 %v1768, %v1949
        %v1987 = vadd.f32 %v1769, %v1951
        %v1988 = vadd.f32 %v1770, %v1953
        %v1989 = vadd.f32 %v1771, %v1957
        %v1990 = vadd.f32 %v1772, %v1959
        %v1991 = vadd.f32 %v1773, %v1961
        %v1992 = vadd.f32 %v1774, %v1963
        %v1993 = vadd.f32 %v1775, %v1967
        %v1994 = vadd.f32 %v1776, %v1969
        %v1995 = vadd.f32 %v1777, %v1971
        %v1996 = vadd.f32 %v1778, %v1973
        %v1997 = vadd.f32 %v1779, %v1977
        %v1998 = vadd.f32 %v1780, %v1979
        %v1999 = vadd.f32 %v1781, %v1981
        %v2000 = vadd.f32 %v1782, %v1983
        %v2001 = vld [vmem:[%s652] sm:$0xf]
        %v2002 = vld [vmem:[%s652 + $0x4] sm:$0xf]
        %v2003 = vld [vmem:[%s652 + $0x8] sm:$0xf]
        %v2004 = vld [vmem:[%s652 + $0xc] sm:$0xf]
        %v2005 = vld [vmem:[%s652 + $0x10] sm:$0xf]
        %v2006 = vld [vmem:[%s652 + $0x14] sm:$0xf]
        %v2007 = vld [vmem:[%s652 + $0x18] sm:$0xf]
        %v2008 = vld [vmem:[%s652 + $0x1c] sm:$0xf]
        %s2009 = scalar_lea.vmem %s3, 768
        %v2010 = vld [vmem:[%s2009] sm:$0xff]
        %v2011 = vld [vmem:[%s2009 + $0x8] sm:$0xff]
        %v2012 = vld [vmem:[%s2009 + $0x10] sm:$0xff]
        %v2013 = vld [vmem:[%s2009 + $0x18] sm:$0xff]
        %v2014 = vld [vmem:[%s2009 + $0x20] sm:$0xff]
        %v2015 = vld [vmem:[%s2009 + $0x28] sm:$0xff]
        %v2016 = vld [vmem:[%s2009 + $0x30] sm:$0xff]
        %v2017 = vld [vmem:[%s2009 + $0x38] sm:$0xff]
        %v2018 = vld [vmem:[%s2009 + $0x40] sm:$0xff]
        %v2019 = vld [vmem:[%s2009 + $0x48] sm:$0xff]
        %v2020 = vld [vmem:[%s2009 + $0x50] sm:$0xff]
        %v2021 = vld [vmem:[%s2009 + $0x58] sm:$0xff]
        %v2022 = vld [vmem:[%s2009 + $0x60] sm:$0xff]
        %v2023 = vld [vmem:[%s2009 + $0x68] sm:$0xff]
        %v2024 = vld [vmem:[%s2009 + $0x70] sm:$0xff]
        %v2025 = vld [vmem:[%s2009 + $0x78] sm:$0xff]
        %v2034 = vunpack.c.l.b16 %v2001
        %v2035 = vunpack.c.l.b16 %v2002
        %v2036 = vunpack.c.l.b16 %v2003
        %v2037 = vunpack.c.l.b16 %v2004
        %v2038 = vunpack.c.l.b16 %v2005
        %v2039 = vunpack.c.l.b16 %v2006
        %v2040 = vunpack.c.l.b16 %v2007
        %v2041 = vunpack.c.l.b16 %v2008
        %v2042 = vpack.c.b16 %v2035, %v2034
        %v2043 = vpack.c.b16 %v2037, %v2036
        %v2044 = vpack.c.b16 %v2039, %v2038
        %v2045 = vpack.c.b16 %v2041, %v2040
        %v2066 = vunpack.c.l.b16 %v2010
        %v2067 = vunpack.c.h.b16 %v2010
        %v2068 = vunpack.c.l.b16 %v2011
        %v2069 = vunpack.c.h.b16 %v2011
        %v2070 = vunpack.c.l.b16 %v2012
        %v2071 = vunpack.c.h.b16 %v2012
        %v2072 = vunpack.c.l.b16 %v2013
        %v2073 = vunpack.c.h.b16 %v2013
        %v2074 = vunpack.c.l.b16 %v2014
        %v2075 = vunpack.c.h.b16 %v2014
        %v2076 = vunpack.c.l.b16 %v2015
        %v2077 = vunpack.c.h.b16 %v2015
        %v2078 = vunpack.c.l.b16 %v2016
        %v2079 = vunpack.c.h.b16 %v2016
        %v2080 = vunpack.c.l.b16 %v2017
        %v2081 = vunpack.c.h.b16 %v2017
        %v2082 = vunpack.c.l.b16 %v2018
        %v2083 = vunpack.c.h.b16 %v2018
        %v2084 = vunpack.c.l.b16 %v2019
        %v2085 = vunpack.c.h.b16 %v2019
        %v2086 = vunpack.c.l.b16 %v2020
        %v2087 = vunpack.c.h.b16 %v2020
        %v2088 = vunpack.c.l.b16 %v2021
        %v2089 = vunpack.c.h.b16 %v2021
        %v2090 = vunpack.c.l.b16 %v2022
        %v2091 = vunpack.c.h.b16 %v2022
        %v2092 = vunpack.c.l.b16 %v2023
        %v2093 = vunpack.c.h.b16 %v2023
        %v2094 = vunpack.c.l.b16 %v2024
        %v2095 = vunpack.c.h.b16 %v2024
        %v2096 = vunpack.c.l.b16 %v2025
        %v2097 = vunpack.c.h.b16 %v2025
        %v2098 = vpack.c.b16 %v2068, %v2066
        %v2099 = vpack.c.b16 %v2069, %v2067
        %v2100 = vpack.c.b16 %v2072, %v2070
        %v2101 = vpack.c.b16 %v2073, %v2071
        %v2102 = vpack.c.b16 %v2076, %v2074
        %v2103 = vpack.c.b16 %v2077, %v2075
        %v2104 = vpack.c.b16 %v2080, %v2078
        %v2105 = vpack.c.b16 %v2081, %v2079
        %v2106 = vpack.c.b16 %v2084, %v2082
        %v2107 = vpack.c.b16 %v2085, %v2083
        %v2108 = vpack.c.b16 %v2088, %v2086
        %v2109 = vpack.c.b16 %v2089, %v2087
        %v2110 = vpack.c.b16 %v2092, %v2090
        %v2111 = vpack.c.b16 %v2093, %v2091
        %v2112 = vpack.c.b16 %v2096, %v2094
        %v2113 = vpack.c.b16 %v2097, %v2095
        %2130 = vmatprep.subr.bf16.mxu0 %v2099
        %2131 = vmatpush1.bf16.msra.mxu0 %v2098
        %2132 = vmatprep.subr.bf16.mxu0 %v2101
        %2133 = vmatpush1.bf16.msra.mxu0 %v2100
        %2134 = vmatprep.subr.bf16.mxu0 %v2103
        %2135 = vmatpush1.bf16.msra.mxu0 %v2102
        %2136 = vmatprep.subr.bf16.mxu0 %v2105
        %2137 = vmatpush1.bf16.msra.mxu0 %v2104
        %2138 = vmatprep.subr.bf16.mxu0 %v2107
        %2139 = vmatpush1.bf16.msra.mxu0 %v2106
        %2140 = vmatprep.subr.bf16.mxu0 %v2109
        %2141 = vmatpush1.bf16.msra.mxu0 %v2108
        %2142 = vmatprep.subr.bf16.mxu0 %v2111
        %2143 = vmatpush1.bf16.msra.mxu0 %v2110
        %2144 = vmatprep.subr.bf16.mxu0 %v2113
        %2145 = vmatpush1.bf16.msra.mxu0 %v2112
        %2146 = vmatprep.subr.bf16.mxu0 0
        %2147 = vmatpush1.bf16.msra.mxu0 0
        %2148 = vmatprep.subr.bf16.mxu0 0
        %2149 = vmatpush1.bf16.msra.mxu0 0
        %2150 = vmatprep.subr.bf16.mxu0 0
        %2151 = vmatpush1.bf16.msra.mxu0 0
        %2152 = vmatprep.subr.bf16.mxu0 0
        %2153 = vmatpush1.bf16.msra.mxu0 0
        %2154 = vmatprep.subr.bf16.mxu0 0
        %2155 = vmatpush1.bf16.msra.mxu0 0
        %2156 = vmatprep.subr.bf16.mxu0 0
        %2157 = vmatpush1.bf16.msra.mxu0 0
        %2158 = vmatprep.subr.bf16.mxu0 0
        %2159 = vmatpush1.bf16.msra.mxu0 0
        %2160 = vmatprep.subr.bf16.mxu0 0
        %2161 = vmatpush1.bf16.msra.mxu0 0
        %2162 = vmatprep.mubr.bf16.mxu0 0
        %2163 = vmatmul.mubr.bf16.gmra.mrb[0].mxu0 %v2042
        %v2164 = vpop.f32.mrb[0].mxu0
        %v2165 = vadd.f32 0.0, %v2164
        %v2166 = vpop.f32.mrb[0].mxu0
        %v2167 = vadd.f32 0.0, %v2166
        %v2168 = vpop.f32.mrb[0].mxu0
        %v2169 = vadd.f32 0.0, %v2168
        %v2170 = vpop.f32.mrb[0].mxu0
        %v2171 = vadd.f32 0.0, %v2170
        %2172 = vmatprep.mubr.bf16.mxu0 0
        %2173 = vmatmul.mubr.bf16.gmra.mrb[0].mxu0 %v2043
        %v2174 = vpop.f32.mrb[0].mxu0
        %v2175 = vadd.f32 0.0, %v2174
        %v2176 = vpop.f32.mrb[0].mxu0
        %v2177 = vadd.f32 0.0, %v2176
        %v2178 = vpop.f32.mrb[0].mxu0
        %v2179 = vadd.f32 0.0, %v2178
        %v2180 = vpop.f32.mrb[0].mxu0
        %v2181 = vadd.f32 0.0, %v2180
        %2182 = vmatprep.mubr.bf16.mxu0 0
        %2183 = vmatmul.mubr.bf16.gmra.mrb[0].mxu0 %v2044
        %v2184 = vpop.f32.mrb[0].mxu0
        %v2185 = vadd.f32 0.0, %v2184
        %v2186 = vpop.f32.mrb[0].mxu0
        %v2187 = vadd.f32 0.0, %v2186
        %v2188 = vpop.f32.mrb[0].mxu0
        %v2189 = vadd.f32 0.0, %v2188
        %v2190 = vpop.f32.mrb[0].mxu0
        %v2191 = vadd.f32 0.0, %v2190
        %2192 = vmatprep.mubr.bf16.mxu0 0
        %2193 = vmatmul.mubr.bf16.gmra.mrb[0].mxu0 %v2045
        %v2194 = vpop.f32.mrb[0].mxu0
        %v2195 = vadd.f32 0.0, %v2194
        %v2196 = vpop.f32.mrb[0].mxu0
        %v2197 = vadd.f32 0.0, %v2196
        %v2198 = vpop.f32.mrb[0].mxu0
        %v2199 = vadd.f32 0.0, %v2198
        %v2200 = vpop.f32.mrb[0].mxu0
        %v2201 = vadd.f32 0.0, %v2200
        %2202 = vdwg.mxu0
        %v2203 = vadd.f32 %v1985, %v2165
        %v2204 = vadd.f32 %v1986, %v2167
        %v2205 = vadd.f32 %v1987, %v2169
        %v2206 = vadd.f32 %v1988, %v2171
        %v2207 = vadd.f32 %v1989, %v2175
        %v2208 = vadd.f32 %v1990, %v2177
        %v2209 = vadd.f32 %v1991, %v2179
        %v2210 = vadd.f32 %v1992, %v2181
        %v2211 = vadd.f32 %v1993, %v2185
        %v2212 = vadd.f32 %v1994, %v2187
        %v2213 = vadd.f32 %v1995, %v2189
        %v2214 = vadd.f32 %v1996, %v2191
        %v2215 = vadd.f32 %v1997, %v2195
        %v2216 = vadd.f32 %v1998, %v2197
        %v2217 = vadd.f32 %v1999, %v2199
        %v2218 = vadd.f32 %v2000, %v2201
        %s2219 = scalar_lea.vmem %s652, 40 [#allocation4]
        %v2220 = vld [vmem:[%s2219] sm:$0xf]
        %v2221 = vld [vmem:[%s2219 + $0x4] sm:$0xf]
        %v2222 = vld [vmem:[%s2219 + $0x8] sm:$0xf]
        %v2223 = vld [vmem:[%s2219 + $0xc] sm:$0xf]
        %v2224 = vld [vmem:[%s2219 + $0x10] sm:$0xf]
        %v2225 = vld [vmem:[%s2219 + $0x14] sm:$0xf]
        %v2226 = vld [vmem:[%s2219 + $0x18] sm:$0xf]
        %v2227 = vld [vmem:[%s2219 + $0x1c] sm:$0xf]
        %s2228 = scalar_lea.vmem %s3, 896
        %v2229 = vld [vmem:[%s2228] sm:$0xff]
        %v2230 = vld [vmem:[%s2228 + $0x8] sm:$0xff]
        %v2231 = vld [vmem:[%s2228 + $0x10] sm:$0xff]
        %v2232 = vld [vmem:[%s2228 + $0x18] sm:$0xff]
        %v2233 = vld [vmem:[%s2228 + $0x20] sm:$0xff]
        %v2234 = vld [vmem:[%s2228 + $0x28] sm:$0xff]
        %v2235 = vld [vmem:[%s2228 + $0x30] sm:$0xff]
        %v2236 = vld [vmem:[%s2228 + $0x38] sm:$0xff]
        %v2237 = vld [vmem:[%s2228 + $0x40] sm:$0xff]
        %v2238 = vld [vmem:[%s2228 + $0x48] sm:$0xff]
        %v2239 = vld [vmem:[%s2228 + $0x50] sm:$0xff]
        %v2240 = vld [vmem:[%s2228 + $0x58] sm:$0xff]
        %v2241 = vld [vmem:[%s2228 + $0x60] sm:$0xff]
        %v2242 = vld [vmem:[%s2228 + $0x68] sm:$0xff]
        %v2243 = vld [vmem:[%s2228 + $0x70] sm:$0xff]
        %v2244 = vld [vmem:[%s2228 + $0x78] sm:$0xff]
        %v2253 = vunpack.c.l.b16 %v2220
        %v2254 = vunpack.c.l.b16 %v2221
        %v2255 = vunpack.c.l.b16 %v2222
        %v2256 = vunpack.c.l.b16 %v2223
        %v2257 = vunpack.c.l.b16 %v2224
        %v2258 = vunpack.c.l.b16 %v2225
        %v2259 = vunpack.c.l.b16 %v2226
        %v2260 = vunpack.c.l.b16 %v2227
        %v2261 = vpack.c.b16 %v2254, %v2253
        %v2262 = vpack.c.b16 %v2256, %v2255
        %v2263 = vpack.c.b16 %v2258, %v2257
        %v2264 = vpack.c.b16 %v2260, %v2259
        %v2285 = vunpack.c.l.b16 %v2229
        %v2286 = vunpack.c.h.b16 %v2229
        %v2287 = vunpack.c.l.b16 %v2230
        %v2288 = vunpack.c.h.b16 %v2230
        %v2289 = vunpack.c.l.b16 %v2231
        %v2290 = vunpack.c.h.b16 %v2231
        %v2291 = vunpack.c.l.b16 %v2232
        %v2292 = vunpack.c.h.b16 %v2232
        %v2293 = vunpack.c.l.b16 %v2233
        %v2294 = vunpack.c.h.b16 %v2233
        %v2295 = vunpack.c.l.b16 %v2234
        %v2296 = vunpack.c.h.b16 %v2234
        %v2297 = vunpack.c.l.b16 %v2235
        %v2298 = vunpack.c.h.b16 %v2235
        %v2299 = vunpack.c.l.b16 %v2236
        %v2300 = vunpack.c.h.b16 %v2236
        %v2301 = vunpack.c.l.b16 %v2237
        %v2302 = vunpack.c.h.b16 %v2237
        %v2303 = vunpack.c.l.b16 %v2238
        %v2304 = vunpack.c.h.b16 %v2238
        %v2305 = vunpack.c.l.b16 %v2239
        %v2306 = vunpack.c.h.b16 %v2239
        %v2307 = vunpack.c.l.b16 %v2240
        %v2308 = vunpack.c.h.b16 %v2240
        %v2309 = vunpack.c.l.b16 %v2241
        %v2310 = vunpack.c.h.b16 %v2241
        %v2311 = vunpack.c.l.b16 %v2242
        %v2312 = vunpack.c.h.b16 %v2242
        %v2313 = vunpack.c.l.b16 %v2243
        %v2314 = vunpack.c.h.b16 %v2243
        %v2315 = vunpack.c.l.b16 %v2244
        %v2316 = vunpack.c.h.b16 %v2244
        %v2317 = vpack.c.b16 %v2287, %v2285
        %v2318 = vpack.c.b16 %v2288, %v2286
        %v2319 = vpack.c.b16 %v2291, %v2289
        %v2320 = vpack.c.b16 %v2292, %v2290
        %v2321 = vpack.c.b16 %v2295, %v2293
        %v2322 = vpack.c.b16 %v2296, %v2294
        %v2323 = vpack.c.b16 %v2299, %v2297
        %v2324 = vpack.c.b16 %v2300, %v2298
        %v2325 = vpack.c.b16 %v2303, %v2301
        %v2326 = vpack.c.b16 %v2304, %v2302
        %v2327 = vpack.c.b16 %v2307, %v2305
        %v2328 = vpack.c.b16 %v2308, %v2306
        %v2329 = vpack.c.b16 %v2311, %v2309
        %v2330 = vpack.c.b16 %v2312, %v2310
        %v2331 = vpack.c.b16 %v2315, %v2313
        %v2332 = vpack.c.b16 %v2316, %v2314
        %2349 = vmatprep.subr.bf16.mxu0 %v2318
        %2350 = vmatpush1.bf16.msra.mxu0 %v2317
        %2351 = vmatprep.subr.bf16.mxu0 %v2320
        %2352 = vmatpush1.bf16.msra.mxu0 %v2319
        %2353 = vmatprep.subr.bf16.mxu0 %v2322
        %2354 = vmatpush1.bf16.msra.mxu0 %v2321
        %2355 = vmatprep.subr.bf16.mxu0 %v2324
        %2356 = vmatpush1.bf16.msra.mxu0 %v2323
        %2357 = vmatprep.subr.bf16.mxu0 %v2326
        %2358 = vmatpush1.bf16.msra.mxu0 %v2325
        %2359 = vmatprep.subr.bf16.mxu0 %v2328
        %2360 = vmatpush1.bf16.msra.mxu0 %v2327
        %2361 = vmatprep.subr.bf16.mxu0 %v2330
        %2362 = vmatpush1.bf16.msra.mxu0 %v2329
        %2363 = vmatprep.subr.bf16.mxu0 %v2332
        %2364 = vmatpush1.bf16.msra.mxu0 %v2331
        %2365 = vmatprep.subr.bf16.mxu0 0
        %2366 = vmatpush1.bf16.msra.mxu0 0
        %2367 = vmatprep.subr.bf16.mxu0 0
        %2368 = vmatpush1.bf16.msra.mxu0 0
        %2369 = vmatprep.subr.bf16.mxu0 0
        %2370 = vmatpush1.bf16.msra.mxu0 0
        %2371 = vmatprep.subr.bf16.mxu0 0
        %2372 = vmatpush1.bf16.msra.mxu0 0
        %2373 = vmatprep.subr.bf16.mxu0 0
        %2374 = vmatpush1.bf16.msra.mxu0 0
        %2375 = vmatprep.subr.bf16.mxu0 0
        %2376 = vmatpush1.bf16.msra.mxu0 0
        %2377 = vmatprep.subr.bf16.mxu0 0
        %2378 = vmatpush1.bf16.msra.mxu0 0
        %2379 = vmatprep.subr.bf16.mxu0 0
        %2380 = vmatpush1.bf16.msra.mxu0 0
        %2381 = vmatprep.mubr.bf16.mxu0 0
        %2382 = vmatmul.mubr.bf16.gmra.mrb[0].mxu0 %v2261
        %v2383 = vpop.f32.mrb[0].mxu0
        %v2384 = vadd.f32 0.0, %v2383
        %v2385 = vpop.f32.mrb[0].mxu0
        %v2386 = vadd.f32 0.0, %v2385
        %v2387 = vpop.f32.mrb[0].mxu0
        %v2388 = vadd.f32 0.0, %v2387
        %v2389 = vpop.f32.mrb[0].mxu0
        %v2390 = vadd.f32 0.0, %v2389
        %2391 = vmatprep.mubr.bf16.mxu0 0
        %2392 = vmatmul.mubr.bf16.gmra.mrb[0].mxu0 %v2262
        %v2393 = vpop.f32.mrb[0].mxu0
        %v2394 = vadd.f32 0.0, %v2393
        %v2395 = vpop.f32.mrb[0].mxu0
        %v2396 = vadd.f32 0.0, %v2395
        %v2397 = vpop.f32.mrb[0].mxu0
        %v2398 = vadd.f32 0.0, %v2397
        %v2399 = vpop.f32.mrb[0].mxu0
        %v2400 = vadd.f32 0.0, %v2399
        %2401 = vmatprep.mubr.bf16.mxu0 0
        %2402 = vmatmul.mubr.bf16.gmra.mrb[0].mxu0 %v2263
        %v2403 = vpop.f32.mrb[0].mxu0
        %v2404 = vadd.f32 0.0, %v2403
        %v2405 = vpop.f32.mrb[0].mxu0
        %v2406 = vadd.f32 0.0, %v2405
        %v2407 = vpop.f32.mrb[0].mxu0
        %v2408 = vadd.f32 0.0, %v2407
        %v2409 = vpop.f32.mrb[0].mxu0
        %v2410 = vadd.f32 0.0, %v2409
        %2411 = vmatprep.mubr.bf16.mxu0 0
        %2412 = vmatmul.mubr.bf16.gmra.mrb[0].mxu0 %v2264
        %v2413 = vpop.f32.mrb[0].mxu0
        %v2414 = vadd.f32 0.0, %v2413
        %v2415 = vpop.f32.mrb[0].mxu0
        %v2416 = vadd.f32 0.0, %v2415
        %v2417 = vpop.f32.mrb[0].mxu0
        %v2418 = vadd.f32 0.0, %v2417
        %v2419 = vpop.f32.mrb[0].mxu0
        %v2420 = vadd.f32 0.0, %v2419
        %2421 = vdwg.mxu0
        %v2422 = vadd.f32 %v2203, %v2384
        %v2423 = vadd.f32 %v2204, %v2386
        %v2424 = vadd.f32 %v2205, %v2388
        %v2425 = vadd.f32 %v2206, %v2390
        %v2426 = vadd.f32 %v2207, %v2394
        %v2427 = vadd.f32 %v2208, %v2396
        %v2428 = vadd.f32 %v2209, %v2398
        %v2429 = vadd.f32 %v2210, %v2400
        %v2430 = vadd.f32 %v2211, %v2404
        %v2431 = vadd.f32 %v2212, %v2406
        %v2432 = vadd.f32 %v2213, %v2408
        %v2433 = vadd.f32 %v2214, %v2410
        %v2434 = vadd.f32 %v2215, %v2414
        %v2435 = vadd.f32 %v2216, %v2416
        %v2436 = vadd.f32 %v2217, %v2418
        %v2437 = vadd.f32 %v2218, %v2420
        %v2438 = vld [vmem:[%s652 + $0x8] sm:$0xf]
        %v2439 = vld [vmem:[%s652 + $0xc] sm:$0xf]
        %v2440 = vld [vmem:[%s652 + $0x10] sm:$0xf]
        %v2441 = vld [vmem:[%s652 + $0x14] sm:$0xf]
        %v2442 = vld [vmem:[%s652 + $0x18] sm:$0xf]
        %v2443 = vld [vmem:[%s652 + $0x1c] sm:$0xf]
        %v2444 = vld [vmem:[%s652 + $0x20] sm:$0xf]
        %v2445 = vld [vmem:[%s652 + $0x24] sm:$0xf]
        %s2446 = scalar_lea.vmem %s3, 1024
        %v2447 = vld [vmem:[%s2446] sm:$0xff]
        %v2448 = vld [vmem:[%s2446 + $0x8] sm:$0xff]
        %v2449 = vld [vmem:[%s2446 + $0x10] sm:$0xff]
        %v2450 = vld [vmem:[%s2446 + $0x18] sm:$0xff]
        %v2451 = vld [vmem:[%s2446 + $0x20] sm:$0xff]
        %v2452 = vld [vmem:[%s2446 + $0x28] sm:$0xff]
        %v2453 = vld [vmem:[%s2446 + $0x30] sm:$0xff]
        %v2454 = vld [vmem:[%s2446 + $0x38] sm:$0xff]
        %v2455 = vld [vmem:[%s2446 + $0x40] sm:$0xff]
        %v2456 = vld [vmem:[%s2446 + $0x48] sm:$0xff]
        %v2457 = vld [vmem:[%s2446 + $0x50] sm:$0xff]
        %v2458 = vld [vmem:[%s2446 + $0x58] sm:$0xff]
        %v2459 = vld [vmem:[%s2446 + $0x60] sm:$0xff]
        %v2460 = vld [vmem:[%s2446 + $0x68] sm:$0xff]
        %v2461 = vld [vmem:[%s2446 + $0x70] sm:$0xff]
        %v2462 = vld [vmem:[%s2446 + $0x78] sm:$0xff]
        %v2471 = vunpack.c.l.b16 %v2438
        %v2472 = vunpack.c.l.b16 %v2439
        %v2473 = vunpack.c.l.b16 %v2440
        %v2474 = vunpack.c.l.b16 %v2441
        %v2475 = vunpack.c.l.b16 %v2442
        %v2476 = vunpack.c.l.b16 %v2443
        %v2477 = vunpack.c.l.b16 %v2444
        %v2478 = vunpack.c.l.b16 %v2445
        %v2479 = vpack.c.b16 %v2472, %v2471
        %v2480 = vpack.c.b16 %v2474, %v2473
        %v2481 = vpack.c.b16 %v2476, %v2475
        %v2482 = vpack.c.b16 %v2478, %v2477
        %v2503 = vunpack.c.l.b16 %v2447
        %v2504 = vunpack.c.h.b16 %v2447
        %v2505 = vunpack.c.l.b16 %v2448
        %v2506 = vunpack.c.h.b16 %v2448
        %v2507 = vunpack.c.l.b16 %v2449
        %v2508 = vunpack.c.h.b16 %v2449
        %v2509 = vunpack.c.l.b16 %v2450
        %v2510 = vunpack.c.h.b16 %v2450
        %v2511 = vunpack.c.l.b16 %v2451
        %v2512 = vunpack.c.h.b16 %v2451
        %v2513 = vunpack.c.l.b16 %v2452
        %v2514 = vunpack.c.h.b16 %v2452
        %v2515 = vunpack.c.l.b16 %v2453
        %v2516 = vunpack.c.h.b16 %v2453
        %v2517 = vunpack.c.l.b16 %v2454
        %v2518 = vunpack.c.h.b16 %v2454
        %v2519 = vunpack.c.l.b16 %v2455
        %v2520 = vunpack.c.h.b16 %v2455
        %v2521 = vunpack.c.l.b16 %v2456
        %v2522 = vunpack.c.h.b16 %v2456
        %v2523 = vunpack.c.l.b16 %v2457
        %v2524 = vunpack.c.h.b16 %v2457
        %v2525 = vunpack.c.l.b16 %v2458
        %v2526 = vunpack.c.h.b16 %v2458
        %v2527 = vunpack.c.l.b16 %v2459
        %v2528 = vunpack.c.h.b16 %v2459
        %v2529 = vunpack.c.l.b16 %v2460
        %v2530 = vunpack.c.h.b16 %v2460
        %v2531 = vunpack.c.l.b16 %v2461
        %v2532 = vunpack.c.h.b16 %v2461
        %v2533 = vunpack.c.l.b16 %v2462
        %v2534 = vunpack.c.h.b16 %v2462
        %v2535 = vpack.c.b16 %v2505, %v2503
        %v2536 = vpack.c.b16 %v2506, %v2504
        %v2537 = vpack.c.b16 %v2509, %v2507
        %v2538 = vpack.c.b16 %v2510, %v2508
        %v2539 = vpack.c.b16 %v2513, %v2511
        %v2540 = vpack.c.b16 %v2514, %v2512
        %v2541 = vpack.c.b16 %v2517, %v2515
        %v2542 = vpack.c.b16 %v2518, %v2516
        %v2543 = vpack.c.b16 %v2521, %v2519
        %v2544 = vpack.c.b16 %v2522, %v2520
        %v2545 = vpack.c.b16 %v2525, %v2523
        %v2546 = vpack.c.b16 %v2526, %v2524
        %v2547 = vpack.c.b16 %v2529, %v2527
        %v2548 = vpack.c.b16 %v2530, %v2528
        %v2549 = vpack.c.b16 %v2533, %v2531
        %v2550 = vpack.c.b16 %v2534, %v2532
        %2567 = vmatprep.subr.bf16.mxu0 %v2536
        %2568 = vmatpush1.bf16.msra.mxu0 %v2535
        %2569 = vmatprep.subr.bf16.mxu0 %v2538
        %2570 = vmatpush1.bf16.msra.mxu0 %v2537
        %2571 = vmatprep.subr.bf16.mxu0 %v2540
        %2572 = vmatpush1.bf16.msra.mxu0 %v2539
        %2573 = vmatprep.subr.bf16.mxu0 %v2542
        %2574 = vmatpush1.bf16.msra.mxu0 %v2541
        %2575 = vmatprep.subr.bf16.mxu0 %v2544
        %2576 = vmatpush1.bf16.msra.mxu0 %v2543
        %2577 = vmatprep.subr.bf16.mxu0 %v2546
        %2578 = vmatpush1.bf16.msra.mxu0 %v2545
        %2579 = vmatprep.subr.bf16.mxu0 %v2548
        %2580 = vmatpush1.bf16.msra.mxu0 %v2547
        %2581 = vmatprep.subr.bf16.mxu0 %v2550
        %2582 = vmatpush1.bf16.msra.mxu0 %v2549
        %2583 = vmatprep.subr.bf16.mxu0 0
        %2584 = vmatpush1.bf16.msra.mxu0 0
        %2585 = vmatprep.subr.bf16.mxu0 0
        %2586 = vmatpush1.bf16.msra.mxu0 0
        %2587 = vmatprep.subr.bf16.mxu0 0
        %2588 = vmatpush1.bf16.msra.mxu0 0
        %2589 = vmatprep.subr.bf16.mxu0 0
        %2590 = vmatpush1.bf16.msra.mxu0 0
        %2591 = vmatprep.subr.bf16.mxu0 0
        %2592 = vmatpush1.bf16.msra.mxu0 0
        %2593 = vmatprep.subr.bf16.mxu0 0
        %2594 = vmatpush1.bf16.msra.mxu0 0
        %2595 = vmatprep.subr.bf16.mxu0 0
        %2596 = vmatpush1.bf16.msra.mxu0 0
        %2597 = vmatprep.subr.bf16.mxu0 0
        %2598 = vmatpush1.bf16.msra.mxu0 0
        %2599 = vmatprep.mubr.bf16.mxu0 0
        %2600 = vmatmul.mubr.bf16.gmra.mrb[0].mxu0 %v2479
        %v2601 = vpop.f32.mrb[0].mxu0
        %v2602 = vadd.f32 0.0, %v2601
        %v2603 = vpop.f32.mrb[0].mxu0
        %v2604 = vadd.f32 0.0, %v2603
        %v2605 = vpop.f32.mrb[0].mxu0
        %v2606 = vadd.f32 0.0, %v2605
        %v2607 = vpop.f32.mrb[0].mxu0
        %v2608 = vadd.f32 0.0, %v2607
        %2609 = vmatprep.mubr.bf16.mxu0 0
        %2610 = vmatmul.mubr.bf16.gmra.mrb[0].mxu0 %v2480
        %v2611 = vpop.f32.mrb[0].mxu0
        %v2612 = vadd.f32 0.0, %v2611
        %v2613 = vpop.f32.mrb[0].mxu0
        %v2614 = vadd.f32 0.0, %v2613
        %v2615 = vpop.f32.mrb[0].mxu0
        %v2616 = vadd.f32 0.0, %v2615
        %v2617 = vpop.f32.mrb[0].mxu0
        %v2618 = vadd.f32 0.0, %v2617
        %2619 = vmatprep.mubr.bf16.mxu0 0
        %2620 = vmatmul.mubr.bf16.gmra.mrb[0].mxu0 %v2481
        %v2621 = vpop.f32.mrb[0].mxu0
        %v2622 = vadd.f32 0.0, %v2621
        %v2623 = vpop.f32.mrb[0].mxu0
        %v2624 = vadd.f32 0.0, %v2623
        %v2625 = vpop.f32.mrb[0].mxu0
        %v2626 = vadd.f32 0.0, %v2625
        %v2627 = vpop.f32.mrb[0].mxu0
        %v2628 = vadd.f32 0.0, %v2627
        %2629 = vmatprep.mubr.bf16.mxu0 0
        %2630 = vmatmul.mubr.bf16.gmra.mrb[0].mxu0 %v2482
        %v2631 = vpop.f32.mrb[0].mxu0
        %v2632 = vadd.f32 0.0, %v2631
        %v2633 = vpop.f32.mrb[0].mxu0
        %v2634 = vadd.f32 0.0, %v2633
        %v2635 = vpop.f32.mrb[0].mxu0
        %v2636 = vadd.f32 0.0, %v2635
        %v2637 = vpop.f32.mrb[0].mxu0
        %v2638 = vadd.f32 0.0, %v2637
        %2639 = vdwg.mxu0
        %v2640 = vadd.f32 %v2422, %v2602
        %v2641 = vadd.f32 %v2423, %v2604
        %v2642 = vadd.f32 %v2424, %v2606
        %v2643 = vadd.f32 %v2425, %v2608
        %v2644 = vadd.f32 %v2426, %v2612
        %v2645 = vadd.f32 %v2427, %v2614
        %v2646 = vadd.f32 %v2428, %v2616
        %v2647 = vadd.f32 %v2429, %v2618
        %v2648 = vadd.f32 %v2430, %v2622
        %v2649 = vadd.f32 %v2431, %v2624
        %v2650 = vadd.f32 %v2432, %v2626
        %v2651 = vadd.f32 %v2433, %v2628
        %v2652 = vadd.f32 %v2434, %v2632
        %v2653 = vadd.f32 %v2435, %v2634
        %v2654 = vadd.f32 %v2436, %v2636
        %v2655 = vadd.f32 %v2437, %v2638
        %v2656 = vld [vmem:[%s4] sm:$0x3]
        %v2658 = vlaneseq
        %v2659 = vshrl.u32 %v2658, 7
        %v2660 = vsub.s32 0, %v2659
        %v2661 = vrot.slane %v2656, %v2660
        %v2662 = vlaneseq
        %v2663 = vshrl.u32 %v2662, 7
        %v2664 = vsub.s32 1, %v2663
        %v2665 = vrot.slane %v2656, %v2664
        %v2668 = vadd.f32 %v2640, %v2661
        %v2669 = vadd.f32 %v2641, %v2665
        %v2670 = vadd.f32 %v2642, %v2661
        %v2671 = vadd.f32 %v2643, %v2665
        %v2672 = vadd.f32 %v2644, %v2661
        %v2673 = vadd.f32 %v2645, %v2665
        %v2674 = vadd.f32 %v2646, %v2661
        %v2675 = vadd.f32 %v2647, %v2665
        %v2676 = vadd.f32 %v2648, %v2661
        %v2677 = vadd.f32 %v2649, %v2665
        %v2678 = vadd.f32 %v2650, %v2661
        %v2679 = vadd.f32 %v2651, %v2665
        %v2680 = vadd.f32 %v2652, %v2661
        %v2681 = vadd.f32 %v2653, %v2665
        %v2682 = vadd.f32 %v2654, %v2661
        %v2683 = vadd.f32 %v2655, %v2665
        %v2684 = vmax.f32 %v2668, 0.0
        %v2685 = vmax.f32 %v2670, 0.0
        %v2686 = vmax.f32 %v2672, 0.0
        %v2687 = vmax.f32 %v2674, 0.0
        %v2688 = vmax.f32 %v2676, 0.0
        %v2689 = vmax.f32 %v2678, 0.0
        %v2690 = vmax.f32 %v2680, 0.0
        %v2691 = vmax.f32 %v2682, 0.0
        %v2692 = vpack.c.bf16 %v2685, %v2684
        %v2693 = vpack.c.bf16 %v2687, %v2686
        %v2694 = vpack.c.bf16 %v2689, %v2688
        %v2695 = vpack.c.bf16 %v2691, %v2690
        %v2700 = vunpack.c.l.b16 %v2692
        %v2701 = vunpack.c.h.b16 %v2692
        %v2702 = vunpack.c.l.b16 %v2693
        %v2703 = vunpack.c.h.b16 %v2693
        %v2704 = vunpack.c.l.b16 %v2694
        %v2705 = vunpack.c.h.b16 %v2694
        %v2706 = vunpack.c.l.b16 %v2695
        %v2707 = vunpack.c.h.b16 %v2695
        %v2708 = vpack.c.b16 %v2700, %v2700
        %v2709 = vpack.c.b16 %v2701, %v2701
        %v2710 = vpack.c.b16 %v2702, %v2702
        %v2711 = vpack.c.b16 %v2703, %v2703
        %v2712 = vpack.c.b16 %v2704, %v2704
        %v2713 = vpack.c.b16 %v2705, %v2705
        %v2714 = vpack.c.b16 %v2706, %v2706
        %v2715 = vpack.c.b16 %v2707, %v2707
        %2724 = vst [vmem:[%s713] sm:$0xf] %v2708
        %2725 = vst [vmem:[%s713 + $0x4] sm:$0xf] %v2709
        %2726 = vst [vmem:[%s713 + $0x8] sm:$0xf] %v2710
        %2727 = vst [vmem:[%s713 + $0xc] sm:$0xf] %v2711
        %2728 = vst [vmem:[%s713 + $0x10] sm:$0xf] %v2712
        %2729 = vst [vmem:[%s713 + $0x14] sm:$0xf] %v2713
        %2730 = vst [vmem:[%s713 + $0x18] sm:$0xf] %v2714
        %2731 = vst [vmem:[%s713 + $0x1c] sm:$0xf] %v2715
        %v2732 = vpack.c.bf16 %v2671, %v2669
        %v2733 = vpack.c.bf16 %v2675, %v2673
        %v2734 = vpack.c.bf16 %v2679, %v2677
        %v2735 = vpack.c.bf16 %v2683, %v2681
        %v2740 = vunpack.c.l.b16 %v2732
        %v2741 = vunpack.c.h.b16 %v2732
        %v2742 = vunpack.c.l.b16 %v2733
        %v2743 = vunpack.c.h.b16 %v2733
        %v2744 = vunpack.c.l.b16 %v2734
        %v2745 = vunpack.c.h.b16 %v2734
        %v2746 = vunpack.c.l.b16 %v2735
        %v2747 = vunpack.c.h.b16 %v2735
        %v2748 = vpack.c.b16 %v2740, %v2740
        %v2749 = vpack.c.b16 %v2741, %v2741
        %v2750 = vpack.c.b16 %v2742, %v2742
        %v2751 = vpack.c.b16 %v2743, %v2743
        %v2752 = vpack.c.b16 %v2744, %v2744
        %v2753 = vpack.c.b16 %v2745, %v2745
        %v2754 = vpack.c.b16 %v2746, %v2746
        %v2755 = vpack.c.b16 %v2747, %v2747
        %2764 = vst [vmem:[%s722] sm:$0xf] %v2748
        %2765 = vst [vmem:[%s722 + $0x4] sm:$0xf] %v2749
        %2766 = vst [vmem:[%s722 + $0x8] sm:$0xf] %v2750
        %2767 = vst [vmem:[%s722 + $0xc] sm:$0xf] %v2751
        %2768 = vst [vmem:[%s722 + $0x10] sm:$0xf] %v2752
        %2769 = vst [vmem:[%s722 + $0x14] sm:$0xf] %v2753
        %2770 = vst [vmem:[%s722 + $0x18] sm:$0xf] %v2754
        %2771 = vst [vmem:[%s722 + $0x1c] sm:$0xf] %v2755
        %p2772 = scmp.lt.s32.totalorder %s22, 1
        %s2773 = scalar_select %p2772, %s22, 1
        %p2774 = scmp.lt.s32.totalorder %s23, 3
        %s2775 = scalar_select %p2774, %s23, 3
        %s2776 = smul.addr %s2775, 8
        %s2777 = smul.addr %s2773, 32
        %s2778 = sadd.s32 %s2776, %s2777
        %s2779 = smul.addr %s2778, 4
        %s2780 = scalar_lea.vmem %s5, %s2779
        %p2781 = scmp.lt.s32.totalorder %s22, 1
        %s2782 = scalar_select %p2781, %s22, 1
        %p2783 = scmp.lt.s32.totalorder %s23, 3
        %s2784 = scalar_select %p2783, %s23, 3
        %s2785 = smul.addr %s2784, 8
        %s2786 = smul.addr %s2782, 32
        %s2787 = sadd.s32 %s2785, %s2786
        %s2788 = smul.addr %s2787, 4
        %s2789 = scalar_lea.vmem %s6, %s2788
        // Predicated region
        $region164: #{basic_block_forward.2} parent=150 // pred_check
          %p2790 = pneg %p186
        $region165: #{basic_block_forward.2} parent=150 // pred_check_branch
          %2792 = sbr.rel (%p2790) target = $region167
        $region166: #{basic_block_forward.2} parent=150 // pred_region
          _
        $region167: #{basic_block_forward.2} parent=150 // pred_fallthru
          _
        // Predicated region
        $region168: #{basic_block_forward.2} parent=150 // pred_check
          %p2793 = pneg %p214
        $region169: #{basic_block_forward.2} parent=150 // pred_check_branch
          %2795 = sbr.rel (%p2793) target = $region171
        $region170: #{basic_block_forward.2} parent=150 // pred_region
          _
        $region171: #{basic_block_forward.2} parent=150 // pred_fallthru
          _
      $region151: #{basic_block_forward.2} parent=5 // pred_fallthru
        _
      %p2796 = scmp.le.s32.totalorder 2, %s13
      // Predicated region
      $region172: #{basic_block_forward.2} parent=5 // pred_check
        %p2797 = pneg %p2796
      $region173: #{basic_block_forward.2} parent=5 // pred_check_branch
        %2799 = sbr.rel (%p2797) target = $region175
      $region174: #{basic_block_forward.2} parent=5 // pred_region
        %s2800 = ssub.s32 %s13, 2
        // Predicated region
        $region176: #{basic_block_forward.2} parent=174 // pred_check
          %p2801 = pneg %p192
        $region177: #{basic_block_forward.2} parent=174 // pred_check_branch
          %2803 = sbr.rel (%p2801) target = $region179
        $region178: #{basic_block_forward.2} parent=174 // pred_region
          %p2804 = scmp.lt.s32.totalorder %s24, 1
          %s2805 = scalar_select %p2804, %s24, 1
          %p2806 = scmp.lt.s32.totalorder %s25, 3
          %s2807 = scalar_select %p2806, %s25, 3
          %s2808 = smul.addr %s2807, 8
          %s2809 = smul.addr %s2805, 32
          %s2810 = sadd.s32 %s2808, %s2809
          %s2811 = smul.addr %s2810, 4
          %s2812 = scalar_lea.vmem %s5, %s2811
        $region179: #{basic_block_forward.2} parent=174 // pred_fallthru
          _
        // Predicated region
        $region180: #{basic_block_forward.2} parent=174 // pred_check
          %p2813 = pneg %p220
        $region181: #{basic_block_forward.2} parent=174 // pred_check_branch
          %2815 = sbr.rel (%p2813) target = $region183
        $region182: #{basic_block_forward.2} parent=174 // pred_region
          %p2816 = scmp.lt.s32.totalorder %s24, 1
          %s2817 = scalar_select %p2816, %s24, 1
          %p2818 = scmp.lt.s32.totalorder %s25, 3
          %s2819 = scalar_select %p2818, %s25, 3
          %s2820 = smul.addr %s2819, 8
          %s2821 = smul.addr %s2817, 32
          %s2822 = sadd.s32 %s2820, %s2821
          %s2823 = smul.addr %s2822, 4
          %s2824 = scalar_lea.vmem %s6, %s2823
        $region183: #{basic_block_forward.2} parent=174 // pred_fallthru
          _
      $region175: #{basic_block_forward.2} parent=5 // pred_fallthru
        _
    $region6: #{basic_block_forward.2} parent=1 // loop_footer
      %s17 = sadd.s32 1, %s13
    $region7: #{basic_block_forward.2} parent=1 // loop_footer_branch
      %12 = sbr.rel target = $region3
    $region8: #{basic_block_forward.2} parent=1 // loop_exit
      _

// kernel: basic_block_forward.3
$region0: #{basic_block_forward.3}
  #allocation0 [shape = 'u32[]', space=smem, size = 0x4, offset = 0x4, fixed_abs, tag = 'smem constant byte address 0x4 - core index']
  #allocation1 [shape = 'u32[144,128]{1,0:T(1,128)}', space=vmem, size = 0x12000, scoped, tag = 'internal scratch']
  %s0 = inlined_call_operand.vmem [shape: bf16[2,6,96,128], index: 0, kind: input, shape index: {}, may-alias: {0,1,2}]
  %s1 = inlined_call_operand.vmem [shape: bf16[2,6,96,128], index: 1, kind: input, shape index: {}, may-alias: {0,1,2}]
  %s2 = inlined_call_operand.vmem [shape: bf16[2,6,96,128], index: 2, kind: input, shape index: {}, may-alias: {0,1,2}]
  %s3 = inlined_call_operand.vmem [shape: bf16[3,3,128,128], index: 3, kind: input, shape index: {}]
  %s4 = inlined_call_operand.vmem [shape: f32[1,128], index: 4, kind: input, shape index: {}]
  %s5 = inlined_call_operand.vmem [shape: bf16[2,4,64,128], index: 5, kind: input, shape index: {}, may-alias: {5,6}]
  %s6 = inlined_call_operand.vmem [shape: bf16[2,4,64,128], index: 6, kind: output, shape index: {}, may-alias: {5,6}]
  %s7 = sld [smem:[#allocation0]]
  $region57: #{basic_block_forward.3} parent=0
    _
  %s9 = ssub.s32 1, %s7
  %s10 = scalar_select 0, %s9, %s7
  loop: start=0, step=1, limit=10
  $region2: #{basic_block_forward.3} parent=0 // loop_pre_header
    _
  $region3: #{basic_block_forward.3} parent=0 // loop_header
    %s12 = sphi 0, %s16
    %p13 = scmp.ge.s32.totalorder %s12, 10
    %s19 = sphi 0, %s31
    %s20 = sphi 0, %s27
    %s21 = sphi 0, %s19
    %s22 = sphi 0, %s20
    %s23 = sphi 0, %s21
    %s24 = sphi 0, %s22
    %s36 = sphi 0, %s38
    %s39 = sphi 0, %s36
    %s40 = sphi 0, %s39
    %s56 = sphi 0, %s40
    %s66 = sphi 0, %s68
    %s69 = sphi 0, %s66
    %s70 = sphi 0, %s69
    %s86 = sphi 0, %s70
    %s96 = sphi 0, %s98
    %s99 = sphi 0, %s96
    %s100 = sphi 0, %s99
    %s116 = sphi 0, %s100
    %s120 = sphi 0, %s120
    %s122 = sphi 0, %s120
    %s123 = sphi 0, %s122
    %s137 = sphi 0, %s123
    %s141 = sphi 0, %s141
    %s143 = sphi 0, %s141
    %s144 = sphi 0, %s143
    %s158 = sphi 0, %s144
    %s166 = sphi 0, %s168
    %s169 = sphi 0, %s166
    %s170 = sphi 0, %s169
    %s186 = sphi 0, %s170
    %s194 = sphi 0, %s196
    %s197 = sphi 0, %s194
    %s198 = sphi 0, %s197
    %s214 = sphi 0, %s198
  $region4: #{basic_block_forward.3} parent=0 // loop_header_branch
    %15 = sbr.rel (%p13) target = $region8
  $region5: #{basic_block_forward.3} parent=0 // loop_body
    %s17 = ssub.s32 %s12, 1
    %s18 = ssub.s32 %s12, 2
    %s25 = sadd.s32 1, %s20
    %p26 = scmp.ge.s32.totalorder %s25, 4
    %s27 = scalar_select %p26, 0, %s25
    %s28 = sadd.s32 1, %s19
    %s29 = scalar_select %p26, %s28, %s19
    %p30 = scmp.ge.s32.totalorder %s29, 2
    %s31 = scalar_select %p30, 0, %s29
    %s32 = ssub.s32 %s19, %s31
    %s33 = ssub.s32 %s20, %s27
    %s34 = sor.u32 %s32, %s33
    %p35 = scmp.eq.s32.totalorder %s34, 0
    %s37 = sadd.s32 %s36, 1
    %s38 = scalar_select %p35, %s36, %s37
    %p41 = pneg %p35
    %p42 = scmp.eq.s32.totalorder %s12, 7
    %p43 = por %p41, %p42
    %p44 = scmp.ne.s32.totalorder %s36, %s39
    %p45 = scmp.eq.s32.totalorder %s12, 0
    %p46 = por %p44, %p45
    %p47 = scmp.ne.s32.totalorder %s36, %s39
    %p48 = scmp.eq.s32.totalorder %s17, 7
    %p49 = por %p47, %p48
    %p50 = scmp.ne.s32.totalorder %s39, %s40
    %p51 = scmp.eq.s32.totalorder %s17, 0
    %p52 = por %p50, %p51
    %p53 = scmp.ne.s32.totalorder %s39, %s40
    %p54 = scmp.eq.s32.totalorder %s18, 7
    %p55 = por %p53, %p54
    %p57 = scmp.ne.s32.totalorder %s40, %s56
    %p58 = scmp.eq.s32.totalorder %s18, 0
    %p59 = por %p57, %p58
    %s60 = sadd.s32 %s20, 1
    %s61 = sadd.s32 %s27, 1
    %s62 = ssub.s32 %s19, %s31
    %s63 = ssub.s32 %s60, %s61
    %s64 = sor.u32 %s62, %s63
    %p65 = scmp.eq.s32.totalorder %s64, 0
    %s67 = sadd.s32 %s66, 1
    %s68 = scalar_select %p65, %s66, %s67
    %p71 = pneg %p65
    %p72 = scmp.eq.s32.totalorder %s12, 7
    %p73 = por %p71, %p72
    %p74 = scmp.ne.s32.totalorder %s66, %s69
    %p75 = scmp.eq.s32.totalorder %s12, 0
    %p76 = por %p74, %p75
    %p77 = scmp.ne.s32.totalorder %s66, %s69
    %p78 = scmp.eq.s32.totalorder %s17, 7
    %p79 = por %p77, %p78
    %p80 = scmp.ne.s32.totalorder %s69, %s70
    %p81 = scmp.eq.s32.totalorder %s17, 0
    %p82 = por %p80, %p81
    %p83 = scmp.ne.s32.totalorder %s69, %s70
    %p84 = scmp.eq.s32.totalorder %s18, 7
    %p85 = por %p83, %p84
    %p87 = scmp.ne.s32.totalorder %s70, %s86
    %p88 = scmp.eq.s32.totalorder %s18, 0
    %p89 = por %p87, %p88
    %s90 = sadd.s32 %s20, 2
    %s91 = sadd.s32 %s27, 2
    %s92 = ssub.s32 %s19, %s31
    %s93 = ssub.s32 %s90, %s91
    %s94 = sor.u32 %s92, %s93
    %p95 = scmp.eq.s32.totalorder %s94, 0
    %s97 = sadd.s32 %s96, 1
    %s98 = scalar_select %p95, %s96, %s97
    %p101 = pneg %p95
    %p102 = scmp.eq.s32.totalorder %s12, 7
    %p103 = por %p101, %p102
    %p104 = scmp.ne.s32.totalorder %s96, %s99
    %p105 = scmp.eq.s32.totalorder %s12, 0
    %p106 = por %p104, %p105
    %p107 = scmp.ne.s32.totalorder %s96, %s99
    %p108 = scmp.eq.s32.totalorder %s17, 7
    %p109 = por %p107, %p108
    %p110 = scmp.ne.s32.totalorder %s99, %s100
    %p111 = scmp.eq.s32.totalorder %s17, 0
    %p112 = por %p110, %p111
    %p113 = scmp.ne.s32.totalorder %s99, %s100
    %p114 = scmp.eq.s32.totalorder %s18, 7
    %p115 = por %p113, %p114
    %p117 = scmp.ne.s32.totalorder %s100, %s116
    %p118 = scmp.eq.s32.totalorder %s18, 0
    %p119 = por %p117, %p118
    %s121 = sadd.s32 %s120, 1
    %p124 = scmp.eq.s32.totalorder %s12, 7
    %p125 = scmp.ne.s32.totalorder %s120, %s122
    %p126 = scmp.eq.s32.totalorder %s12, 0
    %p127 = por %p125, %p126
    %p128 = scmp.ne.s32.totalorder %s120, %s122
    %p129 = scmp.eq.s32.totalorder %s17, 7
    %p130 = por %p128, %p129
    %p131 = scmp.ne.s32.totalorder %s122, %s123
    %p132 = scmp.eq.s32.totalorder %s17, 0
    %p133 = por %p131, %p132
    %p134 = scmp.ne.s32.totalorder %s122, %s123
    %p135 = scmp.eq.s32.totalorder %s18, 7
    %p136 = por %p134, %p135
    %p138 = scmp.ne.s32.totalorder %s123, %s137
    %p139 = scmp.eq.s32.totalorder %s18, 0
    %p140 = por %p138, %p139
    %s142 = sadd.s32 %s141, 1
    %p145 = scmp.eq.s32.totalorder %s12, 7
    %p146 = scmp.ne.s32.totalorder %s141, %s143
    %p147 = scmp.eq.s32.totalorder %s12, 0
    %p148 = por %p146, %p147
    %p149 = scmp.ne.s32.totalorder %s141, %s143
    %p150 = scmp.eq.s32.totalorder %s17, 7
    %p151 = por %p149, %p150
    %p152 = scmp.ne.s32.totalorder %s143, %s144
    %p153 = scmp.eq.s32.totalorder %s17, 0
    %p154 = por %p152, %p153
    %p155 = scmp.ne.s32.totalorder %s143, %s144
    %p156 = scmp.eq.s32.totalorder %s18, 7
    %p157 = por %p155, %p156
    %p159 = scmp.ne.s32.totalorder %s144, %s158
    %p160 = scmp.eq.s32.totalorder %s18, 0
    %p161 = por %p159, %p160
    %s162 = ssub.s32 %s19, %s31
    %s163 = ssub.s32 %s20, %s27
    %s164 = sor.u32 %s162, %s163
    %p165 = scmp.eq.s32.totalorder %s164, 0
    %s167 = sadd.s32 %s166, 1
    %s168 = scalar_select %p165, %s166, %s167
    %p171 = pneg %p165
    %p172 = scmp.eq.s32.totalorder %s12, 7
    %p173 = por %p171, %p172
    %p174 = scmp.ne.s32.totalorder %s166, %s169
    %p175 = scmp.eq.s32.totalorder %s12, 0
    %p176 = por %p174, %p175
    %p177 = scmp.ne.s32.totalorder %s166, %s169
    %p178 = scmp.eq.s32.totalorder %s17, 7
    %p179 = por %p177, %p178
    %p180 = scmp.ne.s32.totalorder %s169, %s170
    %p181 = scmp.eq.s32.totalorder %s17, 0
    %p182 = por %p180, %p181
    %p183 = scmp.ne.s32.totalorder %s169, %s170
    %p184 = scmp.eq.s32.totalorder %s18, 7
    %p185 = por %p183, %p184
    %p187 = scmp.ne.s32.totalorder %s170, %s186
    %p188 = scmp.eq.s32.totalorder %s18, 0
    %p189 = por %p187, %p188
    %s190 = ssub.s32 %s19, %s31
    %s191 = ssub.s32 %s20, %s27
    %s192 = sor.u32 %s190, %s191
    %p193 = scmp.eq.s32.totalorder %s192, 0
    %s195 = sadd.s32 %s194, 1
    %s196 = scalar_select %p193, %s194, %s195
    %p199 = pneg %p193
    %p200 = scmp.eq.s32.totalorder %s12, 7
    %p201 = por %p199, %p200
    %p202 = scmp.ne.s32.totalorder %s194, %s197
    %p203 = scmp.eq.s32.totalorder %s12, 0
    %p204 = por %p202, %p203
    %p205 = scmp.ne.s32.totalorder %s194, %s197
    %p206 = scmp.eq.s32.totalorder %s17, 7
    %p207 = por %p205, %p206
    %p208 = scmp.ne.s32.totalorder %s197, %s198
    %p209 = scmp.eq.s32.totalorder %s17, 0
    %p210 = por %p208, %p209
    %p211 = scmp.ne.s32.totalorder %s197, %s198
    %p212 = scmp.eq.s32.totalorder %s18, 7
    %p213 = por %p211, %p212
    %p215 = scmp.ne.s32.totalorder %s198, %s214
    %p216 = scmp.eq.s32.totalorder %s18, 0
    %p217 = por %p215, %p216
    %p218 = scmp.le.s32.totalorder 1, %s12
    %p219 = scmp.lt.s32.totalorder %s12, 9
    %p220 = pnand %p218, %p219
    %p221 = pneg %p220
    // Predicated region
    $region9: #{basic_block_forward.3} parent=5 // pred_check
      _
    $region10: #{basic_block_forward.3} parent=5 // pred_check_branch
      %223 = sbr.rel (%p220) target = $region12
    $region11: #{basic_block_forward.3} parent=5 // pred_region
      %s224 = ssub.s32 %s12, 1
      // Predicated region
      $region13: #{basic_block_forward.3} parent=11 // pred_check
        %p225 = pneg %p133
      $region14: #{basic_block_forward.3} parent=11 // pred_check_branch
        %227 = sbr.rel (%p225) target = $region16
      $region15: #{basic_block_forward.3} parent=11 // pred_region
        _
      $region16: #{basic_block_forward.3} parent=11 // pred_fallthru
        _
      // Predicated region
      $region17: #{basic_block_forward.3} parent=11 // pred_check
        %p228 = pneg %p154
      $region18: #{basic_block_forward.3} parent=11 // pred_check_branch
        %230 = sbr.rel (%p228) target = $region20
      $region19: #{basic_block_forward.3} parent=11 // pred_region
        _
      $region20: #{basic_block_forward.3} parent=11 // pred_fallthru
        _
    $region12: #{basic_block_forward.3} parent=5 // pred_fallthru
      _
    %p231 = scmp.lt.s32.totalorder %s12, 8
    // Predicated region
    $region21: #{basic_block_forward.3} parent=5 // pred_check
      %p232 = pneg %p231
    $region22: #{basic_block_forward.3} parent=5 // pred_check_branch
      %234 = sbr.rel (%p232) target = $region24
    $region23: #{basic_block_forward.3} parent=5 // pred_region
      // Predicated region
      $region25: #{basic_block_forward.3} parent=23 // pred_check
        %p235 = pneg %p46
      $region26: #{basic_block_forward.3} parent=23 // pred_check_branch
        %237 = sbr.rel (%p235) target = $region28
      $region27: #{basic_block_forward.3} parent=23 // pred_region
        %p238 = scmp.lt.s32.totalorder %s19, 1
        %s239 = scalar_select %p238, %s19, 1
        %p240 = scmp.lt.s32.totalorder %s20, 5
        %s241 = scalar_select %p240, %s20, 5
        %s242 = smul.addr %s241, 12
        %s243 = smul.addr %s239, 72
        %s244 = sadd.s32 %s242, %s243
        %s245 = smul.addr %s244, 4
        %s246 = scalar_lea.vmem %s0, %s245
      $region28: #{basic_block_forward.3} parent=23 // pred_fallthru
        _
      // Predicated region
      $region29: #{basic_block_forward.3} parent=23 // pred_check
        %p247 = pneg %p76
      $region30: #{basic_block_forward.3} parent=23 // pred_check_branch
        %249 = sbr.rel (%p247) target = $region32
      $region31: #{basic_block_forward.3} parent=23 // pred_region
        %s250 = sadd.s32 %s20, 1
        %p251 = scmp.lt.s32.totalorder %s19, 1
        %s252 = scalar_select %p251, %s19, 1
        %p253 = scmp.lt.s32.totalorder %s250, 5
        %s254 = scalar_select %p253, %s250, 5
        %s255 = smul.addr %s254, 12
        %s256 = smul.addr %s252, 72
        %s257 = sadd.s32 %s255, %s256
        %s258 = smul.addr %s257, 4
        %s259 = scalar_lea.vmem %s1, %s258
        %s260 = sadd.s32 %s20, 1
      $region32: #{basic_block_forward.3} parent=23 // pred_fallthru
        _
      // Predicated region
      $region33: #{basic_block_forward.3} parent=23 // pred_check
        %p261 = pneg %p106
      $region34: #{basic_block_forward.3} parent=23 // pred_check_branch
        %263 = sbr.rel (%p261) target = $region36
      $region35: #{basic_block_forward.3} parent=23 // pred_region
        %s264 = sadd.s32 %s20, 2
        %p265 = scmp.lt.s32.totalorder %s19, 1
        %s266 = scalar_select %p265, %s19, 1
        %p267 = scmp.lt.s32.totalorder %s264, 5
        %s268 = scalar_select %p267, %s264, 5
        %s269 = smul.addr %s268, 12
        %s270 = smul.addr %s266, 72
        %s271 = sadd.s32 %s269, %s270
        %s272 = smul.addr %s271, 4
        %s273 = scalar_lea.vmem %s2, %s272
        %s274 = sadd.s32 %s20, 2
      $region36: #{basic_block_forward.3} parent=23 // pred_fallthru
        _
      // Predicated region
      $region37: #{basic_block_forward.3} parent=23 // pred_check
        %p275 = pneg %p176
      $region38: #{basic_block_forward.3} parent=23 // pred_check_branch
        %277 = sbr.rel (%p275) target = $region40
      $region39: #{basic_block_forward.3} parent=23 // pred_region
        %p278 = scmp.lt.s32.totalorder %s19, 1
        %s279 = scalar_select %p278, %s19, 1
        %p280 = scmp.lt.s32.totalorder %s20, 3
        %s281 = scalar_select %p280, %s20, 3
        %s282 = smul.addr %s281, 8
        %s283 = smul.addr %s279, 32
        %s284 = sadd.s32 %s282, %s283
        %s285 = smul.addr %s284, 4
        %s286 = scalar_lea.vmem %s5, %s285
      $region40: #{basic_block_forward.3} parent=23 // pred_fallthru
        _
    $region24: #{basic_block_forward.3} parent=5 // pred_fallthru
      _
    %p287 = scmp.le.s32.totalorder 1, %s12
    %p288 = scmp.lt.s32.totalorder %s12, 9
    %p289 = pnand %p287, %p288
    %p290 = pneg %p289
    // Predicated region
    $region41: #{basic_block_forward.3} parent=5 // pred_check
      _
    $region42: #{basic_block_forward.3} parent=5 // pred_check_branch
      %292 = sbr.rel (%p289) target = $region44
    $region43: #{basic_block_forward.3} parent=5 // pred_region
      %s293 = ssub.s32 %s12, 1
      %p294 = scmp.lt.s32.totalorder %s21, 1
      %s295 = scalar_select %p294, %s21, 1
      %p296 = scmp.lt.s32.totalorder %s22, 5
      %s297 = scalar_select %p296, %s22, 5
      %s298 = smul.addr %s297, 12
      %s299 = smul.addr %s295, 72
      %s300 = sadd.s32 %s298, %s299
      %s301 = smul.addr %s300, 4
      %s302 = scalar_lea.vmem %s0, %s301
      %p303 = pneg %p52
      %p304 = pneg %p49
      %s305 = sadd.s32 %s22, 1
      %p306 = scmp.lt.s32.totalorder %s21, 1
      %s307 = scalar_select %p306, %s21, 1
      %p308 = scmp.lt.s32.totalorder %s305, 5
      %s309 = scalar_select %p308, %s305, 5
      %s310 = smul.addr %s309, 12
      %s311 = smul.addr %s307, 72
      %s312 = sadd.s32 %s310, %s311
      %s313 = smul.addr %s312, 4
      %s314 = scalar_lea.vmem %s1, %s313
      %p315 = pneg %p82
      %p316 = pneg %p79
      %s317 = sadd.s32 %s22, 2
      %p318 = scmp.lt.s32.totalorder %s21, 1
      %s319 = scalar_select %p318, %s21, 1
      %p320 = scmp.lt.s32.totalorder %s317, 5
      %s321 = scalar_select %p320, %s317, 5
      %s322 = smul.addr %s321, 12
      %s323 = smul.addr %s319, 72
      %s324 = sadd.s32 %s322, %s323
      %s325 = smul.addr %s324, 4
      %s326 = scalar_lea.vmem %s2, %s325
      %p327 = pneg %p112
      %p328 = pneg %p109
      %p329 = pneg %p133
      %p330 = pneg %p130
      %p331 = pneg %p154
      %p332 = pneg %p151
      %p333 = scmp.lt.s32.totalorder %s21, 1
      %s334 = scalar_select %p333, %s21, 1
      %p335 = scmp.lt.s32.totalorder %s22, 3
      %s336 = scalar_select %p335, %s22, 3
      %s337 = smul.addr %s336, 8
      %s338 = smul.addr %s334, 32
      %s339 = sadd.s32 %s337, %s338
      %s340 = smul.addr %s339, 4
      %s341 = scalar_lea.vmem %s5, %s340
      %p342 = pneg %p182
      %p343 = pneg %p179
      %p344 = pneg %p210
      %p345 = pneg %p207
      %p346 = scmp.lt.s32.totalorder %s21, 1
      %s347 = scalar_select %p346, %s21, 1
      %p348 = scmp.lt.s32.totalorder %s22, 3
      %s349 = scalar_select %p348, %s22, 3
      %s350 = smul.addr %s349, 8
      %s351 = smul.addr %s347, 32
      %s352 = sadd.s32 %s350, %s351
      %s353 = smul.addr %s352, 4
      %s354 = scalar_lea.vmem %s6, %s353
      %p355 = scmp.lt.s32.totalorder %s21, 1
      %s356 = scalar_select %p355, %s21, 1
      %p357 = scmp.lt.s32.totalorder %s22, 5
      %s358 = scalar_select %p357, %s22, 5
      %s359 = smul.addr %s358, 12
      %s360 = smul.addr %s356, 72
      %s361 = sadd.s32 %s359, %s360
      %s362 = smul.addr %s361, 4
      %s363 = scalar_lea.vmem %s0, %s362
      %s364 = sadd.s32 %s22, 1
      %p365 = scmp.lt.s32.totalorder %s21, 1
      %s366 = scalar_select %p365, %s21, 1
      %p367 = scmp.lt.s32.totalorder %s364, 5
      %s368 = scalar_select %p367, %s364, 5
      %s369 = smul.addr %s368, 12
      %s370 = smul.addr %s366, 72
      %s371 = sadd.s32 %s369, %s370
      %s372 = smul.addr %s371, 4
      %s373 = scalar_lea.vmem %s1, %s372
      %s374 = sadd.s32 %s22, 1
      %s375 = sadd.s32 %s22, 2
      %p376 = scmp.lt.s32.totalorder %s21, 1
      %s377 = scalar_select %p376, %s21, 1
      %p378 = scmp.lt.s32.totalorder %s375, 5
      %s379 = scalar_select %p378, %s375, 5
      %s380 = smul.addr %s379, 12
      %s381 = smul.addr %s377, 72
      %s382 = sadd.s32 %s380, %s381
      %s383 = smul.addr %s382, 4
      %s384 = scalar_lea.vmem %s2, %s383
      %s385 = sadd.s32 %s22, 2
      %p386 = scmp.lt.s32.totalorder %s21, 1
      %s387 = scalar_select %p386, %s21, 1
      %p388 = scmp.lt.s32.totalorder %s22, 3
      %s389 = scalar_select %p388, %s22, 3
      %s390 = smul.addr %s389, 8
      %s391 = smul.addr %s387, 32
      %s392 = sadd.s32 %s390, %s391
      %s393 = smul.addr %s392, 4
      %s394 = scalar_lea.vmem %s5, %s393
      %p395 = scmp.lt.s32.totalorder %s21, 1
      %s396 = scalar_select %p395, %s21, 1
      %p397 = scmp.lt.s32.totalorder %s22, 3
      %s398 = scalar_select %p397, %s22, 3
      %s399 = smul.addr %s398, 8
      %s400 = smul.addr %s396, 32
      %s401 = sadd.s32 %s399, %s400
      %s402 = smul.addr %s401, 4
      %s403 = scalar_lea.vmem %s6, %s402
      %v405 = vld [vmem:[%s363] sm:$0xf]
      %v406 = vld [vmem:[%s363 + $0x4] sm:$0xf]
      %v407 = vld [vmem:[%s363 + $0x8] sm:$0xf]
      %v408 = vld [vmem:[%s363 + $0xc] sm:$0xf]
      %v409 = vld [vmem:[%s363 + $0x10] sm:$0xf]
      %v410 = vld [vmem:[%s363 + $0x14] sm:$0xf]
      %v411 = vld [vmem:[%s363 + $0x18] sm:$0xf]
      %v412 = vld [vmem:[%s363 + $0x1c] sm:$0xf]
      %v413 = vld [vmem:[%s3] sm:$0xf]
      %v414 = vld [vmem:[%s3 + $0x4] sm:$0xf]
      %v415 = vld [vmem:[%s3 + $0x8] sm:$0xf]
      %v416 = vld [vmem:[%s3 + $0xc] sm:$0xf]
      %v417 = vld [vmem:[%s3 + $0x10] sm:$0xf]
      %v418 = vld [vmem:[%s3 + $0x14] sm:$0xf]
      %v419 = vld [vmem:[%s3 + $0x18] sm:$0xf]
      %v420 = vld [vmem:[%s3 + $0x1c] sm:$0xf]
      %v421 = vld [vmem:[%s3 + $0x20] sm:$0xf]
      %v422 = vld [vmem:[%s3 + $0x24] sm:$0xf]
      %v423 = vld [vmem:[%s3 + $0x28] sm:$0xf]
      %v424 = vld [vmem:[%s3 + $0x2c] sm:$0xf]
      %v425 = vld [vmem:[%s3 + $0x30] sm:$0xf]
      %v426 = vld [vmem:[%s3 + $0x34] sm:$0xf]
      %v427 = vld [vmem:[%s3 + $0x38] sm:$0xf]
      %v428 = vld [vmem:[%s3 + $0x3c] sm:$0xf]
      %v429 = vld [vmem:[%s363 + $0x20] sm:$0xf]
      %v430 = vld [vmem:[%s363 + $0x24] sm:$0xf]
      %s431 = scalar_lea.vmem %s3, 64
      %v432 = vld [vmem:[%s431] sm:$0xf]
      %v433 = vld [vmem:[%s431 + $0x4] sm:$0xf]
      %v434 = vld [vmem:[%s431 + $0x8] sm:$0xf]
      %v435 = vld [vmem:[%s431 + $0xc] sm:$0xf]
      %v436 = vld [vmem:[%s431 + $0x10] sm:$0xf]
      %v437 = vld [vmem:[%s431 + $0x14] sm:$0xf]
      %v438 = vld [vmem:[%s431 + $0x18] sm:$0xf]
      %v439 = vld [vmem:[%s431 + $0x1c] sm:$0xf]
      %v440 = vld [vmem:[%s431 + $0x20] sm:$0xf]
      %v441 = vld [vmem:[%s431 + $0x24] sm:$0xf]
      %v442 = vld [vmem:[%s431 + $0x28] sm:$0xf]
      %v443 = vld [vmem:[%s431 + $0x2c] sm:$0xf]
      %v444 = vld [vmem:[%s431 + $0x30] sm:$0xf]
      %v445 = vld [vmem:[%s431 + $0x34] sm:$0xf]
      %v446 = vld [vmem:[%s431 + $0x38] sm:$0xf]
      %v447 = vld [vmem:[%s431 + $0x3c] sm:$0xf]
      %v456 = vunpack.c.l.b16 %v407
      %v457 = vunpack.c.l.b16 %v408
      %v458 = vunpack.c.l.b16 %v409
      %v459 = vunpack.c.l.b16 %v410
      %v460 = vunpack.c.l.b16 %v411
      %v461 = vunpack.c.l.b16 %v412
      %v462 = vunpack.c.l.b16 %v429
      %v463 = vunpack.c.l.b16 %v430
      %v464 = vpack.c.b16 %v457, %v456
      %v465 = vpack.c.b16 %v459, %v458
      %v466 = vpack.c.b16 %v461, %v460
      %v467 = vpack.c.b16 %v463, %v462
      %v488 = vunpack.c.l.b16 %v432
      %v489 = vunpack.c.l.b16 %v433
      %v490 = vunpack.c.l.b16 %v434
      %v491 = vunpack.c.l.b16 %v435
      %v492 = vunpack.c.l.b16 %v436
      %v493 = vunpack.c.l.b16 %v437
      %v494 = vunpack.c.l.b16 %v438
      %v495 = vunpack.c.l.b16 %v439
      %v496 = vunpack.c.l.b16 %v440
      %v497 = vunpack.c.l.b16 %v441
      %v498 = vunpack.c.l.b16 %v442
      %v499 = vunpack.c.l.b16 %v443
      %v500 = vunpack.c.l.b16 %v444
      %v501 = vunpack.c.l.b16 %v445
      %v502 = vunpack.c.l.b16 %v446
      %v503 = vunpack.c.l.b16 %v447
      %v504 = vpack.c.b16 %v489, %v488
      %v505 = vpack.c.b16 %v491, %v490
      %v506 = vpack.c.b16 %v493, %v492
      %v507 = vpack.c.b16 %v495, %v494
      %v508 = vpack.c.b16 %v497, %v496
      %v509 = vpack.c.b16 %v499, %v498
      %v510 = vpack.c.b16 %v501, %v500
      %v511 = vpack.c.b16 %v503, %v502
      %520 = vmatprep.subr.bf16.mxu0 0
      %521 = vmatpush1.bf16.msra.mxu0 %v504
      %522 = vmatprep.subr.bf16.mxu0 0
      %523 = vmatpush1.bf16.msra.mxu0 %v505
      %524 = vmatprep.subr.bf16.mxu0 0
      %525 = vmatpush1.bf16.msra.mxu0 %v506
      %526 = vmatprep.subr.bf16.mxu0 0
      %527 = vmatpush1.bf16.msra.mxu0 %v507
      %528 = vmatprep.subr.bf16.mxu0 0
      %529 = vmatpush1.bf16.msra.mxu0 %v508
      %530 = vmatprep.subr.bf16.mxu0 0
      %531 = vmatpush1.bf16.msra.mxu0 %v509
      %532 = vmatprep.subr.bf16.mxu0 0
      %533 = vmatpush1.bf16.msra.mxu0 %v510
      %534 = vmatprep.subr.bf16.mxu0 0
      %535 = vmatpush1.bf16.msra.mxu0 %v511
      %536 = vmatprep.subr.bf16.mxu0 0
      %537 = vmatpush1.bf16.msra.mxu0 0
      %538 = vmatprep.subr.bf16.mxu0 0
      %539 = vmatpush1.bf16.msra.mxu0 0
      %540 = vmatprep.subr.bf16.mxu0 0
      %541 = vmatpush1.bf16.msra.mxu0 0
      %542 = vmatprep.subr.bf16.mxu0 0
      %543 = vmatpush1.bf16.msra.mxu0 0
      %544 = vmatprep.subr.bf16.mxu0 0
      %545 = vmatpush1.bf16.msra.mxu0 0
      %546 = vmatprep.subr.bf16.mxu0 0
      %547 = vmatpush1.bf16.msra.mxu0 0
      %548 = vmatprep.subr.bf16.mxu0 0
      %549 = vmatpush1.bf16.msra.mxu0 0
      %550 = vmatprep.subr.bf16.mxu0 0
      %551 = vmatpush1.bf16.msra.mxu0 0
      %552 = vmatprep.mubr.bf16.mxu0 0
      %553 = vmatmul.mubr.bf16.gmra.mrb[0].mxu0 %v464
      %v554 = vpop.f32.mrb[0].mxu0
      %v555 = vadd.f32 0.0, %v554
      %v556 = vpop.f32.mrb[0].mxu0
      %v557 = vpop.f32.mrb[0].mxu0
      %v558 = vadd.f32 0.0, %v557
      %v559 = vpop.f32.mrb[0].mxu0
      %560 = vmatprep.mubr.bf16.mxu0 0
      %561 = vmatmul.mubr.bf16.gmra.mrb[0].mxu0 %v465
      %v562 = vpop.f32.mrb[0].mxu0
      %v563 = vadd.f32 0.0, %v562
      %v564 = vpop.f32.mrb[0].mxu0
      %v565 = vpop.f32.mrb[0].mxu0
      %v566 = vadd.f32 0.0, %v565
      %v567 = vpop.f32.mrb[0].mxu0
      %568 = vmatprep.mubr.bf16.mxu0 0
      %569 = vmatmul.mubr.bf16.gmra.mrb[0].mxu0 %v466
      %v570 = vpop.f32.mrb[0].mxu0
      %v571 = vadd.f32 0.0, %v570
      %v572 = vpop.f32.mrb[0].mxu0
      %v573 = vpop.f32.mrb[0].mxu0
      %v574 = vadd.f32 0.0, %v573
      %v575 = vpop.f32.mrb[0].mxu0
      %576 = vmatprep.mubr.bf16.mxu0 0
      %577 = vmatmul.mubr.bf16.gmra.mrb[0].mxu0 %v467
      %v578 = vpop.f32.mrb[0].mxu0
      %v579 = vadd.f32 0.0, %v578
      %v580 = vpop.f32.mrb[0].mxu0
      %v581 = vpop.f32.mrb[0].mxu0
      %v582 = vadd.f32 0.0, %v581
      %v583 = vpop.f32.mrb[0].mxu0
      %584 = vdwg.mxu0
      %v587 = vunpack.c.l.b16 %v405
      %v588 = vunpack.c.l.b16 %v406
      %v589 = vpack.c.b16 %v588, %v587
      %v607 = vunpack.c.l.b16 %v413
      %v608 = vunpack.c.l.b16 %v414
      %v609 = vunpack.c.l.b16 %v415
      %v610 = vunpack.c.l.b16 %v416
      %v611 = vunpack.c.l.b16 %v417
      %v612 = vunpack.c.l.b16 %v418
      %v613 = vunpack.c.l.b16 %v419
      %v614 = vunpack.c.l.b16 %v420
      %v615 = vunpack.c.l.b16 %v421
      %v616 = vunpack.c.l.b16 %v422
      %v617 = vunpack.c.l.b16 %v423
      %v618 = vunpack.c.l.b16 %v424
      %v619 = vunpack.c.l.b16 %v425
      %v620 = vunpack.c.l.b16 %v426
      %v621 = vunpack.c.l.b16 %v427
      %v622 = vunpack.c.l.b16 %v428
      %v623 = vpack.c.b16 %v608, %v607
      %v624 = vpack.c.b16 %v610, %v609
      %v625 = vpack.c.b16 %v612, %v611
      %v626 = vpack.c.b16 %v614, %v613
      %v627 = vpack.c.b16 %v616, %v615
      %v628 = vpack.c.b16 %v618, %v617
      %v629 = vpack.c.b16 %v620, %v619
      %v630 = vpack.c.b16 %v622, %v621
      %639 = vmatprep.subr.bf16.mxu0 0
      %640 = vmatpush1.bf16.msra.mxu0 %v623
      %641 = vmatprep.subr.bf16.mxu0 0
      %642 = vmatpush1.bf16.msra.mxu0 %v624
      %643 = vmatprep.subr.bf16.mxu0 0
      %644 = vmatpush1.bf16.msra.mxu0 %v625
      %645 = vmatprep.subr.bf16.mxu0 0
      %646 = vmatpush1.bf16.msra.mxu0 %v626
      %647 = vmatprep.subr.bf16.mxu0 0
      %648 = vmatpush1.bf16.msra.mxu0 %v627
      %649 = vmatprep.subr.bf16.mxu0 0
      %650 = vmatpush1.bf16.msra.mxu0 %v628
      %651 = vmatprep.subr.bf16.mxu0 0
      %652 = vmatpush1.bf16.msra.mxu0 %v629
      %653 = vmatprep.subr.bf16.mxu0 0
      %654 = vmatpush1.bf16.msra.mxu0 %v630
      %655 = vmatprep.subr.bf16.mxu0 0
      %656 = vmatpush1.bf16.msra.mxu0 0
      %657 = vmatprep.subr.bf16.mxu0 0
      %658 = vmatpush1.bf16.msra.mxu0 0
      %659 = vmatprep.subr.bf16.mxu0 0
      %660 = vmatpush1.bf16.msra.mxu0 0
      %661 = vmatprep.subr.bf16.mxu0 0
      %662 = vmatpush1.bf16.msra.mxu0 0
      %663 = vmatprep.subr.bf16.mxu0 0
      %664 = vmatpush1.bf16.msra.mxu0 0
      %665 = vmatprep.subr.bf16.mxu0 0
      %666 = vmatpush1.bf16.msra.mxu0 0
      %667 = vmatprep.subr.bf16.mxu0 0
      %668 = vmatpush1.bf16.msra.mxu0 0
      %669 = vmatprep.subr.bf16.mxu0 0
      %670 = vmatpush1.bf16.msra.mxu0 0
      %671 = vmatprep.mubr.bf16.mxu0 0
      %672 = vmatmul.mubr.bf16.gmra.mrb[0].mxu0 %v589
      %v673 = vpop.f32.mrb[0].mxu0
      %v674 = vadd.f32 %v555, %v673
      %v675 = vpop.f32.mrb[0].mxu0
      %v676 = vpop.f32.mrb[0].mxu0
      %v677 = vadd.f32 %v558, %v676
      %v678 = vpop.f32.mrb[0].mxu0
      %679 = vmatprep.mubr.bf16.mxu0 0
      %680 = vmatmul.mubr.bf16.gmra.mrb[0].mxu0 %v464
      %v681 = vpop.f32.mrb[0].mxu0
      %v682 = vadd.f32 %v563, %v681
      %v683 = vpop.f32.mrb[0].mxu0
      %v684 = vpop.f32.mrb[0].mxu0
      %v685 = vadd.f32 %v566, %v684
      %v686 = vpop.f32.mrb[0].mxu0
      %687 = vmatprep.mubr.bf16.mxu0 0
      %688 = vmatmul.mubr.bf16.gmra.mrb[0].mxu0 %v465
      %v689 = vpop.f32.mrb[0].mxu0
      %v690 = vadd.f32 %v571, %v689
      %v691 = vpop.f32.mrb[0].mxu0
      %v692 = vpop.f32.mrb[0].mxu0
      %v693 = vadd.f32 %v574, %v692
      %v694 = vpop.f32.mrb[0].mxu0
      %695 = vmatprep.mubr.bf16.mxu0 0
      %696 = vmatmul.mubr.bf16.gmra.mrb[0].mxu0 %v466
      %v697 = vpop.f32.mrb[0].mxu0
      %v698 = vadd.f32 %v579, %v697
      %v699 = vpop.f32.mrb[0].mxu0
      %v700 = vpop.f32.mrb[0].mxu0
      %v701 = vadd.f32 %v582, %v700
      %v702 = vpop.f32.mrb[0].mxu0
      %703 = vdwg.mxu0
      %v704 = vld [vmem:[%s363 + $0x10] sm:$0xf]
      %v705 = vld [vmem:[%s363 + $0x14] sm:$0xf]
      %v706 = vld [vmem:[%s363 + $0x18] sm:$0xf]
      %v707 = vld [vmem:[%s363 + $0x1c] sm:$0xf]
      %v708 = vld [vmem:[%s363 + $0x20] sm:$0xf]
      %v709 = vld [vmem:[%s363 + $0x24] sm:$0xf]
      %v710 = vld [vmem:[%s363 + $0x28] sm:$0xf]
      %v711 = vld [vmem:[%s363 + $0x2c] sm:$0xf]
      %s712 = scalar_lea.vmem %s3, 128
      %v713 = vld [vmem:[%s712] sm:$0xf]
      %v714 = vld [vmem:[%s712 + $0x4] sm:$0xf]
      %v715 = vld [vmem:[%s712 + $0x8] sm:$0xf]
      %v716 = vld [vmem:[%s712 + $0xc] sm:$0xf]
      %v717 = vld [vmem:[%s712 + $0x10] sm:$0xf]
      %v718 = vld [vmem:[%s712 + $0x14] sm:$0xf]
      %v719 = vld [vmem:[%s712 + $0x18] sm:$0xf]
      %v720 = vld [vmem:[%s712 + $0x1c] sm:$0xf]
      %v721 = vld [vmem:[%s712 + $0x20] sm:$0xf]
      %v722 = vld [vmem:[%s712 + $0x24] sm:$0xf]
      %v723 = vld [vmem:[%s712 + $0x28] sm:$0xf]
      %v724 = vld [vmem:[%s712 + $0x2c] sm:$0xf]
      %v725 = vld [vmem:[%s712 + $0x30] sm:$0xf]
      %v726 = vld [vmem:[%s712 + $0x34] sm:$0xf]
      %v727 = vld [vmem:[%s712 + $0x38] sm:$0xf]
      %v728 = vld [vmem:[%s712 + $0x3c] sm:$0xf]
      %v737 = vunpack.c.l.b16 %v704
      %v738 = vunpack.c.l.b16 %v705
      %v739 = vunpack.c.l.b16 %v706
      %v740 = vunpack.c.l.b16 %v707
      %v741 = vunpack.c.l.b16 %v708
      %v742 = vunpack.c.l.b16 %v709
      %v743 = vunpack.c.l.b16 %v710
      %v744 = vunpack.c.l.b16 %v711
      %v745 = vpack.c.b16 %v738, %v737
      %v746 = vpack.c.b16 %v740, %v739
      %v747 = vpack.c.b16 %v742, %v741
      %v748 = vpack.c.b16 %v744, %v743
      %v769 = vunpack.c.l.b16 %v713
      %v770 = vunpack.c.l.b16 %v714
      %v771 = vunpack.c.l.b16 %v715
      %v772 = vunpack.c.l.b16 %v716
      %v773 = vunpack.c.l.b16 %v717
      %v774 = vunpack.c.l.b16 %v718
      %v775 = vunpack.c.l.b16 %v719
      %v776 = vunpack.c.l.b16 %v720
      %v777 = vunpack.c.l.b16 %v721
      %v778 = vunpack.c.l.b16 %v722
      %v779 = vunpack.c.l.b16 %v723
      %v780 = vunpack.c.l.b16 %v724
      %v781 = vunpack.c.l.b16 %v725
      %v782 = vunpack.c.l.b16 %v726
      %v783 = vunpack.c.l.b16 %v727
      %v784 = vunpack.c.l.b16 %v728
      %v785 = vpack.c.b16 %v770, %v769
      %v786 = vpack.c.b16 %v772, %v771
      %v787 = vpack.c.b16 %v774, %v773
      %v788 = vpack.c.b16 %v776, %v775
      %v789 = vpack.c.b16 %v778, %v777
      %v790 = vpack.c.b16 %v780, %v779
      %v791 = vpack.c.b16 %v782, %v781
      %v792 = vpack.c.b16 %v784, %v783
      %801 = vmatprep.subr.bf16.mxu0 0
      %802 = vmatpush1.bf16.msra.mxu0 %v785
      %803 = vmatprep.subr.bf16.mxu0 0
      %804 = vmatpush1.bf16.msra.mxu0 %v786
      %805 = vmatprep.subr.bf16.mxu0 0
      %806 = vmatpush1.bf16.msra.mxu0 %v787
      %807 = vmatprep.subr.bf16.mxu0 0
      %808 = vmatpush1.bf16.msra.mxu0 %v788
      %809 = vmatprep.subr.bf16.mxu0 0
      %810 = vmatpush1.bf16.msra.mxu0 %v789
      %811 = vmatprep.subr.bf16.mxu0 0
      %812 = vmatpush1.bf16.msra.mxu0 %v790
      %813 = vmatprep.subr.bf16.mxu0 0
      %814 = vmatpush1.bf16.msra.mxu0 %v791
      %815 = vmatprep.subr.bf16.mxu0 0
      %816 = vmatpush1.bf16.msra.mxu0 %v792
      %817 = vmatprep.subr.bf16.mxu0 0
      %818 = vmatpush1.bf16.msra.mxu0 0
      %819 = vmatprep.subr.bf16.mxu0 0
      %820 = vmatpush1.bf16.msra.mxu0 0
      %821 = vmatprep.subr.bf16.mxu0 0
      %822 = vmatpush1.bf16.msra.mxu0 0
      %823 = vmatprep.subr.bf16.mxu0 0
      %824 = vmatpush1.bf16.msra.mxu0 0
      %825 = vmatprep.subr.bf16.mxu0 0
      %826 = vmatpush1.bf16.msra.mxu0 0
      %827 = vmatprep.subr.bf16.mxu0 0
      %828 = vmatpush1.bf16.msra.mxu0 0
      %829 = vmatprep.subr.bf16.mxu0 0
      %830 = vmatpush1.bf16.msra.mxu0 0
      %831 = vmatprep.subr.bf16.mxu0 0
      %832 = vmatpush1.bf16.msra.mxu0 0
      %833 = vmatprep.mubr.bf16.mxu0 0
      %834 = vmatmul.mubr.bf16.gmra.mrb[0].mxu0 %v745
      %v835 = vpop.f32.mrb[0].mxu0
      %v836 = vadd.f32 0.0, %v835
      %v837 = vpop.f32.mrb[0].mxu0
      %v838 = vpop.f32.mrb[0].mxu0
      %v839 = vadd.f32 0.0, %v838
      %v840 = vpop.f32.mrb[0].mxu0
      %841 = vmatprep.mubr.bf16.mxu0 0
      %842 = vmatmul.mubr.bf16.gmra.mrb[0].mxu0 %v746
      %v843 = vpop.f32.mrb[0].mxu0
      %v844 = vadd.f32 0.0, %v843
      %v845 = vpop.f32.mrb[0].mxu0
      %v846 = vpop.f32.mrb[0].mxu0
      %v847 = vadd.f32 0.0, %v846
      %v848 = vpop.f32.mrb[0].mxu0
      %849 = vmatprep.mubr.bf16.mxu0 0
      %850 = vmatmul.mubr.bf16.gmra.mrb[0].mxu0 %v747
      %v851 = vpop.f32.mrb[0].mxu0
      %v852 = vadd.f32 0.0, %v851
      %v853 = vpop.f32.mrb[0].mxu0
      %v854 = vpop.f32.mrb[0].mxu0
      %v855 = vadd.f32 0.0, %v854
      %v856 = vpop.f32.mrb[0].mxu0
      %857 = vmatprep.mubr.bf16.mxu0 0
      %858 = vmatmul.mubr.bf16.gmra.mrb[0].mxu0 %v748
      %v859 = vpop.f32.mrb[0].mxu0
      %v860 = vadd.f32 0.0, %v859
      %v861 = vpop.f32.mrb[0].mxu0
      %v862 = vpop.f32.mrb[0].mxu0
      %v863 = vadd.f32 0.0, %v862
      %v864 = vpop.f32.mrb[0].mxu0
      %865 = vdwg.mxu0
      %v866 = vadd.f32 %v674, %v836
      %v867 = vadd.f32 %v677, %v839
      %v868 = vadd.f32 %v682, %v844
      %v869 = vadd.f32 %v685, %v847
      %v870 = vadd.f32 %v690, %v852
      %v871 = vadd.f32 %v693, %v855
      %v872 = vadd.f32 %v698, %v860
      %v873 = vadd.f32 %v701, %v863
      %v874 = vld [vmem:[%s373] sm:$0xf]
      %v875 = vld [vmem:[%s373 + $0x4] sm:$0xf]
      %v876 = vld [vmem:[%s373 + $0x8] sm:$0xf]
      %v877 = vld [vmem:[%s373 + $0xc] sm:$0xf]
      %v878 = vld [vmem:[%s373 + $0x10] sm:$0xf]
      %v879 = vld [vmem:[%s373 + $0x14] sm:$0xf]
      %v880 = vld [vmem:[%s373 + $0x18] sm:$0xf]
      %v881 = vld [vmem:[%s373 + $0x1c] sm:$0xf]
      %s882 = scalar_lea.vmem %s3, 192
      %v883 = vld [vmem:[%s882] sm:$0xf]
      %v884 = vld [vmem:[%s882 + $0x4] sm:$0xf]
      %v885 = vld [vmem:[%s882 + $0x8] sm:$0xf]
      %v886 = vld [vmem:[%s882 + $0xc] sm:$0xf]
      %v887 = vld [vmem:[%s882 + $0x10] sm:$0xf]
      %v888 = vld [vmem:[%s882 + $0x14] sm:$0xf]
      %v889 = vld [vmem:[%s882 + $0x18] sm:$0xf]
      %v890 = vld [vmem:[%s882 + $0x1c] sm:$0xf]
      %v891 = vld [vmem:[%s882 + $0x20] sm:$0xf]
      %v892 = vld [vmem:[%s882 + $0x24] sm:$0xf]
      %v893 = vld [vmem:[%s882 + $0x28] sm:$0xf]
      %v894 = vld [vmem:[%s882 + $0x2c] sm:$0xf]
      %v895 = vld [vmem:[%s882 + $0x30] sm:$0xf]
      %v896 = vld [vmem:[%s882 + $0x34] sm:$0xf]
      %v897 = vld [vmem:[%s882 + $0x38] sm:$0xf]
      %v898 = vld [vmem:[%s882 + $0x3c] sm:$0xf]
      %v907 = vunpack.c.l.b16 %v874
      %v908 = vunpack.c.l.b16 %v875
      %v909 = vunpack.c.l.b16 %v876
      %v910 = vunpack.c.l.b16 %v877
      %v911 = vunpack.c.l.b16 %v878
      %v912 = vunpack.c.l.b16 %v879
      %v913 = vunpack.c.l.b16 %v880
      %v914 = vunpack.c.l.b16 %v881
      %v915 = vpack.c.b16 %v908, %v907
      %v916 = vpack.c.b16 %v910, %v909
      %v917 = vpack.c.b16 %v912, %v911
      %v918 = vpack.c.b16 %v914, %v913
      %v939 = vunpack.c.l.b16 %v883
      %v940 = vunpack.c.l.b16 %v884
      %v941 = vunpack.c.l.b16 %v885
      %v942 = vunpack.c.l.b16 %v886
      %v943 = vunpack.c.l.b16 %v887
      %v944 = vunpack.c.l.b16 %v888
      %v945 = vunpack.c.l.b16 %v889
      %v946 = vunpack.c.l.b16 %v890
      %v947 = vunpack.c.l.b16 %v891
      %v948 = vunpack.c.l.b16 %v892
      %v949 = vunpack.c.l.b16 %v893
      %v950 = vunpack.c.l.b16 %v894
      %v951 = vunpack.c.l.b16 %v895
      %v952 = vunpack.c.l.b16 %v896
      %v953 = vunpack.c.l.b16 %v897
      %v954 = vunpack.c.l.b16 %v898
      %v955 = vpack.c.b16 %v940, %v939
      %v956 = vpack.c.b16 %v942, %v941
      %v957 = vpack.c.b16 %v944, %v943
      %v958 = vpack.c.b16 %v946, %v945
      %v959 = vpack.c.b16 %v948, %v947
      %v960 = vpack.c.b16 %v950, %v949
      %v961 = vpack.c.b16 %v952, %v951
      %v962 = vpack.c.b16 %v954, %v953
      %971 = vmatprep.subr.bf16.mxu0 0
      %972 = vmatpush1.bf16.msra.mxu0 %v955
      %973 = vmatprep.subr.bf16.mxu0 0
      %974 = vmatpush1.bf16.msra.mxu0 %v956
      %975 = vmatprep.subr.bf16.mxu0 0
      %976 = vmatpush1.bf16.msra.mxu0 %v957
      %977 = vmatprep.subr.bf16.mxu0 0
      %978 = vmatpush1.bf16.msra.mxu0 %v958
      %979 = vmatprep.subr.bf16.mxu0 0
      %980 = vmatpush1.bf16.msra.mxu0 %v959
      %981 = vmatprep.subr.bf16.mxu0 0
      %982 = vmatpush1.bf16.msra.mxu0 %v960
      %983 = vmatprep.subr.bf16.mxu0 0
      %984 = vmatpush1.bf16.msra.mxu0 %v961
      %985 = vmatprep.subr.bf16.mxu0 0
      %986 = vmatpush1.bf16.msra.mxu0 %v962
      %987 = vmatprep.subr.bf16.mxu0 0
      %988 = vmatpush1.bf16.msra.mxu0 0
      %989 = vmatprep.subr.bf16.mxu0 0
      %990 = vmatpush1.bf16.msra.mxu0 0
      %991 = vmatprep.subr.bf16.mxu0 0
      %992 = vmatpush1.bf16.msra.mxu0 0
      %993 = vmatprep.subr.bf16.mxu0 0
      %994 = vmatpush1.bf16.msra.mxu0 0
      %995 = vmatprep.subr.bf16.mxu0 0
      %996 = vmatpush1.bf16.msra.mxu0 0
      %997 = vmatprep.subr.bf16.mxu0 0
      %998 = vmatpush1.bf16.msra.mxu0 0
      %999 = vmatprep.subr.bf16.mxu0 0
      %1000 = vmatpush1.bf16.msra.mxu0 0
      %1001 = vmatprep.subr.bf16.mxu0 0
      %1002 = vmatpush1.bf16.msra.mxu0 0
      %1003 = vmatprep.mubr.bf16.mxu0 0
      %1004 = vmatmul.mubr.bf16.gmra.mrb[0].mxu0 %v915
      %v1005 = vpop.f32.mrb[0].mxu0
      %v1006 = vadd.f32 0.0, %v1005
      %v1007 = vpop.f32.mrb[0].mxu0
      %v1008 = vpop.f32.mrb[0].mxu0
      %v1009 = vadd.f32 0.0, %v1008
      %v1010 = vpop.f32.mrb[0].mxu0
      %1011 = vmatprep.mubr.bf16.mxu0 0
      %1012 = vmatmul.mubr.bf16.gmra.mrb[0].mxu0 %v916
      %v1013 = vpop.f32.mrb[0].mxu0
      %v1014 = vadd.f32 0.0, %v1013
      %v1015 = vpop.f32.mrb[0].mxu0
      %v1016 = vpop.f32.mrb[0].mxu0
      %v1017 = vadd.f32 0.0, %v1016
      %v1018 = vpop.f32.mrb[0].mxu0
      %1019 = vmatprep.mubr.bf16.mxu0 0
      %1020 = vmatmul.mubr.bf16.gmra.mrb[0].mxu0 %v917
      %v1021 = vpop.f32.mrb[0].mxu0
      %v1022 = vadd.f32 0.0, %v1021
      %v1023 = vpop.f32.mrb[0].mxu0
      %v1024 = vpop.f32.mrb[0].mxu0
      %v1025 = vadd.f32 0.0, %v1024
      %v1026 = vpop.f32.mrb[0].mxu0
      %1027 = vmatprep.mubr.bf16.mxu0 0
      %1028 = vmatmul.mubr.bf16.gmra.mrb[0].mxu0 %v918
      %v1029 = vpop.f32.mrb[0].mxu0
      %v1030 = vadd.f32 0.0, %v1029
      %v1031 = vpop.f32.mrb[0].mxu0
      %v1032 = vpop.f32.mrb[0].mxu0
      %v1033 = vadd.f32 0.0, %v1032
      %v1034 = vpop.f32.mrb[0].mxu0
      %1035 = vdwg.mxu0
      %v1036 = vadd.f32 %v866, %v1006
      %v1037 = vadd.f32 %v867, %v1009
      %v1038 = vadd.f32 %v868, %v1014
      %v1039 = vadd.f32 %v869, %v1017
      %v1040 = vadd.f32 %v870, %v1022
      %v1041 = vadd.f32 %v871, %v1025
      %v1042 = vadd.f32 %v872, %v1030
      %v1043 = vadd.f32 %v873, %v1033
      %v1044 = vld [vmem:[%s373 + $0x8] sm:$0xf]
      %v1045 = vld [vmem:[%s373 + $0xc] sm:$0xf]
      %v1046 = vld [vmem:[%s373 + $0x10] sm:$0xf]
      %v1047 = vld [vmem:[%s373 + $0x14] sm:$0xf]
      %v1048 = vld [vmem:[%s373 + $0x18] sm:$0xf]
      %v1049 = vld [vmem:[%s373 + $0x1c] sm:$0xf]
      %v1050 = vld [vmem:[%s373 + $0x20] sm:$0xf]
      %v1051 = vld [vmem:[%s373 + $0x24] sm:$0xf]
      %s1052 = scalar_lea.vmem %s3, 256
      %v1053 = vld [vmem:[%s1052] sm:$0xf]
      %v1054 = vld [vmem:[%s1052 + $0x4] sm:$0xf]
      %v1055 = vld [vmem:[%s1052 + $0x8] sm:$0xf]
      %v1056 = vld [vmem:[%s1052 + $0xc] sm:$0xf]
      %v1057 = vld [vmem:[%s1052 + $0x10] sm:$0xf]
      %v1058 = vld [vmem:[%s1052 + $0x14] sm:$0xf]
      %v1059 = vld [vmem:[%s1052 + $0x18] sm:$0xf]
      %v1060 = vld [vmem:[%s1052 + $0x1c] sm:$0xf]
      %v1061 = vld [vmem:[%s1052 + $0x20] sm:$0xf]
      %v1062 = vld [vmem:[%s1052 + $0x24] sm:$0xf]
      %v1063 = vld [vmem:[%s1052 + $0x28] sm:$0xf]
      %v1064 = vld [vmem:[%s1052 + $0x2c] sm:$0xf]
      %v1065 = vld [vmem:[%s1052 + $0x30] sm:$0xf]
      %v1066 = vld [vmem:[%s1052 + $0x34] sm:$0xf]
      %v1067 = vld [vmem:[%s1052 + $0x38] sm:$0xf]
      %v1068 = vld [vmem:[%s1052 + $0x3c] sm:$0xf]
      %v1077 = vunpack.c.l.b16 %v1044
      %v1078 = vunpack.c.l.b16 %v1045
      %v1079 = vunpack.c.l.b16 %v1046
      %v1080 = vunpack.c.l.b16 %v1047
      %v1081 = vunpack.c.l.b16 %v1048
      %v1082 = vunpack.c.l.b16 %v1049
      %v1083 = vunpack.c.l.b16 %v1050
      %v1084 = vunpack.c.l.b16 %v1051
      %v1085 = vpack.c.b16 %v1078, %v1077
      %v1086 = vpack.c.b16 %v1080, %v1079
      %v1087 = vpack.c.b16 %v1082, %v1081
      %v1088 = vpack.c.b16 %v1084, %v1083
      %v1109 = vunpack.c.l.b16 %v1053
      %v1110 = vunpack.c.l.b16 %v1054
      %v1111 = vunpack.c.l.b16 %v1055
      %v1112 = vunpack.c.l.b16 %v1056
      %v1113 = vunpack.c.l.b16 %v1057
      %v1114 = vunpack.c.l.b16 %v1058
      %v1115 = vunpack.c.l.b16 %v1059
      %v1116 = vunpack.c.l.b16 %v1060
      %v1117 = vunpack.c.l.b16 %v1061
      %v1118 = vunpack.c.l.b16 %v1062
      %v1119 = vunpack.c.l.b16 %v1063
      %v1120 = vunpack.c.l.b16 %v1064
      %v1121 = vunpack.c.l.b16 %v1065
      %v1122 = vunpack.c.l.b16 %v1066
      %v1123 = vunpack.c.l.b16 %v1067
      %v1124 = vunpack.c.l.b16 %v1068
      %v1125 = vpack.c.b16 %v1110, %v1109
      %v1126 = vpack.c.b16 %v1112, %v1111
      %v1127 = vpack.c.b16 %v1114, %v1113
      %v1128 = vpack.c.b16 %v1116, %v1115
      %v1129 = vpack.c.b16 %v1118, %v1117
      %v1130 = vpack.c.b16 %v1120, %v1119
      %v1131 = vpack.c.b16 %v1122, %v1121
      %v1132 = vpack.c.b16 %v1124, %v1123
      %1141 = vmatprep.subr.bf16.mxu0 0
      %1142 = vmatpush1.bf16.msra.mxu0 %v1125
      %1143 = vmatprep.subr.bf16.mxu0 0
      %1144 = vmatpush1.bf16.msra.mxu0 %v1126
      %1145 = vmatprep.subr.bf16.mxu0 0
      %1146 = vmatpush1.bf16.msra.mxu0 %v1127
      %1147 = vmatprep.subr.bf16.mxu0 0
      %1148 = vmatpush1.bf16.msra.mxu0 %v1128
      %1149 = vmatprep.subr.bf16.mxu0 0
      %1150 = vmatpush1.bf16.msra.mxu0 %v1129
      %1151 = vmatprep.subr.bf16.mxu0 0
      %1152 = vmatpush1.bf16.msra.mxu0 %v1130
      %1153 = vmatprep.subr.bf16.mxu0 0
      %1154 = vmatpush1.bf16.msra.mxu0 %v1131
      %1155 = vmatprep.subr.bf16.mxu0 0
      %1156 = vmatpush1.bf16.msra.mxu0 %v1132
      %1157 = vmatprep.subr.bf16.mxu0 0
      %1158 = vmatpush1.bf16.msra.mxu0 0
      %1159 = vmatprep.subr.bf16.mxu0 0
      %1160 = vmatpush1.bf16.msra.mxu0 0
      %1161 = vmatprep.subr.bf16.mxu0 0
      %1162 = vmatpush1.bf16.msra.mxu0 0
      %1163 = vmatprep.subr.bf16.mxu0 0
      %1164 = vmatpush1.bf16.msra.mxu0 0
      %1165 = vmatprep.subr.bf16.mxu0 0
      %1166 = vmatpush1.bf16.msra.mxu0 0
      %1167 = vmatprep.subr.bf16.mxu0 0
      %1168 = vmatpush1.bf16.msra.mxu0 0
      %1169 = vmatprep.subr.bf16.mxu0 0
      %1170 = vmatpush1.bf16.msra.mxu0 0
      %1171 = vmatprep.subr.bf16.mxu0 0
      %1172 = vmatpush1.bf16.msra.mxu0 0
      %1173 = vmatprep.mubr.bf16.mxu0 0
      %1174 = vmatmul.mubr.bf16.gmra.mrb[0].mxu0 %v1085
      %v1175 = vpop.f32.mrb[0].mxu0
      %v1176 = vadd.f32 0.0, %v1175
      %v1177 = vpop.f32.mrb[0].mxu0
      %v1178 = vpop.f32.mrb[0].mxu0
      %v1179 = vadd.f32 0.0, %v1178
      %v1180 = vpop.f32.mrb[0].mxu0
      %1181 = vmatprep.mubr.bf16.mxu0 0
      %1182 = vmatmul.mubr.bf16.gmra.mrb[0].mxu0 %v1086
      %v1183 = vpop.f32.mrb[0].mxu0
      %v1184 = vadd.f32 0.0, %v1183
      %v1185 = vpop.f32.mrb[0].mxu0
      %v1186 = vpop.f32.mrb[0].mxu0
      %v1187 = vadd.f32 0.0, %v1186
      %v1188 = vpop.f32.mrb[0].mxu0
      %1189 = vmatprep.mubr.bf16.mxu0 0
      %1190 = vmatmul.mubr.bf16.gmra.mrb[0].mxu0 %v1087
      %v1191 = vpop.f32.mrb[0].mxu0
      %v1192 = vadd.f32 0.0, %v1191
      %v1193 = vpop.f32.mrb[0].mxu0
      %v1194 = vpop.f32.mrb[0].mxu0
      %v1195 = vadd.f32 0.0, %v1194
      %v1196 = vpop.f32.mrb[0].mxu0
      %1197 = vmatprep.mubr.bf16.mxu0 0
      %1198 = vmatmul.mubr.bf16.gmra.mrb[0].mxu0 %v1088
      %v1199 = vpop.f32.mrb[0].mxu0
      %v1200 = vadd.f32 0.0, %v1199
      %v1201 = vpop.f32.mrb[0].mxu0
      %v1202 = vpop.f32.mrb[0].mxu0
      %v1203 = vadd.f32 0.0, %v1202
      %v1204 = vpop.f32.mrb[0].mxu0
      %1205 = vdwg.mxu0
      %v1206 = vadd.f32 %v1036, %v1176
      %v1207 = vadd.f32 %v1037, %v1179
      %v1208 = vadd.f32 %v1038, %v1184
      %v1209 = vadd.f32 %v1039, %v1187
      %v1210 = vadd.f32 %v1040, %v1192
      %v1211 = vadd.f32 %v1041, %v1195
      %v1212 = vadd.f32 %v1042, %v1200
      %v1213 = vadd.f32 %v1043, %v1203
      %v1214 = vld [vmem:[%s373 + $0x10] sm:$0xf]
      %v1215 = vld [vmem:[%s373 + $0x14] sm:$0xf]
      %v1216 = vld [vmem:[%s373 + $0x18] sm:$0xf]
      %v1217 = vld [vmem:[%s373 + $0x1c] sm:$0xf]
      %v1218 = vld [vmem:[%s373 + $0x20] sm:$0xf]
      %v1219 = vld [vmem:[%s373 + $0x24] sm:$0xf]
      %v1220 = vld [vmem:[%s373 + $0x28] sm:$0xf]
      %v1221 = vld [vmem:[%s373 + $0x2c] sm:$0xf]
      %s1222 = scalar_lea.vmem %s3, 320
      %v1223 = vld [vmem:[%s1222] sm:$0xf]
      %v1224 = vld [vmem:[%s1222 + $0x4] sm:$0xf]
      %v1225 = vld [vmem:[%s1222 + $0x8] sm:$0xf]
      %v1226 = vld [vmem:[%s1222 + $0xc] sm:$0xf]
      %v1227 = vld [vmem:[%s1222 + $0x10] sm:$0xf]
      %v1228 = vld [vmem:[%s1222 + $0x14] sm:$0xf]
      %v1229 = vld [vmem:[%s1222 + $0x18] sm:$0xf]
      %v1230 = vld [vmem:[%s1222 + $0x1c] sm:$0xf]
      %v1231 = vld [vmem:[%s1222 + $0x20] sm:$0xf]
      %v1232 = vld [vmem:[%s1222 + $0x24] sm:$0xf]
      %v1233 = vld [vmem:[%s1222 + $0x28] sm:$0xf]
      %v1234 = vld [vmem:[%s1222 + $0x2c] sm:$0xf]
      %v1235 = vld [vmem:[%s1222 + $0x30] sm:$0xf]
      %v1236 = vld [vmem:[%s1222 + $0x34] sm:$0xf]
      %v1237 = vld [vmem:[%s1222 + $0x38] sm:$0xf]
      %v1238 = vld [vmem:[%s1222 + $0x3c] sm:$0xf]
      %v1247 = vunpack.c.l.b16 %v1214
      %v1248 = vunpack.c.l.b16 %v1215
      %v1249 = vunpack.c.l.b16 %v1216
      %v1250 = vunpack.c.l.b16 %v1217
      %v1251 = vunpack.c.l.b16 %v1218
      %v1252 = vunpack.c.l.b16 %v1219
      %v1253 = vunpack.c.l.b16 %v1220
      %v1254 = vunpack.c.l.b16 %v1221
      %v1255 = vpack.c.b16 %v1248, %v1247
      %v1256 = vpack.c.b16 %v1250, %v1249
      %v1257 = vpack.c.b16 %v1252, %v1251
      %v1258 = vpack.c.b16 %v1254, %v1253
      %v1279 = vunpack.c.l.b16 %v1223
      %v1280 = vunpack.c.l.b16 %v1224
      %v1281 = vunpack.c.l.b16 %v1225
      %v1282 = vunpack.c.l.b16 %v1226
      %v1283 = vunpack.c.l.b16 %v1227
      %v1284 = vunpack.c.l.b16 %v1228
      %v1285 = vunpack.c.l.b16 %v1229
      %v1286 = vunpack.c.l.b16 %v1230
      %v1287 = vunpack.c.l.b16 %v1231
      %v1288 = vunpack.c.l.b16 %v1232
      %v1289 = vunpack.c.l.b16 %v1233
      %v1290 = vunpack.c.l.b16 %v1234
      %v1291 = vunpack.c.l.b16 %v1235
      %v1292 = vunpack.c.l.b16 %v1236
      %v1293 = vunpack.c.l.b16 %v1237
      %v1294 = vunpack.c.l.b16 %v1238
      %v1295 = vpack.c.b16 %v1280, %v1279
      %v1296 = vpack.c.b16 %v1282, %v1281
      %v1297 = vpack.c.b16 %v1284, %v1283
      %v1298 = vpack.c.b16 %v1286, %v1285
      %v1299 = vpack.c.b16 %v1288, %v1287
      %v1300 = vpack.c.b16 %v1290, %v1289
      %v1301 = vpack.c.b16 %v1292, %v1291
      %v1302 = vpack.c.b16 %v1294, %v1293
      %1311 = vmatprep.subr.bf16.mxu0 0
      %1312 = vmatpush1.bf16.msra.mxu0 %v1295
      %1313 = vmatprep.subr.bf16.mxu0 0
      %1314 = vmatpush1.bf16.msra.mxu0 %v1296
      %1315 = vmatprep.subr.bf16.mxu0 0
      %1316 = vmatpush1.bf16.msra.mxu0 %v1297
      %1317 = vmatprep.subr.bf16.mxu0 0
      %1318 = vmatpush1.bf16.msra.mxu0 %v1298
      %1319 = vmatprep.subr.bf16.mxu0 0
      %1320 = vmatpush1.bf16.msra.mxu0 %v1299
      %1321 = vmatprep.subr.bf16.mxu0 0
      %1322 = vmatpush1.bf16.msra.mxu0 %v1300
      %1323 = vmatprep.subr.bf16.mxu0 0
      %1324 = vmatpush1.bf16.msra.mxu0 %v1301
      %1325 = vmatprep.subr.bf16.mxu0 0
      %1326 = vmatpush1.bf16.msra.mxu0 %v1302
      %1327 = vmatprep.subr.bf16.mxu0 0
      %1328 = vmatpush1.bf16.msra.mxu0 0
      %1329 = vmatprep.subr.bf16.mxu0 0
      %1330 = vmatpush1.bf16.msra.mxu0 0
      %1331 = vmatprep.subr.bf16.mxu0 0
      %1332 = vmatpush1.bf16.msra.mxu0 0
      %1333 = vmatprep.subr.bf16.mxu0 0
      %1334 = vmatpush1.bf16.msra.mxu0 0
      %1335 = vmatprep.subr.bf16.mxu0 0
      %1336 = vmatpush1.bf16.msra.mxu0 0
      %1337 = vmatprep.subr.bf16.mxu0 0
      %1338 = vmatpush1.bf16.msra.mxu0 0
      %1339 = vmatprep.subr.bf16.mxu0 0
      %1340 = vmatpush1.bf16.msra.mxu0 0
      %1341 = vmatprep.subr.bf16.mxu0 0
      %1342 = vmatpush1.bf16.msra.mxu0 0
      %1343 = vmatprep.mubr.bf16.mxu0 0
      %1344 = vmatmul.mubr.bf16.gmra.mrb[0].mxu0 %v1255
      %v1345 = vpop.f32.mrb[0].mxu0
      %v1346 = vadd.f32 0.0, %v1345
      %v1347 = vpop.f32.mrb[0].mxu0
      %v1348 = vpop.f32.mrb[0].mxu0
      %v1349 = vadd.f32 0.0, %v1348
      %v1350 = vpop.f32.mrb[0].mxu0
      %1351 = vmatprep.mubr.bf16.mxu0 0
      %1352 = vmatmul.mubr.bf16.gmra.mrb[0].mxu0 %v1256
      %v1353 = vpop.f32.mrb[0].mxu0
      %v1354 = vadd.f32 0.0, %v1353
      %v1355 = vpop.f32.mrb[0].mxu0
      %v1356 = vpop.f32.mrb[0].mxu0
      %v1357 = vadd.f32 0.0, %v1356
      %v1358 = vpop.f32.mrb[0].mxu0
      %1359 = vmatprep.mubr.bf16.mxu0 0
      %1360 = vmatmul.mubr.bf16.gmra.mrb[0].mxu0 %v1257
      %v1361 = vpop.f32.mrb[0].mxu0
      %v1362 = vadd.f32 0.0, %v1361
      %v1363 = vpop.f32.mrb[0].mxu0
      %v1364 = vpop.f32.mrb[0].mxu0
      %v1365 = vadd.f32 0.0, %v1364
      %v1366 = vpop.f32.mrb[0].mxu0
      %1367 = vmatprep.mubr.bf16.mxu0 0
      %1368 = vmatmul.mubr.bf16.gmra.mrb[0].mxu0 %v1258
      %v1369 = vpop.f32.mrb[0].mxu0
      %v1370 = vadd.f32 0.0, %v1369
      %v1371 = vpop.f32.mrb[0].mxu0
      %v1372 = vpop.f32.mrb[0].mxu0
      %v1373 = vadd.f32 0.0, %v1372
      %v1374 = vpop.f32.mrb[0].mxu0
      %1375 = vdwg.mxu0
      %v1376 = vadd.f32 %v1206, %v1346
      %v1377 = vadd.f32 %v1207, %v1349
      %v1378 = vadd.f32 %v1208, %v1354
      %v1379 = vadd.f32 %v1209, %v1357
      %v1380 = vadd.f32 %v1210, %v1362
      %v1381 = vadd.f32 %v1211, %v1365
      %v1382 = vadd.f32 %v1212, %v1370
      %v1383 = vadd.f32 %v1213, %v1373
      %v1384 = vld [vmem:[%s384] sm:$0xf]
      %v1385 = vld [vmem:[%s384 + $0x4] sm:$0xf]
      %v1386 = vld [vmem:[%s384 + $0x8] sm:$0xf]
      %v1387 = vld [vmem:[%s384 + $0xc] sm:$0xf]
      %v1388 = vld [vmem:[%s384 + $0x10] sm:$0xf]
      %v1389 = vld [vmem:[%s384 + $0x14] sm:$0xf]
      %v1390 = vld [vmem:[%s384 + $0x18] sm:$0xf]
      %v1391 = vld [vmem:[%s384 + $0x1c] sm:$0xf]
      %s1392 = scalar_lea.vmem %s3, 384
      %v1393 = vld [vmem:[%s1392] sm:$0xf]
      %v1394 = vld [vmem:[%s1392 + $0x4] sm:$0xf]
      %v1395 = vld [vmem:[%s1392 + $0x8] sm:$0xf]
      %v1396 = vld [vmem:[%s1392 + $0xc] sm:$0xf]
      %v1397 = vld [vmem:[%s1392 + $0x10] sm:$0xf]
      %v1398 = vld [vmem:[%s1392 + $0x14] sm:$0xf]
      %v1399 = vld [vmem:[%s1392 + $0x18] sm:$0xf]
      %v1400 = vld [vmem:[%s1392 + $0x1c] sm:$0xf]
      %v1401 = vld [vmem:[%s1392 + $0x20] sm:$0xf]
      %v1402 = vld [vmem:[%s1392 + $0x24] sm:$0xf]
      %v1403 = vld [vmem:[%s1392 + $0x28] sm:$0xf]
      %v1404 = vld [vmem:[%s1392 + $0x2c] sm:$0xf]
      %v1405 = vld [vmem:[%s1392 + $0x30] sm:$0xf]
      %v1406 = vld [vmem:[%s1392 + $0x34] sm:$0xf]
      %v1407 = vld [vmem:[%s1392 + $0x38] sm:$0xf]
      %v1408 = vld [vmem:[%s1392 + $0x3c] sm:$0xf]
      %v1417 = vunpack.c.l.b16 %v1384
      %v1418 = vunpack.c.l.b16 %v1385
      %v1419 = vunpack.c.l.b16 %v1386
      %v1420 = vunpack.c.l.b16 %v1387
      %v1421 = vunpack.c.l.b16 %v1388
      %v1422 = vunpack.c.l.b16 %v1389
      %v1423 = vunpack.c.l.b16 %v1390
      %v1424 = vunpack.c.l.b16 %v1391
      %v1425 = vpack.c.b16 %v1418, %v1417
      %v1426 = vpack.c.b16 %v1420, %v1419
      %v1427 = vpack.c.b16 %v1422, %v1421
      %v1428 = vpack.c.b16 %v1424, %v1423
      %v1449 = vunpack.c.l.b16 %v1393
      %v1450 = vunpack.c.l.b16 %v1394
      %v1451 = vunpack.c.l.b16 %v1395
      %v1452 = vunpack.c.l.b16 %v1396
      %v1453 = vunpack.c.l.b16 %v1397
      %v1454 = vunpack.c.l.b16 %v1398
      %v1455 = vunpack.c.l.b16 %v1399
      %v1456 = vunpack.c.l.b16 %v1400
      %v1457 = vunpack.c.l.b16 %v1401
      %v1458 = vunpack.c.l.b16 %v1402
      %v1459 = vunpack.c.l.b16 %v1403
      %v1460 = vunpack.c.l.b16 %v1404
      %v1461 = vunpack.c.l.b16 %v1405
      %v1462 = vunpack.c.l.b16 %v1406
      %v1463 = vunpack.c.l.b16 %v1407
      %v1464 = vunpack.c.l.b16 %v1408
      %v1465 = vpack.c.b16 %v1450, %v1449
      %v1466 = vpack.c.b16 %v1452, %v1451
      %v1467 = vpack.c.b16 %v1454, %v1453
      %v1468 = vpack.c.b16 %v1456, %v1455
      %v1469 = vpack.c.b16 %v1458, %v1457
      %v1470 = vpack.c.b16 %v1460, %v1459
      %v1471 = vpack.c.b16 %v1462, %v1461
      %v1472 = vpack.c.b16 %v1464, %v1463
      %1481 = vmatprep.subr.bf16.mxu0 0
      %1482 = vmatpush1.bf16.msra.mxu0 %v1465
      %1483 = vmatprep.subr.bf16.mxu0 0
      %1484 = vmatpush1.bf16.msra.mxu0 %v1466
      %1485 = vmatprep.subr.bf16.mxu0 0
      %1486 = vmatpush1.bf16.msra.mxu0 %v1467
      %1487 = vmatprep.subr.bf16.mxu0 0
      %1488 = vmatpush1.bf16.msra.mxu0 %v1468
      %1489 = vmatprep.subr.bf16.mxu0 0
      %1490 = vmatpush1.bf16.msra.mxu0 %v1469
      %1491 = vmatprep.subr.bf16.mxu0 0
      %1492 = vmatpush1.bf16.msra.mxu0 %v1470
      %1493 = vmatprep.subr.bf16.mxu0 0
      %1494 = vmatpush1.bf16.msra.mxu0 %v1471
      %1495 = vmatprep.subr.bf16.mxu0 0
      %1496 = vmatpush1.bf16.msra.mxu0 %v1472
      %1497 = vmatprep.subr.bf16.mxu0 0
      %1498 = vmatpush1.bf16.msra.mxu0 0
      %1499 = vmatprep.subr.bf16.mxu0 0
      %1500 = vmatpush1.bf16.msra.mxu0 0
      %1501 = vmatprep.subr.bf16.mxu0 0
      %1502 = vmatpush1.bf16.msra.mxu0 0
      %1503 = vmatprep.subr.bf16.mxu0 0
      %1504 = vmatpush1.bf16.msra.mxu0 0
      %1505 = vmatprep.subr.bf16.mxu0 0
      %1506 = vmatpush1.bf16.msra.mxu0 0
      %1507 = vmatprep.subr.bf16.mxu0 0
      %1508 = vmatpush1.bf16.msra.mxu0 0
      %1509 = vmatprep.subr.bf16.mxu0 0
      %1510 = vmatpush1.bf16.msra.mxu0 0
      %1511 = vmatprep.subr.bf16.mxu0 0
      %1512 = vmatpush1.bf16.msra.mxu0 0
      %1513 = vmatprep.mubr.bf16.mxu0 0
      %1514 = vmatmul.mubr.bf16.gmra.mrb[0].mxu0 %v1425
      %v1515 = vpop.f32.mrb[0].mxu0
      %v1516 = vadd.f32 0.0, %v1515
      %v1517 = vpop.f32.mrb[0].mxu0
      %v1518 = vpop.f32.mrb[0].mxu0
      %v1519 = vadd.f32 0.0, %v1518
      %v1520 = vpop.f32.mrb[0].mxu0
      %1521 = vmatprep.mubr.bf16.mxu0 0
      %1522 = vmatmul.mubr.bf16.gmra.mrb[0].mxu0 %v1426
      %v1523 = vpop.f32.mrb[0].mxu0
      %v1524 = vadd.f32 0.0, %v1523
      %v1525 = vpop.f32.mrb[0].mxu0
      %v1526 = vpop.f32.mrb[0].mxu0
      %v1527 = vadd.f32 0.0, %v1526
      %v1528 = vpop.f32.mrb[0].mxu0
      %1529 = vmatprep.mubr.bf16.mxu0 0
      %1530 = vmatmul.mubr.bf16.gmra.mrb[0].mxu0 %v1427
      %v1531 = vpop.f32.mrb[0].mxu0
      %v1532 = vadd.f32 0.0, %v1531
      %v1533 = vpop.f32.mrb[0].mxu0
      %v1534 = vpop.f32.mrb[0].mxu0
      %v1535 = vadd.f32 0.0, %v1534
      %v1536 = vpop.f32.mrb[0].mxu0
      %1537 = vmatprep.mubr.bf16.mxu0 0
      %1538 = vmatmul.mubr.bf16.gmra.mrb[0].mxu0 %v1428
      %v1539 = vpop.f32.mrb[0].mxu0
      %v1540 = vadd.f32 0.0, %v1539
      %v1541 = vpop.f32.mrb[0].mxu0
      %v1542 = vpop.f32.mrb[0].mxu0
      %v1543 = vadd.f32 0.0, %v1542
      %v1544 = vpop.f32.mrb[0].mxu0
      %1545 = vdwg.mxu0
      %v1546 = vadd.f32 %v1376, %v1516
      %v1547 = vadd.f32 %v1377, %v1519
      %v1548 = vadd.f32 %v1378, %v1524
      %v1549 = vadd.f32 %v1379, %v1527
      %v1550 = vadd.f32 %v1380, %v1532
      %v1551 = vadd.f32 %v1381, %v1535
      %v1552 = vadd.f32 %v1382, %v1540
      %v1553 = vadd.f32 %v1383, %v1543
      %v1554 = vld [vmem:[%s384 + $0x8] sm:$0xf]
      %v1555 = vld [vmem:[%s384 + $0xc] sm:$0xf]
      %v1556 = vld [vmem:[%s384 + $0x10] sm:$0xf]
      %v1557 = vld [vmem:[%s384 + $0x14] sm:$0xf]
      %v1558 = vld [vmem:[%s384 + $0x18] sm:$0xf]
      %v1559 = vld [vmem:[%s384 + $0x1c] sm:$0xf]
      %v1560 = vld [vmem:[%s384 + $0x20] sm:$0xf]
      %v1561 = vld [vmem:[%s384 + $0x24] sm:$0xf]
      %s1562 = scalar_lea.vmem %s3, 448
      %v1563 = vld [vmem:[%s1562] sm:$0xf]
      %v1564 = vld [vmem:[%s1562 + $0x4] sm:$0xf]
      %v1565 = vld [vmem:[%s1562 + $0x8] sm:$0xf]
      %v1566 = vld [vmem:[%s1562 + $0xc] sm:$0xf]
      %v1567 = vld [vmem:[%s1562 + $0x10] sm:$0xf]
      %v1568 = vld [vmem:[%s1562 + $0x14] sm:$0xf]
      %v1569 = vld [vmem:[%s1562 + $0x18] sm:$0xf]
      %v1570 = vld [vmem:[%s1562 + $0x1c] sm:$0xf]
      %v1571 = vld [vmem:[%s1562 + $0x20] sm:$0xf]
      %v1572 = vld [vmem:[%s1562 + $0x24] sm:$0xf]
      %v1573 = vld [vmem:[%s1562 + $0x28] sm:$0xf]
      %v1574 = vld [vmem:[%s1562 + $0x2c] sm:$0xf]
      %v1575 = vld [vmem:[%s1562 + $0x30] sm:$0xf]
      %v1576 = vld [vmem:[%s1562 + $0x34] sm:$0xf]
      %v1577 = vld [vmem:[%s1562 + $0x38] sm:$0xf]
      %v1578 = vld [vmem:[%s1562 + $0x3c] sm:$0xf]
      %v1587 = vunpack.c.l.b16 %v1554
      %v1588 = vunpack.c.l.b16 %v1555
      %v1589 = vunpack.c.l.b16 %v1556
      %v1590 = vunpack.c.l.b16 %v1557
      %v1591 = vunpack.c.l.b16 %v1558
      %v1592 = vunpack.c.l.b16 %v1559
      %v1593 = vunpack.c.l.b16 %v1560
      %v1594 = vunpack.c.l.b16 %v1561
      %v1595 = vpack.c.b16 %v1588, %v1587
      %v1596 = vpack.c.b16 %v1590, %v1589
      %v1597 = vpack.c.b16 %v1592, %v1591
      %v1598 = vpack.c.b16 %v1594, %v1593
      %v1619 = vunpack.c.l.b16 %v1563
      %v1620 = vunpack.c.l.b16 %v1564
      %v1621 = vunpack.c.l.b16 %v1565
      %v1622 = vunpack.c.l.b16 %v1566
      %v1623 = vunpack.c.l.b16 %v1567
      %v1624 = vunpack.c.l.b16 %v1568
      %v1625 = vunpack.c.l.b16 %v1569
      %v1626 = vunpack.c.l.b16 %v1570
      %v1627 = vunpack.c.l.b16 %v1571
      %v1628 = vunpack.c.l.b16 %v1572
      %v1629 = vunpack.c.l.b16 %v1573
      %v1630 = vunpack.c.l.b16 %v1574
      %v1631 = vunpack.c.l.b16 %v1575
      %v1632 = vunpack.c.l.b16 %v1576
      %v1633 = vunpack.c.l.b16 %v1577
      %v1634 = vunpack.c.l.b16 %v1578
      %v1635 = vpack.c.b16 %v1620, %v1619
      %v1636 = vpack.c.b16 %v1622, %v1621
      %v1637 = vpack.c.b16 %v1624, %v1623
      %v1638 = vpack.c.b16 %v1626, %v1625
      %v1639 = vpack.c.b16 %v1628, %v1627
      %v1640 = vpack.c.b16 %v1630, %v1629
      %v1641 = vpack.c.b16 %v1632, %v1631
      %v1642 = vpack.c.b16 %v1634, %v1633
      %1651 = vmatprep.subr.bf16.mxu0 0
      %1652 = vmatpush1.bf16.msra.mxu0 %v1635
      %1653 = vmatprep.subr.bf16.mxu0 0
      %1654 = vmatpush1.bf16.msra.mxu0 %v1636
      %1655 = vmatprep.subr.bf16.mxu0 0
      %1656 = vmatpush1.bf16.msra.mxu0 %v1637
      %1657 = vmatprep.subr.bf16.mxu0 0
      %1658 = vmatpush1.bf16.msra.mxu0 %v1638
      %1659 = vmatprep.subr.bf16.mxu0 0
      %1660 = vmatpush1.bf16.msra.mxu0 %v1639
      %1661 = vmatprep.subr.bf16.mxu0 0
      %1662 = vmatpush1.bf16.msra.mxu0 %v1640
      %1663 = vmatprep.subr.bf16.mxu0 0
      %1664 = vmatpush1.bf16.msra.mxu0 %v1641
      %1665 = vmatprep.subr.bf16.mxu0 0
      %1666 = vmatpush1.bf16.msra.mxu0 %v1642
      %1667 = vmatprep.subr.bf16.mxu0 0
      %1668 = vmatpush1.bf16.msra.mxu0 0
      %1669 = vmatprep.subr.bf16.mxu0 0
      %1670 = vmatpush1.bf16.msra.mxu0 0
      %1671 = vmatprep.subr.bf16.mxu0 0
      %1672 = vmatpush1.bf16.msra.mxu0 0
      %1673 = vmatprep.subr.bf16.mxu0 0
      %1674 = vmatpush1.bf16.msra.mxu0 0
      %1675 = vmatprep.subr.bf16.mxu0 0
      %1676 = vmatpush1.bf16.msra.mxu0 0
      %1677 = vmatprep.subr.bf16.mxu0 0
      %1678 = vmatpush1.bf16.msra.mxu0 0
      %1679 = vmatprep.subr.bf16.mxu0 0
      %1680 = vmatpush1.bf16.msra.mxu0 0
      %1681 = vmatprep.subr.bf16.mxu0 0
      %1682 = vmatpush1.bf16.msra.mxu0 0
      %1683 = vmatprep.mubr.bf16.mxu0 0
      %1684 = vmatmul.mubr.bf16.gmra.mrb[0].mxu0 %v1595
      %v1685 = vpop.f32.mrb[0].mxu0
      %v1686 = vadd.f32 0.0, %v1685
      %v1687 = vpop.f32.mrb[0].mxu0
      %v1688 = vpop.f32.mrb[0].mxu0
      %v1689 = vadd.f32 0.0, %v1688
      %v1690 = vpop.f32.mrb[0].mxu0
      %1691 = vmatprep.mubr.bf16.mxu0 0
      %1692 = vmatmul.mubr.bf16.gmra.mrb[0].mxu0 %v1596
      %v1693 = vpop.f32.mrb[0].mxu0
      %v1694 = vadd.f32 0.0, %v1693
      %v1695 = vpop.f32.mrb[0].mxu0
      %v1696 = vpop.f32.mrb[0].mxu0
      %v1697 = vadd.f32 0.0, %v1696
      %v1698 = vpop.f32.mrb[0].mxu0
      %1699 = vmatprep.mubr.bf16.mxu0 0
      %1700 = vmatmul.mubr.bf16.gmra.mrb[0].mxu0 %v1597
      %v1701 = vpop.f32.mrb[0].mxu0
      %v1702 = vadd.f32 0.0, %v1701
      %v1703 = vpop.f32.mrb[0].mxu0
      %v1704 = vpop.f32.mrb[0].mxu0
      %v1705 = vadd.f32 0.0, %v1704
      %v1706 = vpop.f32.mrb[0].mxu0
      %1707 = vmatprep.mubr.bf16.mxu0 0
      %1708 = vmatmul.mubr.bf16.gmra.mrb[0].mxu0 %v1598
      %v1709 = vpop.f32.mrb[0].mxu0
      %v1710 = vadd.f32 0.0, %v1709
      %v1711 = vpop.f32.mrb[0].mxu0
      %v1712 = vpop.f32.mrb[0].mxu0
      %v1713 = vadd.f32 0.0, %v1712
      %v1714 = vpop.f32.mrb[0].mxu0
      %1715 = vdwg.mxu0
      %v1716 = vadd.f32 %v1546, %v1686
      %v1717 = vadd.f32 %v1547, %v1689
      %v1718 = vadd.f32 %v1548, %v1694
      %v1719 = vadd.f32 %v1549, %v1697
      %v1720 = vadd.f32 %v1550, %v1702
      %v1721 = vadd.f32 %v1551, %v1705
      %v1722 = vadd.f32 %v1552, %v1710
      %v1723 = vadd.f32 %v1553, %v1713
      %v1724 = vld [vmem:[%s384 + $0x10] sm:$0xf]
      %v1725 = vld [vmem:[%s384 + $0x14] sm:$0xf]
      %v1726 = vld [vmem:[%s384 + $0x18] sm:$0xf]
      %v1727 = vld [vmem:[%s384 + $0x1c] sm:$0xf]
      %v1728 = vld [vmem:[%s384 + $0x20] sm:$0xf]
      %v1729 = vld [vmem:[%s384 + $0x24] sm:$0xf]
      %v1730 = vld [vmem:[%s384 + $0x28] sm:$0xf]
      %v1731 = vld [vmem:[%s384 + $0x2c] sm:$0xf]
      %s1732 = scalar_lea.vmem %s3, 512
      %v1733 = vld [vmem:[%s1732] sm:$0xf]
      %v1734 = vld [vmem:[%s1732 + $0x4] sm:$0xf]
      %v1735 = vld [vmem:[%s1732 + $0x8] sm:$0xf]
      %v1736 = vld [vmem:[%s1732 + $0xc] sm:$0xf]
      %v1737 = vld [vmem:[%s1732 + $0x10] sm:$0xf]
      %v1738 = vld [vmem:[%s1732 + $0x14] sm:$0xf]
      %v1739 = vld [vmem:[%s1732 + $0x18] sm:$0xf]
      %v1740 = vld [vmem:[%s1732 + $0x1c] sm:$0xf]
      %v1741 = vld [vmem:[%s1732 + $0x20] sm:$0xf]
      %v1742 = vld [vmem:[%s1732 + $0x24] sm:$0xf]
      %v1743 = vld [vmem:[%s1732 + $0x28] sm:$0xf]
      %v1744 = vld [vmem:[%s1732 + $0x2c] sm:$0xf]
      %v1745 = vld [vmem:[%s1732 + $0x30] sm:$0xf]
      %v1746 = vld [vmem:[%s1732 + $0x34] sm:$0xf]
      %v1747 = vld [vmem:[%s1732 + $0x38] sm:$0xf]
      %v1748 = vld [vmem:[%s1732 + $0x3c] sm:$0xf]
      %v1757 = vunpack.c.l.b16 %v1724
      %v1758 = vunpack.c.l.b16 %v1725
      %v1759 = vunpack.c.l.b16 %v1726
      %v1760 = vunpack.c.l.b16 %v1727
      %v1761 = vunpack.c.l.b16 %v1728
      %v1762 = vunpack.c.l.b16 %v1729
      %v1763 = vunpack.c.l.b16 %v1730
      %v1764 = vunpack.c.l.b16 %v1731
      %v1765 = vpack.c.b16 %v1758, %v1757
      %v1766 = vpack.c.b16 %v1760, %v1759
      %v1767 = vpack.c.b16 %v1762, %v1761
      %v1768 = vpack.c.b16 %v1764, %v1763
      %v1789 = vunpack.c.l.b16 %v1733
      %v1790 = vunpack.c.l.b16 %v1734
      %v1791 = vunpack.c.l.b16 %v1735
      %v1792 = vunpack.c.l.b16 %v1736
      %v1793 = vunpack.c.l.b16 %v1737
      %v1794 = vunpack.c.l.b16 %v1738
      %v1795 = vunpack.c.l.b16 %v1739
      %v1796 = vunpack.c.l.b16 %v1740
      %v1797 = vunpack.c.l.b16 %v1741
      %v1798 = vunpack.c.l.b16 %v1742
      %v1799 = vunpack.c.l.b16 %v1743
      %v1800 = vunpack.c.l.b16 %v1744
      %v1801 = vunpack.c.l.b16 %v1745
      %v1802 = vunpack.c.l.b16 %v1746
      %v1803 = vunpack.c.l.b16 %v1747
      %v1804 = vunpack.c.l.b16 %v1748
      %v1805 = vpack.c.b16 %v1790, %v1789
      %v1806 = vpack.c.b16 %v1792, %v1791
      %v1807 = vpack.c.b16 %v1794, %v1793
      %v1808 = vpack.c.b16 %v1796, %v1795
      %v1809 = vpack.c.b16 %v1798, %v1797
      %v1810 = vpack.c.b16 %v1800, %v1799
      %v1811 = vpack.c.b16 %v1802, %v1801
      %v1812 = vpack.c.b16 %v1804, %v1803
      %1821 = vmatprep.subr.bf16.mxu0 0
      %1822 = vmatpush1.bf16.msra.mxu0 %v1805
      %1823 = vmatprep.subr.bf16.mxu0 0
      %1824 = vmatpush1.bf16.msra.mxu0 %v1806
      %1825 = vmatprep.subr.bf16.mxu0 0
      %1826 = vmatpush1.bf16.msra.mxu0 %v1807
      %1827 = vmatprep.subr.bf16.mxu0 0
      %1828 = vmatpush1.bf16.msra.mxu0 %v1808
      %1829 = vmatprep.subr.bf16.mxu0 0
      %1830 = vmatpush1.bf16.msra.mxu0 %v1809
      %1831 = vmatprep.subr.bf16.mxu0 0
      %1832 = vmatpush1.bf16.msra.mxu0 %v1810
      %1833 = vmatprep.subr.bf16.mxu0 0
      %1834 = vmatpush1.bf16.msra.mxu0 %v1811
      %1835 = vmatprep.subr.bf16.mxu0 0
      %1836 = vmatpush1.bf16.msra.mxu0 %v1812
      %1837 = vmatprep.subr.bf16.mxu0 0
      %1838 = vmatpush1.bf16.msra.mxu0 0
      %1839 = vmatprep.subr.bf16.mxu0 0
      %1840 = vmatpush1.bf16.msra.mxu0 0
      %1841 = vmatprep.subr.bf16.mxu0 0
      %1842 = vmatpush1.bf16.msra.mxu0 0
      %1843 = vmatprep.subr.bf16.mxu0 0
      %1844 = vmatpush1.bf16.msra.mxu0 0
      %1845 = vmatprep.subr.bf16.mxu0 0
      %1846 = vmatpush1.bf16.msra.mxu0 0
      %1847 = vmatprep.subr.bf16.mxu0 0
      %1848 = vmatpush1.bf16.msra.mxu0 0
      %1849 = vmatprep.subr.bf16.mxu0 0
      %1850 = vmatpush1.bf16.msra.mxu0 0
      %1851 = vmatprep.subr.bf16.mxu0 0
      %1852 = vmatpush1.bf16.msra.mxu0 0
      %1853 = vmatprep.mubr.bf16.mxu0 0
      %1854 = vmatmul.mubr.bf16.gmra.mrb[0].mxu0 %v1765
      %v1855 = vpop.f32.mrb[0].mxu0
      %v1856 = vadd.f32 0.0, %v1855
      %v1857 = vpop.f32.mrb[0].mxu0
      %v1858 = vpop.f32.mrb[0].mxu0
      %v1859 = vadd.f32 0.0, %v1858
      %v1860 = vpop.f32.mrb[0].mxu0
      %1861 = vmatprep.mubr.bf16.mxu0 0
      %1862 = vmatmul.mubr.bf16.gmra.mrb[0].mxu0 %v1766
      %v1863 = vpop.f32.mrb[0].mxu0
      %v1864 = vadd.f32 0.0, %v1863
      %v1865 = vpop.f32.mrb[0].mxu0
      %v1866 = vpop.f32.mrb[0].mxu0
      %v1867 = vadd.f32 0.0, %v1866
      %v1868 = vpop.f32.mrb[0].mxu0
      %1869 = vmatprep.mubr.bf16.mxu0 0
      %1870 = vmatmul.mubr.bf16.gmra.mrb[0].mxu0 %v1767
      %v1871 = vpop.f32.mrb[0].mxu0
      %v1872 = vadd.f32 0.0, %v1871
      %v1873 = vpop.f32.mrb[0].mxu0
      %v1874 = vpop.f32.mrb[0].mxu0
      %v1875 = vadd.f32 0.0, %v1874
      %v1876 = vpop.f32.mrb[0].mxu0
      %1877 = vmatprep.mubr.bf16.mxu0 0
      %1878 = vmatmul.mubr.bf16.gmra.mrb[0].mxu0 %v1768
      %v1879 = vpop.f32.mrb[0].mxu0
      %v1880 = vadd.f32 0.0, %v1879
      %v1881 = vpop.f32.mrb[0].mxu0
      %v1882 = vpop.f32.mrb[0].mxu0
      %v1883 = vadd.f32 0.0, %v1882
      %v1884 = vpop.f32.mrb[0].mxu0
      %1885 = vdwg.mxu0
      %v1886 = vadd.f32 %v1716, %v1856
      %v1887 = vadd.f32 %v1717, %v1859
      %v1888 = vadd.f32 %v1718, %v1864
      %v1889 = vadd.f32 %v1719, %v1867
      %v1890 = vadd.f32 %v1720, %v1872
      %v1891 = vadd.f32 %v1721, %v1875
      %v1892 = vadd.f32 %v1722, %v1880
      %v1893 = vadd.f32 %v1723, %v1883
      %v1894 = vld [vmem:[%s4] sm:$0x1]
      %v1896 = vlaneseq
      %v1897 = vshrl.u32 %v1896, 7
      %v1898 = vsub.s32 0, %v1897
      %v1899 = vrot.slane %v1894, %v1898
      %v1901 = vadd.f32 %v1886, %v1899
      %v1902 = vadd.f32 %v1887, %v1899
      %v1903 = vadd.f32 %v1888, %v1899
      %v1904 = vadd.f32 %v1889, %v1899
      %v1905 = vadd.f32 %v1890, %v1899
      %v1906 = vadd.f32 %v1891, %v1899
      %v1907 = vadd.f32 %v1892, %v1899
      %v1908 = vadd.f32 %v1893, %v1899
      %v1909 = vld [vmem:[%s394] sm:$0xf]
      %v1910 = vld [vmem:[%s394 + $0x4] sm:$0xf]
      %v1911 = vld [vmem:[%s394 + $0x8] sm:$0xf]
      %v1912 = vld [vmem:[%s394 + $0xc] sm:$0xf]
      %v1913 = vld [vmem:[%s394 + $0x10] sm:$0xf]
      %v1914 = vld [vmem:[%s394 + $0x14] sm:$0xf]
      %v1915 = vld [vmem:[%s394 + $0x18] sm:$0xf]
      %v1916 = vld [vmem:[%s394 + $0x1c] sm:$0xf]
      %v1917 = vunpack.c.l.bf16 %v1909
      %v1918 = vunpack.c.l.bf16 %v1910
      %v1919 = vunpack.c.l.bf16 %v1911
      %v1920 = vunpack.c.l.bf16 %v1912
      %v1921 = vunpack.c.l.bf16 %v1913
      %v1922 = vunpack.c.l.bf16 %v1914
      %v1923 = vunpack.c.l.bf16 %v1915
      %v1924 = vunpack.c.l.bf16 %v1916
      %v1925 = vadd.f32 %v1901, %v1917
      %v1926 = vadd.f32 %v1902, %v1918
      %v1927 = vadd.f32 %v1903, %v1919
      %v1928 = vadd.f32 %v1904, %v1920
      %v1929 = vadd.f32 %v1905, %v1921
      %v1930 = vadd.f32 %v1906, %v1922
      %v1931 = vadd.f32 %v1907, %v1923
      %v1932 = vadd.f32 %v1908, %v1924
      %v1933 = vmax.f32 %v1925, 0.0
      %v1934 = vmax.f32 %v1926, 0.0
      %v1935 = vmax.f32 %v1927, 0.0
      %v1936 = vmax.f32 %v1928, 0.0
      %v1937 = vmax.f32 %v1929, 0.0
      %v1938 = vmax.f32 %v1930, 0.0
      %v1939 = vmax.f32 %v1931, 0.0
      %v1940 = vmax.f32 %v1932, 0.0
      %v1941 = vpack.c.bf16 %v1934, %v1933
      %v1942 = vpack.c.bf16 %v1936, %v1935
      %v1943 = vpack.c.bf16 %v1938, %v1937
      %v1944 = vpack.c.bf16 %v1940, %v1939
      %v1949 = vunpack.c.l.b16 %v1941
      %v1950 = vunpack.c.h.b16 %v1941
      %v1951 = vunpack.c.l.b16 %v1942
      %v1952 = vunpack.c.h.b16 %v1942
      %v1953 = vunpack.c.l.b16 %v1943
      %v1954 = vunpack.c.h.b16 %v1943
      %v1955 = vunpack.c.l.b16 %v1944
      %v1956 = vunpack.c.h.b16 %v1944
      %v1957 = vpack.c.b16 %v1949, %v1949
      %v1958 = vpack.c.b16 %v1950, %v1950
      %v1959 = vpack.c.b16 %v1951, %v1951
      %v1960 = vpack.c.b16 %v1952, %v1952
      %v1961 = vpack.c.b16 %v1953, %v1953
      %v1962 = vpack.c.b16 %v1954, %v1954
      %v1963 = vpack.c.b16 %v1955, %v1955
      %v1964 = vpack.c.b16 %v1956, %v1956
      %1973 = vst [vmem:[%s403] sm:$0xf] %v1957
      %1974 = vst [vmem:[%s403 + $0x4] sm:$0xf] %v1958
      %1975 = vst [vmem:[%s403 + $0x8] sm:$0xf] %v1959
      %1976 = vst [vmem:[%s403 + $0xc] sm:$0xf] %v1960
      %1977 = vst [vmem:[%s403 + $0x10] sm:$0xf] %v1961
      %1978 = vst [vmem:[%s403 + $0x14] sm:$0xf] %v1962
      %1979 = vst [vmem:[%s403 + $0x18] sm:$0xf] %v1963
      %1980 = vst [vmem:[%s403 + $0x1c] sm:$0xf] %v1964
      %p1981 = scmp.lt.s32.totalorder %s21, 1
      %s1982 = scalar_select %p1981, %s21, 1
      %p1983 = scmp.lt.s32.totalorder %s22, 3
      %s1984 = scalar_select %p1983, %s22, 3
      %s1985 = smul.addr %s1984, 8
      %s1986 = smul.addr %s1982, 32
      %s1987 = sadd.s32 %s1985, %s1986
      %s1988 = smul.addr %s1987, 4
      %s1989 = scalar_lea.vmem %s6, %s1988
      // Predicated region
      $region45: #{basic_block_forward.3} parent=43 // pred_check
        %p1990 = pneg %p207
      $region46: #{basic_block_forward.3} parent=43 // pred_check_branch
        %1992 = sbr.rel (%p1990) target = $region48
      $region47: #{basic_block_forward.3} parent=43 // pred_region
        _
      $region48: #{basic_block_forward.3} parent=43 // pred_fallthru
        _
    $region44: #{basic_block_forward.3} parent=5 // pred_fallthru
      _
    %p1993 = scmp.le.s32.totalorder 2, %s12
    // Predicated region
    $region49: #{basic_block_forward.3} parent=5 // pred_check
      %p1994 = pneg %p1993
    $region50: #{basic_block_forward.3} parent=5 // pred_check_branch
      %1996 = sbr.rel (%p1994) target = $region52
    $region51: #{basic_block_forward.3} parent=5 // pred_region
      %s1997 = ssub.s32 %s12, 2
      // Predicated region
      $region53: #{basic_block_forward.3} parent=51 // pred_check
        %p1998 = pneg %p213
      $region54: #{basic_block_forward.3} parent=51 // pred_check_branch
        %2000 = sbr.rel (%p1998) target = $region56
      $region55: #{basic_block_forward.3} parent=51 // pred_region
        %p2001 = scmp.lt.s32.totalorder %s23, 1
        %s2002 = scalar_select %p2001, %s23, 1
        %p2003 = scmp.lt.s32.totalorder %s24, 3
        %s2004 = scalar_select %p2003, %s24, 3
        %s2005 = smul.addr %s2004, 8
        %s2006 = smul.addr %s2002, 32
        %s2007 = sadd.s32 %s2005, %s2006
        %s2008 = smul.addr %s2007, 4
        %s2009 = scalar_lea.vmem %s6, %s2008
      $region56: #{basic_block_forward.3} parent=51 // pred_fallthru
        _
    $region52: #{basic_block_forward.3} parent=5 // pred_fallthru
      _
  $region6: #{basic_block_forward.3} parent=0 // loop_footer
    %s16 = sadd.s32 1, %s12
  $region7: #{basic_block_forward.3} parent=0 // loop_footer_branch
    %11 = sbr.rel target = $region3
  $region8: #{basic_block_forward.3} parent=0 // loop_exit
    _

</llo_original>
